<compile_context>
chip_gen: v5e
topology: v5e:2x2
jax: 0.10.0
libtpu: 0.0.40
codegen_flags: <defaults>
</compile_context>

<pallas_src>
import math
import jax
import jax.numpy as jnp
from jax.experimental import pallas as pl
from jax.experimental.pallas import tpu as pltpu

LN_EPS = 1e-5


def _make_decoder_kernel(n_heads, block_b):
    def kernel(tgt_ref, mem_ref, wq_ref, wkv_ref, wo_ref, gamma_ref, beta_ref, out_ref):
        rq, d = tgt_ref.shape            # rq = block_b * Nq
        rt = mem_ref.shape[0]            # rt = block_b * Nt
        nq = rq // block_b
        nt = rt // block_b
        dk = d // n_heads
        wdt = wq_ref.dtype

        gamma = gamma_ref[...].astype(jnp.float32)   # (1, D)
        beta = beta_ref[...].astype(jnp.float32)     # (1, D)

        def layer_norm(xf):
            mu = jnp.mean(xf, axis=-1, keepdims=True)
            xc = xf - mu
            var = jnp.mean(xc * xc, axis=-1, keepdims=True)
            return xc * jax.lax.rsqrt(var + LN_EPS) * gamma + beta

        # f32 only where needed (LN stats); the raw tgt tile is re-read for the
        # residual at the end instead of keeping an f32 copy live here.
        tq = layer_norm(tgt_ref[...].astype(jnp.float32))   # (rq, D)
        tm = layer_norm(mem_ref[...].astype(jnp.float32))   # (rt, D)

        # Fused projections: norm_factor already folded into wq by the wrapper;
        # W_key|W_value fused so the memory rows need a single matmul.
        q_all = jnp.dot(tq.astype(wdt), wq_ref[...],
                        preferred_element_type=jnp.float32)           # (rq, D)
        kv_all = jnp.dot(tm.astype(wdt), wkv_ref[...],
                         preferred_element_type=jnp.float32)          # (rt, 2D)

        # Block-diagonal batch mask as an additive bias, built once per grid
        # step from iota step functions (cheap VPU compares; no vector int div).
        if block_b > 1:
            rows_i = jax.lax.broadcasted_iota(jnp.int32, (rq, 1), 0)
            cols_i = jax.lax.broadcasted_iota(jnp.int32, (1, rt), 1)
            row_b = jnp.zeros((rq, 1), jnp.int32)
            col_b = jnp.zeros((1, rt), jnp.int32)
            for b in range(1, block_b):
                row_b = row_b + (rows_i >= b * nq).astype(jnp.int32)
                col_b = col_b + (cols_i >= b * nt).astype(jnp.int32)
            bias = jnp.where(row_b == col_b,
                             jnp.float32(0.0), jnp.float32(-1e30))    # (rq, rt)
        else:
            bias = None

        # TODO(synk): optional `mask` argument of MultiHeadAttention is not
        # plumbed through (forward is exercised with mask=None).
        head_outs = []
        for h in range(n_heads):
            # NOTE: Dk-wide lane slices are fine at demo size; for production
            # keep Dk a multiple of 128 (or lay Q/K/V out head-major) to avoid
            # sub-128 lane extraction.
            qh = q_all[:, h * dk:(h + 1) * dk]                 # (rq, dk)
            kh = kv_all[:, h * dk:(h + 1) * dk]                # (rt, dk)
            vh = kv_all[:, d + h * dk:d + (h + 1) * dk]        # (rt, dk)
            # contract last dims of both operands -> no explicit K transpose
            u = jax.lax.dot_general(qh, kh, (((1,), (1,)), ((), ())),
                                    preferred_element_type=jnp.float32)
            if bias is not None:
                u = u + bias
            u = u - jnp.max(u, axis=-1, keepdims=True)          # stable softmax
            e = jnp.exp(u)
            denom = jnp.sum(e, axis=-1, keepdims=True)
            r = pl.reciprocal(denom, approx=True)               # EUP slot
            r = r * (2.0 - denom * r)                           # one Newton step
            attn = e * r
            head_outs.append(jnp.dot(attn, vh, preferred_element_type=jnp.float32))

        # Heads stay in registers: concatenate once, single fused Wo matmul,
        # then residual from the still-resident tgt tile.
        heads = jnp.concatenate(head_outs, axis=-1)             # (rq, D)
        out = jnp.dot(heads.astype(wdt), wo_ref[...],
                      preferred_element_type=jnp.float32)
        out_ref[...] = (out + tgt_ref[...].astype(jnp.float32)).astype(out_ref.dtype)

    return kernel


def _is_multi_tensorcore():
    # v7x has 2 TensorCores per chip; v5e/v6e have 1.
    try:
        return "v7" in jax.devices()[0].device_kind.lower()
    except Exception:
        return False


def _pick_block_b(B, Nq, Nt):
    # Target ~512 rows per grid step (amortizes the ~600-cycle per-step
    # overhead) which also keeps each per-head (rq, rt) score tile modest
    # (block_b * Nt <= 512 for the masked full-block attention).
    target_rows = 512

    def ok(bb):
        if bb < 1 or B % bb != 0:
            return False
        # (8,128) rule: second-minor block dim must be a multiple of 8 unless
        # the block spans the whole array dimension.
        return bb == B or ((bb * Nq) % 8 == 0 and (bb * Nt) % 8 == 0)

    bb = max(1, min(B, target_rows // max(Nq, Nt, 1)))
    while bb > 1 and not ok(bb):
        bb -= 1
    if not ok(bb):
        bb = B   # full-array block always satisfies the tiling rule
    # Single-TC parts (v5e/v6e): biggest tile wins, even if grid == 1.
    # Multi-TC (v7x): prefer >= 2 parallel steps when alignment allows.
    if _is_multi_tensorcore() and B // bb < 2:
        for cand in range(bb // 2, 0, -1):
            if ok(cand):
                bb = cand
                break
    return bb


def _derive_vmem_limit(block_b, Nq, Nt, D, act_bytes, w_bytes):
    """Explicit VMEM budget derived from the actual tile sizes, capped at
    56 MiB so the same config also fits v7x's 64 MiB physical VMEM."""
    rq, rt = block_b * Nq, block_b * Nt
    io = 2 * (rq * D + rt * D + rq * D) * act_bytes          # double-buffered tgt/mem/out tiles
    weights = (D * D + D * 2 * D + D * D) * w_bytes          # wq + wkv + wo
    ln = 2 * 2 * D * w_bytes
    live = (rq * D + rt * 2 * D + rq * rt + rq * D) * 4      # q_all, kv_all, score, heads (f32)
    total = io + 2 * weights + ln + 2 * live + (2 << 20)     # 2x weights covers double-buffer fallback
    return int(min(max(total, 16 * 1024 * 1024), 56 * 1024 * 1024))


def _build_call(B, Nq, Nt, D, block_b, out_dtype, kernel, vmem_limit, single_buffer_weights):
    if single_buffer_weights:
        # Grid-invariant operands (constant index_map): one VMEM buffer is
        # enough; halves weight footprint (matters at production D on v7x).
        def const(shape):
            return pl.BlockSpec(shape, lambda i: (0,) * len(shape),
                                pipeline_mode=pl.Buffered(1))
    else:
        def const(shape):
            return pl.BlockSpec(shape, lambda i: (0,) * len(shape))

    return pl.pallas_call(
        kernel,
        out_shape=jax.ShapeDtypeStruct((B * Nq, D), out_dtype),
        grid_spec=pltpu.PrefetchScalarGridSpec(
            num_scalar_prefetch=0,
            grid=(B // block_b,),
            in_specs=[
                pl.BlockSpec((block_b * Nq, D), lambda i: (i, 0)),   # tgt rows
                pl.BlockSpec((block_b * Nt, D), lambda i: (i, 0)),   # memory rows
                const((D, D)),        # fused w_query (norm_factor folded in)
                const((D, 2 * D)),    # fused [w_key | w_value]
                const((D, D)),        # fused w_out
                const((1, D)),        # layernorm weight
                const((1, D)),        # layernorm bias
            ],
            out_specs=pl.BlockSpec((block_b * Nq, D), lambda i: (i, 0)),
        ),
        compiler_params=pltpu.CompilerParams(
            dimension_semantics=("parallel",),
            vmem_limit_bytes=vmem_limit,
        ),
    )


def decoder_layer(tgt, memory, params, n_heads, block_b=None):
    """tgt: (B, Nq, D), memory: (B, Nt, D). Returns (B, Nq, D)."""
    B, Nq, D = tgt.shape
    _, Nt, _ = memory.shape
    Dk = D // n_heads
    norm_factor = 1.0 / math.sqrt(Dk)

    if block_b is None:
        block_b = _pick_block_b(B, Nq, Nt)
    assert B % block_b == 0

    # Fuse per-head weights into full-D matrices (done once, in XLA).
    # (H, D, Dk) -> (D, H*Dk) for Q/K/V; (H, Dv, D) -> (H*Dv, D) for out,
    # matching the PyTorch head-major concatenation in `heads.permute(...)`.
    # TODO(synk): at production scale cast weights/activations to bfloat16 here
    # (2-4x MXU throughput, half the weight DMA/VMEM) once the required
    # tolerance is looser than the 1e-4 f32 check used below.
    wq = jnp.transpose(params["w_query"], (1, 0, 2)).reshape(D, D) * norm_factor
    wk = jnp.transpose(params["w_key"], (1, 0, 2)).reshape(D, D)
    wv = jnp.transpose(params["w_value"], (1, 0, 2)).reshape(D, D)
    wkv = jnp.concatenate([wk, wv], axis=1)           # (D, 2D): one memory-side matmul
    wo = params["w_out"].reshape(D, D)
    gamma = params["ln_weight"].reshape(1, D)
    beta = params["ln_bias"].reshape(1, D)

    # Flatten batch into rows so the kernel does one LN / one projection matmul
    # for the whole block (no in-kernel reshapes needed).
    # TODO(synk): for D < 128 (demo D=32) a wrapper-side row->lane packing of
    # the I/O slabs would make DMA/stores lane-dense; production D >= 128 is
    # assumed here.
    tgt2d = tgt.reshape(B * Nq, D)
    mem2d = memory.reshape(B * Nt, D)

    kernel = _make_decoder_kernel(n_heads, block_b)
    vmem_limit = _derive_vmem_limit(block_b, Nq, Nt, D,
                                    tgt.dtype.itemsize, wq.dtype.itemsize)

    args = (tgt2d, mem2d, wq, wkv, wo, gamma, beta)
    try:
        out2d = _build_call(B, Nq, Nt, D, block_b, tgt.dtype, kernel,
                            vmem_limit, single_buffer_weights=True)(*args)
    except Exception:
        # pipeline_mode=pl.Buffered(1) not supported on this jax build; fall
        # back to default double-buffered weights (correctness identical).
        out2d = _build_call(B, Nq, Nt, D, block_b, tgt.dtype, kernel,
                            vmem_limit, single_buffer_weights=False)(*args)

    return out2d.reshape(B, Nq, D)


def init_params(key, embedding_dim, n_heads):
    Dk = embedding_dim // n_heads
    stdv = 1.0 / math.sqrt(Dk)
    k1, k2, k3, k4 = jax.random.split(key, 4)
    p = {
        "w_query": jax.random.uniform(k1, (n_heads, embedding_dim, Dk), jnp.float32, -stdv, stdv),
        "w_key":   jax.random.uniform(k2, (n_heads, embedding_dim, Dk), jnp.float32, -stdv, stdv),
        "w_value": jax.random.uniform(k3, (n_heads, embedding_dim, Dk), jnp.float32, -stdv, stdv),
        "w_out":   jax.random.uniform(k4, (n_heads, Dk, embedding_dim), jnp.float32,
                                      -1.0 / math.sqrt(embedding_dim), 1.0 / math.sqrt(embedding_dim)),
        # nn.LayerNorm default init
        "ln_weight": jnp.ones((embedding_dim,), jnp.float32),
        "ln_bias":   jnp.zeros((embedding_dim,), jnp.float32),
    }
    return p


def reference_decoder_layer(tgt, memory, params, n_heads):
    """Pure-JAX reference mirroring the PyTorch forward."""
    def ln(x):
        mu = jnp.mean(x, axis=-1, keepdims=True)
        var = jnp.mean((x - mu) ** 2, axis=-1, keepdims=True)
        return (x - mu) / jnp.sqrt(var + LN_EPS) * params["ln_weight"] + params["ln_bias"]

    h0 = tgt
    tq = ln(tgt)
    tm = ln(memory)
    D = tgt.shape[-1]
    Dk = D // n_heads
    Q = jnp.einsum("bqd,hdk->hbqk", tq, params["w_query"])
    K = jnp.einsum("btd,hdk->hbtk", tm, params["w_key"])
    V = jnp.einsum("btd,hdk->hbtk", tm, params["w_value"])
    U = (1.0 / math.sqrt(Dk)) * jnp.einsum("hbqk,hbtk->hbqt", Q, K)
    attn = jax.nn.softmax(U, axis=-1)
    heads = jnp.einsum("hbqt,hbtk->hbqk", attn, V)
    out = jnp.einsum("hbqk,hkd->bqd", heads, params["w_out"])
    return out + h0


if __name__ == "__main__":
    embedding_dim = 32
    n_heads = 4
    B, Nq, Nt = 4, 8, 16

    key = jax.random.PRNGKey(0)
    kp, kt, km = jax.random.split(key, 3)
    params = init_params(kp, embedding_dim, n_heads)
    tgt = jax.random.normal(kt, (B, Nq, embedding_dim), jnp.float32)
    memory = jax.random.normal(km, (B, Nt, embedding_dim), jnp.float32)

    out = decoder_layer(tgt, memory, params, n_heads)
    out = jax.block_until_ready(out)

    ref = reference_decoder_layer(tgt, memory, params, n_heads)
    assert out.shape == (B, Nq, embedding_dim)
    assert jnp.allclose(out, ref, rtol=1e-4, atol=1e-4), "mismatch vs reference"

    print("KERNEL_OK")
</pallas_src>

<mosaic_0001>
module attributes {stable_mosaic.version = 11 : i64} {
  func.func @kernel(%arg0: i32, %arg1: memref<32x32xf32, #tpu.memory_space<vmem>>, %arg2: memref<64x32xf32, #tpu.memory_space<vmem>>, %arg3: memref<32x32xf32, #tpu.memory_space<vmem>>, %arg4: memref<32x64xf32, #tpu.memory_space<vmem>>, %arg5: memref<32x32xf32, #tpu.memory_space<vmem>>, %arg6: memref<1x32xf32, #tpu.memory_space<vmem>>, %arg7: memref<1x32xf32, #tpu.memory_space<vmem>>, %arg8: memref<32x32xf32, #tpu.memory_space<vmem>>) attributes {dimension_semantics = [#tpu.dimension_semantics<parallel>], iteration_bounds = array<i64: 1>, scalar_prefetch = 0 : i64, scratch_operands = 0 : i64, tpu.core_type = #tpu.core_type<tc>, window_params = [{transform_indices = @transform_0, window_bounds = array<i64: 32, 32>}, {transform_indices = @transform_1, window_bounds = array<i64: 64, 32>}, {pipeline_mode = #tpu.pipeline_mode<synchronous>, transform_indices = @transform_2, window_bounds = array<i64: 32, 32>}, {pipeline_mode = #tpu.pipeline_mode<synchronous>, transform_indices = @transform_3, window_bounds = array<i64: 32, 64>}, {pipeline_mode = #tpu.pipeline_mode<synchronous>, transform_indices = @transform_4, window_bounds = array<i64: 32, 32>}, {pipeline_mode = #tpu.pipeline_mode<synchronous>, transform_indices = @transform_5, window_bounds = array<i64: 1, 32>}, {pipeline_mode = #tpu.pipeline_mode<synchronous>, transform_indices = @transform_6, window_bounds = array<i64: 1, 32>}, {transform_indices = @transform_7, window_bounds = array<i64: 32, 32>}]} {
    %c0 = arith.constant 0 : index
    %c0_0 = arith.constant 0 : index
    %0 = vector.load %arg6[%c0, %c0_0] : memref<1x32xf32, #tpu.memory_space<vmem>>, vector<1x32xf32>
    %c0_1 = arith.constant 0 : index
    %c0_2 = arith.constant 0 : index
    %1 = vector.load %arg7[%c0_1, %c0_2] : memref<1x32xf32, #tpu.memory_space<vmem>>, vector<1x32xf32>
    %c0_3 = arith.constant 0 : index
    %c0_4 = arith.constant 0 : index
    %2 = vector.load %arg1[%c0_3, %c0_4] : memref<32x32xf32, #tpu.memory_space<vmem>>, vector<32x32xf32>
    %cst = arith.constant dense<0.000000e+00> : vector<32xf32>
    %3 = vector.multi_reduction <add>, %2, %cst [1] : vector<32x32xf32> to vector<32xf32>
    %4 = vector.shape_cast %3 : vector<32xf32> to vector<32x1xf32>
    %cst_5 = arith.constant 3.200000e+01 : f32
    %5 = vector.broadcast %cst_5 : f32 to vector<32x1xf32>
    %6 = arith.divf %4, %5 : vector<32x1xf32>
    %7 = vector.broadcast %6 : vector<32x1xf32> to vector<32x32xf32>
    %8 = arith.subf %2, %7 : vector<32x32xf32>
    %9 = arith.mulf %8, %8 : vector<32x32xf32>
    %cst_6 = arith.constant dense<0.000000e+00> : vector<32xf32>
    %10 = vector.multi_reduction <add>, %9, %cst_6 [1] : vector<32x32xf32> to vector<32xf32>
    %11 = vector.shape_cast %10 : vector<32xf32> to vector<32x1xf32>
    %cst_7 = arith.constant 3.200000e+01 : f32
    %12 = vector.broadcast %cst_7 : f32 to vector<32x1xf32>
    %13 = arith.divf %11, %12 : vector<32x1xf32>
    %cst_8 = arith.constant 9.99999974E-6 : f32
    %14 = vector.broadcast %cst_8 : f32 to vector<32x1xf32>
    %15 = arith.addf %13, %14 : vector<32x1xf32>
    %16 = math.rsqrt %15 : vector<32x1xf32>
    %17 = vector.broadcast %16 : vector<32x1xf32> to vector<32x32xf32>
    %18 = arith.mulf %8, %17 : vector<32x32xf32>
    %19 = vector.broadcast %0 : vector<1x32xf32> to vector<32x32xf32>
    %20 = arith.mulf %18, %19 : vector<32x32xf32>
    %21 = vector.broadcast %1 : vector<1x32xf32> to vector<32x32xf32>
    %22 = arith.addf %20, %21 : vector<32x32xf32>
    %c0_9 = arith.constant 0 : index
    %c0_10 = arith.constant 0 : index
    %23 = vector.load %arg2[%c0_9, %c0_10] : memref<64x32xf32, #tpu.memory_space<vmem>>, vector<64x32xf32>
    %cst_11 = arith.constant dense<0.000000e+00> : vector<64xf32>
    %24 = vector.multi_reduction <add>, %23, %cst_11 [1] : vector<64x32xf32> to vector<64xf32>
    %25 = vector.shape_cast %24 : vector<64xf32> to vector<64x1xf32>
    %cst_12 = arith.constant 3.200000e+01 : f32
    %26 = vector.broadcast %cst_12 : f32 to vector<64x1xf32>
    %27 = arith.divf %25, %26 : vector<64x1xf32>
    %28 = vector.broadcast %27 : vector<64x1xf32> to vector<64x32xf32>
    %29 = arith.subf %23, %28 : vector<64x32xf32>
    %30 = arith.mulf %29, %29 : vector<64x32xf32>
    %cst_13 = arith.constant dense<0.000000e+00> : vector<64xf32>
    %31 = vector.multi_reduction <add>, %30, %cst_13 [1] : vector<64x32xf32> to vector<64xf32>
    %32 = vector.shape_cast %31 : vector<64xf32> to vector<64x1xf32>
    %cst_14 = arith.constant 3.200000e+01 : f32
    %33 = vector.broadcast %cst_14 : f32 to vector<64x1xf32>
    %34 = arith.divf %32, %33 : vector<64x1xf32>
    %cst_15 = arith.constant 9.99999974E-6 : f32
    %35 = vector.broadcast %cst_15 : f32 to vector<64x1xf32>
    %36 = arith.addf %34, %35 : vector<64x1xf32>
    %37 = math.rsqrt %36 : vector<64x1xf32>
    %38 = vector.broadcast %37 : vector<64x1xf32> to vector<64x32xf32>
    %39 = arith.mulf %29, %38 : vector<64x32xf32>
    %40 = vector.broadcast %0 : vector<1x32xf32> to vector<64x32xf32>
    %41 = arith.mulf %39, %40 : vector<64x32xf32>
    %42 = vector.broadcast %1 : vector<1x32xf32> to vector<64x32xf32>
    %43 = arith.addf %41, %42 : vector<64x32xf32>
    %c0_16 = arith.constant 0 : index
    %c0_17 = arith.constant 0 : index
    %44 = vector.load %arg3[%c0_16, %c0_17] : memref<32x32xf32, #tpu.memory_space<vmem>>, vector<32x32xf32>
    %cst_18 = arith.constant dense<0.000000e+00> : vector<32x32xf32>
    %45 = tpu.matmul %22, %44, %cst_18 {dimension_numbers = #tpu.dot_dimension_numbers<[1], [0], [0], [1], [0, 0, 1, 1], [], []>} : vector<32x32xf32>, vector<32x32xf32>, vector<32x32xf32> -> vector<32x32xf32>
    %c0_19 = arith.constant 0 : index
    %c0_20 = arith.constant 0 : index
    %46 = vector.load %arg4[%c0_19, %c0_20] : memref<32x64xf32, #tpu.memory_space<vmem>>, vector<32x64xf32>
    %cst_21 = arith.constant dense<0.000000e+00> : vector<64x64xf32>
    %47 = tpu.matmul %43, %46, %cst_21 {dimension_numbers = #tpu.dot_dimension_numbers<[1], [0], [0], [1], [0, 0, 1, 1], [], []>} : vector<64x32xf32>, vector<32x64xf32>, vector<64x64xf32> -> vector<64x64xf32>
    %48 = tpu.iota {dimensions = array<i32: 0>} : vector<32x1xi32>
    %49 = tpu.iota {dimensions = array<i32: 1>} : vector<1x64xi32>
    %c0_i32 = arith.constant 0 : i32
    %50 = vector.broadcast %c0_i32 : i32 to vector<32x1xi32>
    %c0_i32_22 = arith.constant 0 : i32
    %51 = vector.broadcast %c0_i32_22 : i32 to vector<1x64xi32>
    %c8_i32 = arith.constant 8 : i32
    %52 = vector.broadcast %c8_i32 : i32 to vector<32x1xi32>
    %53 = arith.cmpi sge, %48, %52 : vector<32x1xi32>
    %54 = arith.extui %53 : vector<32x1xi1> to vector<32x1xi32>
    %55 = arith.addi %50, %54 : vector<32x1xi32>
    %c16_i32 = arith.constant 16 : i32
    %56 = vector.broadcast %c16_i32 : i32 to vector<1x64xi32>
    %57 = arith.cmpi sge, %49, %56 : vector<1x64xi32>
    %58 = arith.extui %57 : vector<1x64xi1> to vector<1x64xi32>
    %59 = arith.addi %51, %58 : vector<1x64xi32>
    %c16_i32_23 = arith.constant 16 : i32
    %60 = vector.broadcast %c16_i32_23 : i32 to vector<32x1xi32>
    %61 = arith.cmpi sge, %48, %60 : vector<32x1xi32>
    %62 = arith.extui %61 : vector<32x1xi1> to vector<32x1xi32>
    %63 = arith.addi %55, %62 : vector<32x1xi32>
    %c32_i32 = arith.constant 32 : i32
    %64 = vector.broadcast %c32_i32 : i32 to vector<1x64xi32>
    %65 = arith.cmpi sge, %49, %64 : vector<1x64xi32>
    %66 = arith.extui %65 : vector<1x64xi1> to vector<1x64xi32>
    %67 = arith.addi %59, %66 : vector<1x64xi32>
    %c24_i32 = arith.constant 24 : i32
    %68 = vector.broadcast %c24_i32 : i32 to vector<32x1xi32>
    %69 = arith.cmpi sge, %48, %68 : vector<32x1xi32>
    %70 = arith.extui %69 : vector<32x1xi1> to vector<32x1xi32>
    %71 = arith.addi %63, %70 : vector<32x1xi32>
    %c48_i32 = arith.constant 48 : i32
    %72 = vector.broadcast %c48_i32 : i32 to vector<1x64xi32>
    %73 = arith.cmpi sge, %49, %72 : vector<1x64xi32>
    %74 = arith.extui %73 : vector<1x64xi1> to vector<1x64xi32>
    %75 = arith.addi %67, %74 : vector<1x64xi32>
    %76 = vector.broadcast %71 : vector<32x1xi32> to vector<32x64xi32>
    %77 = vector.broadcast %75 : vector<1x64xi32> to vector<32x64xi32>
    %78 = arith.cmpi eq, %76, %77 : vector<32x64xi32>
    %cst_24 = arith.constant 0.000000e+00 : f32
    %cst_25 = arith.constant -1.000000e+30 : f32
    %79 = vector.broadcast %cst_24 : f32 to vector<32x64xf32>
    %80 = vector.broadcast %cst_25 : f32 to vector<32x64xf32>
    %81 = arith.select %78, %79, %80 : vector<32x64xi1>, vector<32x64xf32>
    %82 = vector.extract_strided_slice %45 {offsets = [0, 0], sizes = [32, 8], strides = [1, 1]} : vector<32x32xf32> to vector<32x8xf32>
    %83 = vector.extract_strided_slice %47 {offsets = [0, 0], sizes = [64, 8], strides = [1, 1]} : vector<64x64xf32> to vector<64x8xf32>
    %84 = vector.extract_strided_slice %47 {offsets = [0, 32], sizes = [64, 8], strides = [1, 1]} : vector<64x64xf32> to vector<64x8xf32>
    %cst_26 = arith.constant dense<0.000000e+00> : vector<32x64xf32>
    %85 = tpu.matmul %82, %83, %cst_26 {dimension_numbers = #tpu.dot_dimension_numbers<[1], [1], [0], [0], [0, 0, 1, 0], [], []>} : vector<32x8xf32>, vector<64x8xf32>, vector<32x64xf32> -> vector<32x64xf32>
    %86 = arith.addf %85, %81 : vector<32x64xf32>
    %cst_27 = arith.constant dense<0xFF800000> : vector<32xf32>
    %87 = vector.multi_reduction <maximumf>, %86, %cst_27 [1] : vector<32x64xf32> to vector<32xf32>
    %88 = vector.shape_cast %87 : vector<32xf32> to vector<32x1xf32>
    %89 = vector.broadcast %88 : vector<32x1xf32> to vector<32x64xf32>
    %90 = arith.subf %86, %89 : vector<32x64xf32>
    %91 = math.exp %90 : vector<32x64xf32>
    %cst_28 = arith.constant dense<0.000000e+00> : vector<32xf32>
    %92 = vector.multi_reduction <add>, %91, %cst_28 [1] : vector<32x64xf32> to vector<32xf32>
    %93 = vector.shape_cast %92 : vector<32xf32> to vector<32x1xf32>
    %94 = tpu.reciprocal %93 {approx = true} : vector<32x1xf32> -> vector<32x1xf32>
    %95 = arith.mulf %93, %94 : vector<32x1xf32>
    %cst_29 = arith.constant 2.000000e+00 : f32
    %96 = vector.broadcast %cst_29 : f32 to vector<32x1xf32>
    %97 = arith.subf %96, %95 : vector<32x1xf32>
    %98 = arith.mulf %94, %97 : vector<32x1xf32>
    %99 = vector.broadcast %98 : vector<32x1xf32> to vector<32x64xf32>
    %100 = arith.mulf %91, %99 : vector<32x64xf32>
    %cst_30 = arith.constant dense<0.000000e+00> : vector<32x8xf32>
    %101 = tpu.matmul %100, %84, %cst_30 {dimension_numbers = #tpu.dot_dimension_numbers<[1], [0], [0], [1], [0, 0, 1, 1], [], []>} : vector<32x64xf32>, vector<64x8xf32>, vector<32x8xf32> -> vector<32x8xf32>
    %102 = vector.extract_strided_slice %45 {offsets = [0, 8], sizes = [32, 8], strides = [1, 1]} : vector<32x32xf32> to vector<32x8xf32>
    %103 = vector.extract_strided_slice %47 {offsets = [0, 8], sizes = [64, 8], strides = [1, 1]} : vector<64x64xf32> to vector<64x8xf32>
    %104 = vector.extract_strided_slice %47 {offsets = [0, 40], sizes = [64, 8], strides = [1, 1]} : vector<64x64xf32> to vector<64x8xf32>
    %cst_31 = arith.constant dense<0.000000e+00> : vector<32x64xf32>
    %105 = tpu.matmul %102, %103, %cst_31 {dimension_numbers = #tpu.dot_dimension_numbers<[1], [1], [0], [0], [0, 0, 1, 0], [], []>} : vector<32x8xf32>, vector<64x8xf32>, vector<32x64xf32> -> vector<32x64xf32>
    %106 = arith.addf %105, %81 : vector<32x64xf32>
    %cst_32 = arith.constant dense<0xFF800000> : vector<32xf32>
    %107 = vector.multi_reduction <maximumf>, %106, %cst_32 [1] : vector<32x64xf32> to vector<32xf32>
    %108 = vector.shape_cast %107 : vector<32xf32> to vector<32x1xf32>
    %109 = vector.broadcast %108 : vector<32x1xf32> to vector<32x64xf32>
    %110 = arith.subf %106, %109 : vector<32x64xf32>
    %111 = math.exp %110 : vector<32x64xf32>
    %cst_33 = arith.constant dense<0.000000e+00> : vector<32xf32>
    %112 = vector.multi_reduction <add>, %111, %cst_33 [1] : vector<32x64xf32> to vector<32xf32>
    %113 = vector.shape_cast %112 : vector<32xf32> to vector<32x1xf32>
    %114 = tpu.reciprocal %113 {approx = true} : vector<32x1xf32> -> vector<32x1xf32>
    %115 = arith.mulf %113, %114 : vector<32x1xf32>
    %cst_34 = arith.constant 2.000000e+00 : f32
    %116 = vector.broadcast %cst_34 : f32 to vector<32x1xf32>
    %117 = arith.subf %116, %115 : vector<32x1xf32>
    %118 = arith.mulf %114, %117 : vector<32x1xf32>
    %119 = vector.broadcast %118 : vector<32x1xf32> to vector<32x64xf32>
    %120 = arith.mulf %111, %119 : vector<32x64xf32>
    %cst_35 = arith.constant dense<0.000000e+00> : vector<32x8xf32>
    %121 = tpu.matmul %120, %104, %cst_35 {dimension_numbers = #tpu.dot_dimension_numbers<[1], [0], [0], [1], [0, 0, 1, 1], [], []>} : vector<32x64xf32>, vector<64x8xf32>, vector<32x8xf32> -> vector<32x8xf32>
    %122 = vector.extract_strided_slice %45 {offsets = [0, 16], sizes = [32, 8], strides = [1, 1]} : vector<32x32xf32> to vector<32x8xf32>
    %123 = vector.extract_strided_slice %47 {offsets = [0, 16], sizes = [64, 8], strides = [1, 1]} : vector<64x64xf32> to vector<64x8xf32>
    %124 = vector.extract_strided_slice %47 {offsets = [0, 48], sizes = [64, 8], strides = [1, 1]} : vector<64x64xf32> to vector<64x8xf32>
    %cst_36 = arith.constant dense<0.000000e+00> : vector<32x64xf32>
    %125 = tpu.matmul %122, %123, %cst_36 {dimension_numbers = #tpu.dot_dimension_numbers<[1], [1], [0], [0], [0, 0, 1, 0], [], []>} : vector<32x8xf32>, vector<64x8xf32>, vector<32x64xf32> -> vector<32x64xf32>
    %126 = arith.addf %125, %81 : vector<32x64xf32>
    %cst_37 = arith.constant dense<0xFF800000> : vector<32xf32>
    %127 = vector.multi_reduction <maximumf>, %126, %cst_37 [1] : vector<32x64xf32> to vector<32xf32>
    %128 = vector.shape_cast %127 : vector<32xf32> to vector<32x1xf32>
    %129 = vector.broadcast %128 : vector<32x1xf32> to vector<32x64xf32>
    %130 = arith.subf %126, %129 : vector<32x64xf32>
    %131 = math.exp %130 : vector<32x64xf32>
    %cst_38 = arith.constant dense<0.000000e+00> : vector<32xf32>
    %132 = vector.multi_reduction <add>, %131, %cst_38 [1] : vector<32x64xf32> to vector<32xf32>
    %133 = vector.shape_cast %132 : vector<32xf32> to vector<32x1xf32>
    %134 = tpu.reciprocal %133 {approx = true} : vector<32x1xf32> -> vector<32x1xf32>
    %135 = arith.mulf %133, %134 : vector<32x1xf32>
    %cst_39 = arith.constant 2.000000e+00 : f32
    %136 = vector.broadcast %cst_39 : f32 to vector<32x1xf32>
    %137 = arith.subf %136, %135 : vector<32x1xf32>
    %138 = arith.mulf %134, %137 : vector<32x1xf32>
    %139 = vector.broadcast %138 : vector<32x1xf32> to vector<32x64xf32>
    %140 = arith.mulf %131, %139 : vector<32x64xf32>
    %cst_40 = arith.constant dense<0.000000e+00> : vector<32x8xf32>
    %141 = tpu.matmul %140, %124, %cst_40 {dimension_numbers = #tpu.dot_dimension_numbers<[1], [0], [0], [1], [0, 0, 1, 1], [], []>} : vector<32x64xf32>, vector<64x8xf32>, vector<32x8xf32> -> vector<32x8xf32>
    %142 = vector.extract_strided_slice %45 {offsets = [0, 24], sizes = [32, 8], strides = [1, 1]} : vector<32x32xf32> to vector<32x8xf32>
    %143 = vector.extract_strided_slice %47 {offsets = [0, 24], sizes = [64, 8], strides = [1, 1]} : vector<64x64xf32> to vector<64x8xf32>
    %144 = vector.extract_strided_slice %47 {offsets = [0, 56], sizes = [64, 8], strides = [1, 1]} : vector<64x64xf32> to vector<64x8xf32>
    %cst_41 = arith.constant dense<0.000000e+00> : vector<32x64xf32>
    %145 = tpu.matmul %142, %143, %cst_41 {dimension_numbers = #tpu.dot_dimension_numbers<[1], [1], [0], [0], [0, 0, 1, 0], [], []>} : vector<32x8xf32>, vector<64x8xf32>, vector<32x64xf32> -> vector<32x64xf32>
    %146 = arith.addf %145, %81 : vector<32x64xf32>
    %cst_42 = arith.constant dense<0xFF800000> : vector<32xf32>
    %147 = vector.multi_reduction <maximumf>, %146, %cst_42 [1] : vector<32x64xf32> to vector<32xf32>
    %148 = vector.shape_cast %147 : vector<32xf32> to vector<32x1xf32>
    %149 = vector.broadcast %148 : vector<32x1xf32> to vector<32x64xf32>
    %150 = arith.subf %146, %149 : vector<32x64xf32>
    %151 = math.exp %150 : vector<32x64xf32>
    %cst_43 = arith.constant dense<0.000000e+00> : vector<32xf32>
    %152 = vector.multi_reduction <add>, %151, %cst_43 [1] : vector<32x64xf32> to vector<32xf32>
    %153 = vector.shape_cast %152 : vector<32xf32> to vector<32x1xf32>
    %154 = tpu.reciprocal %153 {approx = true} : vector<32x1xf32> -> vector<32x1xf32>
    %155 = arith.mulf %153, %154 : vector<32x1xf32>
    %cst_44 = arith.constant 2.000000e+00 : f32
    %156 = vector.broadcast %cst_44 : f32 to vector<32x1xf32>
    %157 = arith.subf %156, %155 : vector<32x1xf32>
    %158 = arith.mulf %154, %157 : vector<32x1xf32>
    %159 = vector.broadcast %158 : vector<32x1xf32> to vector<32x64xf32>
    %160 = arith.mulf %151, %159 : vector<32x64xf32>
    %cst_45 = arith.constant dense<0.000000e+00> : vector<32x8xf32>
    %161 = tpu.matmul %160, %144, %cst_45 {dimension_numbers = #tpu.dot_dimension_numbers<[1], [0], [0], [1], [0, 0, 1, 1], [], []>} : vector<32x64xf32>, vector<64x8xf32>, vector<32x8xf32> -> vector<32x8xf32>
    %162 = tpu.concatenate %101, %121, %141, %161 in 1 : vector<32x8xf32>, vector<32x8xf32>, vector<32x8xf32>, vector<32x8xf32> -> vector<32x32xf32>
    %c0_46 = arith.constant 0 : index
    %c0_47 = arith.constant 0 : index
    %163 = vector.load %arg5[%c0_46, %c0_47] : memref<32x32xf32, #tpu.memory_space<vmem>>, vector<32x32xf32>
    %cst_48 = arith.constant dense<0.000000e+00> : vector<32x32xf32>
    %164 = tpu.matmul %162, %163, %cst_48 {dimension_numbers = #tpu.dot_dimension_numbers<[1], [0], [0], [1], [0, 0, 1, 1], [], []>} : vector<32x32xf32>, vector<32x32xf32>, vector<32x32xf32> -> vector<32x32xf32>
    %c0_49 = arith.constant 0 : index
    %c0_50 = arith.constant 0 : index
    %165 = vector.load %arg1[%c0_49, %c0_50] : memref<32x32xf32, #tpu.memory_space<vmem>>, vector<32x32xf32>
    %166 = arith.addf %164, %165 : vector<32x32xf32>
    %c0_51 = arith.constant 0 : index
    %c0_52 = arith.constant 0 : index
    %167 = vector.load %arg8[%c0_51, %c0_52] : memref<32x32xf32, #tpu.memory_space<vmem>>, vector<32x32xf32>
    tpu.vector_store %arg8[%c0_51, %c0_52], %166 {strides = array<i32>} : memref<32x32xf32, #tpu.memory_space<vmem>>, vector<32x32xf32>,
    return
  }
  func.func @transform_0(%arg0: i32) -> (i32, i32) {
    %c0_i32 = arith.constant 0 : i32
    %c0_i32_0 = arith.constant 0 : i32
    return %arg0, %c0_i32 : i32, i32
  }
  func.func @transform_1(%arg0: i32) -> (i32, i32) {
    %c0_i32 = arith.constant 0 : i32
    %c0_i32_0 = arith.constant 0 : i32
    return %arg0, %c0_i32 : i32, i32
  }
  func.func @transform_2(%arg0: i32) -> (i32, i32) {
    %c0_i32 = arith.constant 0 : i32
    %c0_i32_0 = arith.constant 0 : i32
    %c0_i32_1 = arith.constant 0 : i32
    return %c0_i32, %c0_i32_0 : i32, i32
  }
  func.func @transform_3(%arg0: i32) -> (i32, i32) {
    %c0_i32 = arith.constant 0 : i32
    %c0_i32_0 = arith.constant 0 : i32
    %c0_i32_1 = arith.constant 0 : i32
    return %c0_i32, %c0_i32_0 : i32, i32
  }
  func.func @transform_4(%arg0: i32) -> (i32, i32) {
    %c0_i32 = arith.constant 0 : i32
    %c0_i32_0 = arith.constant 0 : i32
    %c0_i32_1 = arith.constant 0 : i32
    return %c0_i32, %c0_i32_0 : i32, i32
  }
  func.func @transform_5(%arg0: i32) -> (i32, i32) {
    %c0_i32 = arith.constant 0 : i32
    %c0_i32_0 = arith.constant 0 : i32
    %c0_i32_1 = arith.constant 0 : i32
    return %c0_i32, %c0_i32_0 : i32, i32
  }
  func.func @transform_6(%arg0: i32) -> (i32, i32) {
    %c0_i32 = arith.constant 0 : i32
    %c0_i32_0 = arith.constant 0 : i32
    %c0_i32_1 = arith.constant 0 : i32
    return %c0_i32, %c0_i32_0 : i32, i32
  }
  func.func @transform_7(%arg0: i32) -> (i32, i32) {
    %c0_i32 = arith.constant 0 : i32
    %c0_i32_0 = arith.constant 0 : i32
    return %arg0, %c0_i32 : i32, i32
  }
}

module attributes {stable_mosaic.version = 11 : i64} {
  func.func @kernel(%arg0: i32, %arg1: memref<32x32xf32, #tpu.memory_space<vmem>>, %arg2: memref<64x32xf32, #tpu.memory_space<vmem>>, %arg3: memref<32x32xf32, #tpu.memory_space<vmem>>, %arg4: memref<32x64xf32, #tpu.memory_space<vmem>>, %arg5: memref<32x32xf32, #tpu.memory_space<vmem>>, %arg6: memref<1x32xf32, #tpu.memory_space<vmem>>, %arg7: memref<1x32xf32, #tpu.memory_space<vmem>>, %arg8: memref<32x32xf32, #tpu.memory_space<vmem>>) attributes {dimension_semantics = [#tpu.dimension_semantics<parallel>], iteration_bounds = array<i64: 1>, scalar_prefetch = 0 : i64, scratch_operands = 0 : i64, tpu.core_type = #tpu.core_type<tc>, window_params = [{transform_indices = @transform_0, window_bounds = array<i64: 32, 32>}, {transform_indices = @transform_1, window_bounds = array<i64: 64, 32>}, {pipeline_mode = #tpu.pipeline_mode<synchronous>, transform_indices = @transform_2, window_bounds = array<i64: 32, 32>}, {pipeline_mode = #tpu.pipeline_mode<synchronous>, transform_indices = @transform_3, window_bounds = array<i64: 32, 64>}, {pipeline_mode = #tpu.pipeline_mode<synchronous>, transform_indices = @transform_4, window_bounds = array<i64: 32, 32>}, {pipeline_mode = #tpu.pipeline_mode<synchronous>, transform_indices = @transform_5, window_bounds = array<i64: 1, 32>}, {pipeline_mode = #tpu.pipeline_mode<synchronous>, transform_indices = @transform_6, window_bounds = array<i64: 1, 32>}, {transform_indices = @transform_7, window_bounds = array<i64: 32, 32>}]} {
    %c0 = arith.constant 0 : index
    %c0_0 = arith.constant 0 : index
    %0 = vector.load %arg6[%c0, %c0_0] : memref<1x32xf32, #tpu.memory_space<vmem>>, vector<1x32xf32>
    %c0_1 = arith.constant 0 : index
    %c0_2 = arith.constant 0 : index
    %1 = vector.load %arg7[%c0_1, %c0_2] : memref<1x32xf32, #tpu.memory_space<vmem>>, vector<1x32xf32>
    %c0_3 = arith.constant 0 : index
    %c0_4 = arith.constant 0 : index
    %2 = vector.load %arg1[%c0_3, %c0_4] : memref<32x32xf32, #tpu.memory_space<vmem>>, vector<32x32xf32>
    %cst = arith.constant dense<0.000000e+00> : vector<32xf32>
    %3 = vector.multi_reduction <add>, %2, %cst [1] : vector<32x32xf32> to vector<32xf32>
    %4 = vector.shape_cast %3 : vector<32xf32> to vector<32x1xf32>
    %cst_5 = arith.constant 3.200000e+01 : f32
    %5 = vector.broadcast %cst_5 : f32 to vector<32x1xf32>
    %6 = arith.divf %4, %5 : vector<32x1xf32>
    %7 = vector.broadcast %6 : vector<32x1xf32> to vector<32x32xf32>
    %8 = arith.subf %2, %7 : vector<32x32xf32>
    %9 = arith.mulf %8, %8 : vector<32x32xf32>
    %cst_6 = arith.constant dense<0.000000e+00> : vector<32xf32>
    %10 = vector.multi_reduction <add>, %9, %cst_6 [1] : vector<32x32xf32> to vector<32xf32>
    %11 = vector.shape_cast %10 : vector<32xf32> to vector<32x1xf32>
    %cst_7 = arith.constant 3.200000e+01 : f32
    %12 = vector.broadcast %cst_7 : f32 to vector<32x1xf32>
    %13 = arith.divf %11, %12 : vector<32x1xf32>
    %cst_8 = arith.constant 9.99999974E-6 : f32
    %14 = vector.broadcast %cst_8 : f32 to vector<32x1xf32>
    %15 = arith.addf %13, %14 : vector<32x1xf32>
    %16 = math.rsqrt %15 : vector<32x1xf32>
    %17 = vector.broadcast %16 : vector<32x1xf32> to vector<32x32xf32>
    %18 = arith.mulf %8, %17 : vector<32x32xf32>
    %19 = vector.broadcast %0 : vector<1x32xf32> to vector<32x32xf32>
    %20 = arith.mulf %18, %19 : vector<32x32xf32>
    %21 = vector.broadcast %1 : vector<1x32xf32> to vector<32x32xf32>
    %22 = arith.addf %20, %21 : vector<32x32xf32>
    %c0_9 = arith.constant 0 : index
    %c0_10 = arith.constant 0 : index
    %23 = vector.load %arg2[%c0_9, %c0_10] : memref<64x32xf32, #tpu.memory_space<vmem>>, vector<64x32xf32>
    %cst_11 = arith.constant dense<0.000000e+00> : vector<64xf32>
    %24 = vector.multi_reduction <add>, %23, %cst_11 [1] : vector<64x32xf32> to vector<64xf32>
    %25 = vector.shape_cast %24 : vector<64xf32> to vector<64x1xf32>
    %cst_12 = arith.constant 3.200000e+01 : f32
    %26 = vector.broadcast %cst_12 : f32 to vector<64x1xf32>
    %27 = arith.divf %25, %26 : vector<64x1xf32>
    %28 = vector.broadcast %27 : vector<64x1xf32> to vector<64x32xf32>
    %29 = arith.subf %23, %28 : vector<64x32xf32>
    %30 = arith.mulf %29, %29 : vector<64x32xf32>
    %cst_13 = arith.constant dense<0.000000e+00> : vector<64xf32>
    %31 = vector.multi_reduction <add>, %30, %cst_13 [1] : vector<64x32xf32> to vector<64xf32>
    %32 = vector.shape_cast %31 : vector<64xf32> to vector<64x1xf32>
    %cst_14 = arith.constant 3.200000e+01 : f32
    %33 = vector.broadcast %cst_14 : f32 to vector<64x1xf32>
    %34 = arith.divf %32, %33 : vector<64x1xf32>
    %cst_15 = arith.constant 9.99999974E-6 : f32
    %35 = vector.broadcast %cst_15 : f32 to vector<64x1xf32>
    %36 = arith.addf %34, %35 : vector<64x1xf32>
    %37 = math.rsqrt %36 : vector<64x1xf32>
    %38 = vector.broadcast %37 : vector<64x1xf32> to vector<64x32xf32>
    %39 = arith.mulf %29, %38 : vector<64x32xf32>
    %40 = vector.broadcast %0 : vector<1x32xf32> to vector<64x32xf32>
    %41 = arith.mulf %39, %40 : vector<64x32xf32>
    %42 = vector.broadcast %1 : vector<1x32xf32> to vector<64x32xf32>
    %43 = arith.addf %41, %42 : vector<64x32xf32>
    %c0_16 = arith.constant 0 : index
    %c0_17 = arith.constant 0 : index
    %44 = vector.load %arg3[%c0_16, %c0_17] : memref<32x32xf32, #tpu.memory_space<vmem>>, vector<32x32xf32>
    %cst_18 = arith.constant dense<0.000000e+00> : vector<32x32xf32>
    %45 = tpu.matmul %22, %44, %cst_18 {dimension_numbers = #tpu.dot_dimension_numbers<[1], [0], [0], [1], [0, 0, 1, 1], [], []>} : vector<32x32xf32>, vector<32x32xf32>, vector<32x32xf32> -> vector<32x32xf32>
    %c0_19 = arith.constant 0 : index
    %c0_20 = arith.constant 0 : index
    %46 = vector.load %arg4[%c0_19, %c0_20] : memref<32x64xf32, #tpu.memory_space<vmem>>, vector<32x64xf32>
    %cst_21 = arith.constant dense<0.000000e+00> : vector<64x64xf32>
    %47 = tpu.matmul %43, %46, %cst_21 {dimension_numbers = #tpu.dot_dimension_numbers<[1], [0], [0], [1], [0, 0, 1, 1], [], []>} : vector<64x32xf32>, vector<32x64xf32>, vector<64x64xf32> -> vector<64x64xf32>
    %48 = tpu.iota {dimensions = array<i32: 0>} : vector<32x1xi32>
    %49 = tpu.iota {dimensions = array<i32: 1>} : vector<1x64xi32>
    %c0_i32 = arith.constant 0 : i32
    %50 = vector.broadcast %c0_i32 : i32 to vector<32x1xi32>
    %c0_i32_22 = arith.constant 0 : i32
    %51 = vector.broadcast %c0_i32_22 : i32 to vector<1x64xi32>
    %c8_i32 = arith.constant 8 : i32
    %52 = vector.broadcast %c8_i32 : i32 to vector<32x1xi32>
    %53 = arith.cmpi sge, %48, %52 : vector<32x1xi32>
    %54 = arith.extui %53 : vector<32x1xi1> to vector<32x1xi32>
    %55 = arith.addi %50, %54 : vector<32x1xi32>
    %c16_i32 = arith.constant 16 : i32
    %56 = vector.broadcast %c16_i32 : i32 to vector<1x64xi32>
    %57 = arith.cmpi sge, %49, %56 : vector<1x64xi32>
    %58 = arith.extui %57 : vector<1x64xi1> to vector<1x64xi32>
    %59 = arith.addi %51, %58 : vector<1x64xi32>
    %c16_i32_23 = arith.constant 16 : i32
    %60 = vector.broadcast %c16_i32_23 : i32 to vector<32x1xi32>
    %61 = arith.cmpi sge, %48, %60 : vector<32x1xi32>
    %62 = arith.extui %61 : vector<32x1xi1> to vector<32x1xi32>
    %63 = arith.addi %55, %62 : vector<32x1xi32>
    %c32_i32 = arith.constant 32 : i32
    %64 = vector.broadcast %c32_i32 : i32 to vector<1x64xi32>
    %65 = arith.cmpi sge, %49, %64 : vector<1x64xi32>
    %66 = arith.extui %65 : vector<1x64xi1> to vector<1x64xi32>
    %67 = arith.addi %59, %66 : vector<1x64xi32>
    %c24_i32 = arith.constant 24 : i32
    %68 = vector.broadcast %c24_i32 : i32 to vector<32x1xi32>
    %69 = arith.cmpi sge, %48, %68 : vector<32x1xi32>
    %70 = arith.extui %69 : vector<32x1xi1> to vector<32x1xi32>
    %71 = arith.addi %63, %70 : vector<32x1xi32>
    %c48_i32 = arith.constant 48 : i32
    %72 = vector.broadcast %c48_i32 : i32 to vector<1x64xi32>
    %73 = arith.cmpi sge, %49, %72 : vector<1x64xi32>
    %74 = arith.extui %73 : vector<1x64xi1> to vector<1x64xi32>
    %75 = arith.addi %67, %74 : vector<1x64xi32>
    %76 = vector.broadcast %71 : vector<32x1xi32> to vector<32x64xi32>
    %77 = vector.broadcast %75 : vector<1x64xi32> to vector<32x64xi32>
    %78 = arith.cmpi eq, %76, %77 : vector<32x64xi32>
    %cst_24 = arith.constant 0.000000e+00 : f32
    %cst_25 = arith.constant -1.000000e+30 : f32
    %79 = vector.broadcast %cst_24 : f32 to vector<32x64xf32>
    %80 = vector.broadcast %cst_25 : f32 to vector<32x64xf32>
    %81 = arith.select %78, %79, %80 : vector<32x64xi1>, vector<32x64xf32>
    %82 = vector.extract_strided_slice %45 {offsets = [0, 0], sizes = [32, 8], strides = [1, 1]} : vector<32x32xf32> to vector<32x8xf32>
    %83 = vector.extract_strided_slice %47 {offsets = [0, 0], sizes = [64, 8], strides = [1, 1]} : vector<64x64xf32> to vector<64x8xf32>
    %84 = vector.extract_strided_slice %47 {offsets = [0, 32], sizes = [64, 8], strides = [1, 1]} : vector<64x64xf32> to vector<64x8xf32>
    %cst_26 = arith.constant dense<0.000000e+00> : vector<32x64xf32>
    %85 = tpu.matmul %82, %83, %cst_26 {dimension_numbers = #tpu.dot_dimension_numbers<[1], [1], [0], [0], [0, 0, 1, 0], [], []>} : vector<32x8xf32>, vector<64x8xf32>, vector<32x64xf32> -> vector<32x64xf32>
    %86 = arith.addf %85, %81 : vector<32x64xf32>
    %cst_27 = arith.constant dense<0xFF800000> : vector<32xf32>
    %87 = vector.multi_reduction <maximumf>, %86, %cst_27 [1] : vector<32x64xf32> to vector<32xf32>
    %88 = vector.shape_cast %87 : vector<32xf32> to vector<32x1xf32>
    %89 = vector.broadcast %88 : vector<32x1xf32> to vector<32x64xf32>
    %90 = arith.subf %86, %89 : vector<32x64xf32>
    %91 = math.exp %90 : vector<32x64xf32>
    %cst_28 = arith.constant dense<0.000000e+00> : vector<32xf32>
    %92 = vector.multi_reduction <add>, %91, %cst_28 [1] : vector<32x64xf32> to vector<32xf32>
    %93 = vector.shape_cast %92 : vector<32xf32> to vector<32x1xf32>
    %94 = tpu.reciprocal %93 {approx = true} : vector<32x1xf32> -> vector<32x1xf32>
    %95 = arith.mulf %93, %94 : vector<32x1xf32>
    %cst_29 = arith.constant 2.000000e+00 : f32
    %96 = vector.broadcast %cst_29 : f32 to vector<32x1xf32>
    %97 = arith.subf %96, %95 : vector<32x1xf32>
    %98 = arith.mulf %94, %97 : vector<32x1xf32>
    %99 = vector.broadcast %98 : vector<32x1xf32> to vector<32x64xf32>
    %100 = arith.mulf %91, %99 : vector<32x64xf32>
    %cst_30 = arith.constant dense<0.000000e+00> : vector<32x8xf32>
    %101 = tpu.matmul %100, %84, %cst_30 {dimension_numbers = #tpu.dot_dimension_numbers<[1], [0], [0], [1], [0, 0, 1, 1], [], []>} : vector<32x64xf32>, vector<64x8xf32>, vector<32x8xf32> -> vector<32x8xf32>
    %102 = vector.extract_strided_slice %45 {offsets = [0, 8], sizes = [32, 8], strides = [1, 1]} : vector<32x32xf32> to vector<32x8xf32>
    %103 = vector.extract_strided_slice %47 {offsets = [0, 8], sizes = [64, 8], strides = [1, 1]} : vector<64x64xf32> to vector<64x8xf32>
    %104 = vector.extract_strided_slice %47 {offsets = [0, 40], sizes = [64, 8], strides = [1, 1]} : vector<64x64xf32> to vector<64x8xf32>
    %cst_31 = arith.constant dense<0.000000e+00> : vector<32x64xf32>
    %105 = tpu.matmul %102, %103, %cst_31 {dimension_numbers = #tpu.dot_dimension_numbers<[1], [1], [0], [0], [0, 0, 1, 0], [], []>} : vector<32x8xf32>, vector<64x8xf32>, vector<32x64xf32> -> vector<32x64xf32>
    %106 = arith.addf %105, %81 : vector<32x64xf32>
    %cst_32 = arith.constant dense<0xFF800000> : vector<32xf32>
    %107 = vector.multi_reduction <maximumf>, %106, %cst_32 [1] : vector<32x64xf32> to vector<32xf32>
    %108 = vector.shape_cast %107 : vector<32xf32> to vector<32x1xf32>
    %109 = vector.broadcast %108 : vector<32x1xf32> to vector<32x64xf32>
    %110 = arith.subf %106, %109 : vector<32x64xf32>
    %111 = math.exp %110 : vector<32x64xf32>
    %cst_33 = arith.constant dense<0.000000e+00> : vector<32xf32>
    %112 = vector.multi_reduction <add>, %111, %cst_33 [1] : vector<32x64xf32> to vector<32xf32>
    %113 = vector.shape_cast %112 : vector<32xf32> to vector<32x1xf32>
    %114 = tpu.reciprocal %113 {approx = true} : vector<32x1xf32> -> vector<32x1xf32>
    %115 = arith.mulf %113, %114 : vector<32x1xf32>
    %cst_34 = arith.constant 2.000000e+00 : f32
    %116 = vector.broadcast %cst_34 : f32 to vector<32x1xf32>
    %117 = arith.subf %116, %115 : vector<32x1xf32>
    %118 = arith.mulf %114, %117 : vector<32x1xf32>
    %119 = vector.broadcast %118 : vector<32x1xf32> to vector<32x64xf32>
    %120 = arith.mulf %111, %119 : vector<32x64xf32>
    %cst_35 = arith.constant dense<0.000000e+00> : vector<32x8xf32>
    %121 = tpu.matmul %120, %104, %cst_35 {dimension_numbers = #tpu.dot_dimension_numbers<[1], [0], [0], [1], [0, 0, 1, 1], [], []>} : vector<32x64xf32>, vector<64x8xf32>, vector<32x8xf32> -> vector<32x8xf32>
    %122 = vector.extract_strided_slice %45 {offsets = [0, 16], sizes = [32, 8], strides = [1, 1]} : vector<32x32xf32> to vector<32x8xf32>
    %123 = vector.extract_strided_slice %47 {offsets = [0, 16], sizes = [64, 8], strides = [1, 1]} : vector<64x64xf32> to vector<64x8xf32>
    %124 = vector.extract_strided_slice %47 {offsets = [0, 48], sizes = [64, 8], strides = [1, 1]} : vector<64x64xf32> to vector<64x8xf32>
    %cst_36 = arith.constant dense<0.000000e+00> : vector<32x64xf32>
    %125 = tpu.matmul %122, %123, %cst_36 {dimension_numbers = #tpu.dot_dimension_numbers<[1], [1], [0], [0], [0, 0, 1, 0], [], []>} : vector<32x8xf32>, vector<64x8xf32>, vector<32x64xf32> -> vector<32x64xf32>
    %126 = arith.addf %125, %81 : vector<32x64xf32>
    %cst_37 = arith.constant dense<0xFF800000> : vector<32xf32>
    %127 = vector.multi_reduction <maximumf>, %126, %cst_37 [1] : vector<32x64xf32> to vector<32xf32>
    %128 = vector.shape_cast %127 : vector<32xf32> to vector<32x1xf32>
    %129 = vector.broadcast %128 : vector<32x1xf32> to vector<32x64xf32>
    %130 = arith.subf %126, %129 : vector<32x64xf32>
    %131 = math.exp %130 : vector<32x64xf32>
    %cst_38 = arith.constant dense<0.000000e+00> : vector<32xf32>
    %132 = vector.multi_reduction <add>, %131, %cst_38 [1] : vector<32x64xf32> to vector<32xf32>
    %133 = vector.shape_cast %132 : vector<32xf32> to vector<32x1xf32>
    %134 = tpu.reciprocal %133 {approx = true} : vector<32x1xf32> -> vector<32x1xf32>
    %135 = arith.mulf %133, %134 : vector<32x1xf32>
    %cst_39 = arith.constant 2.000000e+00 : f32
    %136 = vector.broadcast %cst_39 : f32 to vector<32x1xf32>
    %137 = arith.subf %136, %135 : vector<32x1xf32>
    %138 = arith.mulf %134, %137 : vector<32x1xf32>
    %139 = vector.broadcast %138 : vector<32x1xf32> to vector<32x64xf32>
    %140 = arith.mulf %131, %139 : vector<32x64xf32>
    %cst_40 = arith.constant dense<0.000000e+00> : vector<32x8xf32>
    %141 = tpu.matmul %140, %124, %cst_40 {dimension_numbers = #tpu.dot_dimension_numbers<[1], [0], [0], [1], [0, 0, 1, 1], [], []>} : vector<32x64xf32>, vector<64x8xf32>, vector<32x8xf32> -> vector<32x8xf32>
    %142 = vector.extract_strided_slice %45 {offsets = [0, 24], sizes = [32, 8], strides = [1, 1]} : vector<32x32xf32> to vector<32x8xf32>
    %143 = vector.extract_strided_slice %47 {offsets = [0, 24], sizes = [64, 8], strides = [1, 1]} : vector<64x64xf32> to vector<64x8xf32>
    %144 = vector.extract_strided_slice %47 {offsets = [0, 56], sizes = [64, 8], strides = [1, 1]} : vector<64x64xf32> to vector<64x8xf32>
    %cst_41 = arith.constant dense<0.000000e+00> : vector<32x64xf32>
    %145 = tpu.matmul %142, %143, %cst_41 {dimension_numbers = #tpu.dot_dimension_numbers<[1], [1], [0], [0], [0, 0, 1, 0], [], []>} : vector<32x8xf32>, vector<64x8xf32>, vector<32x64xf32> -> vector<32x64xf32>
    %146 = arith.addf %145, %81 : vector<32x64xf32>
    %cst_42 = arith.constant dense<0xFF800000> : vector<32xf32>
    %147 = vector.multi_reduction <maximumf>, %146, %cst_42 [1] : vector<32x64xf32> to vector<32xf32>
    %148 = vector.shape_cast %147 : vector<32xf32> to vector<32x1xf32>
    %149 = vector.broadcast %148 : vector<32x1xf32> to vector<32x64xf32>
    %150 = arith.subf %146, %149 : vector<32x64xf32>
    %151 = math.exp %150 : vector<32x64xf32>
    %cst_43 = arith.constant dense<0.000000e+00> : vector<32xf32>
    %152 = vector.multi_reduction <add>, %151, %cst_43 [1] : vector<32x64xf32> to vector<32xf32>
    %153 = vector.shape_cast %152 : vector<32xf32> to vector<32x1xf32>
    %154 = tpu.reciprocal %153 {approx = true} : vector<32x1xf32> -> vector<32x1xf32>
    %155 = arith.mulf %153, %154 : vector<32x1xf32>
    %cst_44 = arith.constant 2.000000e+00 : f32
    %156 = vector.broadcast %cst_44 : f32 to vector<32x1xf32>
    %157 = arith.subf %156, %155 : vector<32x1xf32>
    %158 = arith.mulf %154, %157 : vector<32x1xf32>
    %159 = vector.broadcast %158 : vector<32x1xf32> to vector<32x64xf32>
    %160 = arith.mulf %151, %159 : vector<32x64xf32>
    %cst_45 = arith.constant dense<0.000000e+00> : vector<32x8xf32>
    %161 = tpu.matmul %160, %144, %cst_45 {dimension_numbers = #tpu.dot_dimension_numbers<[1], [0], [0], [1], [0, 0, 1, 1], [], []>} : vector<32x64xf32>, vector<64x8xf32>, vector<32x8xf32> -> vector<32x8xf32>
    %162 = tpu.concatenate %101, %121, %141, %161 in 1 : vector<32x8xf32>, vector<32x8xf32>, vector<32x8xf32>, vector<32x8xf32> -> vector<32x32xf32>
    %c0_46 = arith.constant 0 : index
    %c0_47 = arith.constant 0 : index
    %163 = vector.load %arg5[%c0_46, %c0_47] : memref<32x32xf32, #tpu.memory_space<vmem>>, vector<32x32xf32>
    %cst_48 = arith.constant dense<0.000000e+00> : vector<32x32xf32>
    %164 = tpu.matmul %162, %163, %cst_48 {dimension_numbers = #tpu.dot_dimension_numbers<[1], [0], [0], [1], [0, 0, 1, 1], [], []>} : vector<32x32xf32>, vector<32x32xf32>, vector<32x32xf32> -> vector<32x32xf32>
    %c0_49 = arith.constant 0 : index
    %c0_50 = arith.constant 0 : index
    %165 = vector.load %arg1[%c0_49, %c0_50] : memref<32x32xf32, #tpu.memory_space<vmem>>, vector<32x32xf32>
    %166 = arith.addf %164, %165 : vector<32x32xf32>
    %c0_51 = arith.constant 0 : index
    %c0_52 = arith.constant 0 : index
    %167 = vector.load %arg8[%c0_51, %c0_52] : memref<32x32xf32, #tpu.memory_space<vmem>>, vector<32x32xf32>
    tpu.vector_store %arg8[%c0_51, %c0_52], %166 {strides = array<i32>} : memref<32x32xf32, #tpu.memory_space<vmem>>, vector<32x32xf32>,
    return
  }
  func.func @transform_0(%arg0: i32) -> (i32, i32) {
    %c0_i32 = arith.constant 0 : i32
    %c0_i32_0 = arith.constant 0 : i32
    return %arg0, %c0_i32 : i32, i32
  }
  func.func @transform_1(%arg0: i32) -> (i32, i32) {
    %c0_i32 = arith.constant 0 : i32
    %c0_i32_0 = arith.constant 0 : i32
    return %arg0, %c0_i32 : i32, i32
  }
  func.func @transform_2(%arg0: i32) -> (i32, i32) {
    %c0_i32 = arith.constant 0 : i32
    %c0_i32_0 = arith.constant 0 : i32
    %c0_i32_1 = arith.constant 0 : i32
    return %c0_i32, %c0_i32_0 : i32, i32
  }
  func.func @transform_3(%arg0: i32) -> (i32, i32) {
    %c0_i32 = arith.constant 0 : i32
    %c0_i32_0 = arith.constant 0 : i32
    %c0_i32_1 = arith.constant 0 : i32
    return %c0_i32, %c0_i32_0 : i32, i32
  }
  func.func @transform_4(%arg0: i32) -> (i32, i32) {
    %c0_i32 = arith.constant 0 : i32
    %c0_i32_0 = arith.constant 0 : i32
    %c0_i32_1 = arith.constant 0 : i32
    return %c0_i32, %c0_i32_0 : i32, i32
  }
  func.func @transform_5(%arg0: i32) -> (i32, i32) {
    %c0_i32 = arith.constant 0 : i32
    %c0_i32_0 = arith.constant 0 : i32
    %c0_i32_1 = arith.constant 0 : i32
    return %c0_i32, %c0_i32_0 : i32, i32
  }
  func.func @transform_6(%arg0: i32) -> (i32, i32) {
    %c0_i32 = arith.constant 0 : i32
    %c0_i32_0 = arith.constant 0 : i32
    %c0_i32_1 = arith.constant 0 : i32
    return %c0_i32, %c0_i32_0 : i32, i32
  }
  func.func @transform_7(%arg0: i32) -> (i32, i32) {
    %c0_i32 = arith.constant 0 : i32
    %c0_i32_0 = arith.constant 0 : i32
    return %arg0, %c0_i32 : i32, i32
  }
}

</mosaic_0001>

<llo_original>
// kernel: tpu_custom_call.1
$region0: #{tpu_custom_call.1}
  #allocation0 [shape = 'u32[]', space=smem, size = 0x4, offset = 0x4, fixed_abs, tag = 'smem constant byte address 0x4 - core index']
  #allocation1 [shape = 'u32[72,128]{1,0:T(1,128)}', space=vmem, size = 0x9000, scoped, tag = 'internal scratch']
  %s0 = inlined_call_operand.vmem [shape: f32[32,32], index: 0, kind: input, shape index: {}]
  %s1 = inlined_call_operand.vmem [shape: f32[64,32], index: 1, kind: input, shape index: {}]
  %s2 = inlined_call_operand.vmem [shape: f32[32,32], index: 2, kind: input, shape index: {}]
  %s3 = inlined_call_operand.vmem [shape: f32[32,64], index: 3, kind: input, shape index: {}]
  %s4 = inlined_call_operand.hbm [shape: f32[32,32], index: 4, kind: input, shape index: {}]
  %s5 = inlined_call_operand.vmem [shape: f32[1,32], index: 5, kind: input, shape index: {}]
  %s6 = inlined_call_operand.vmem [shape: f32[1,32], index: 6, kind: input, shape index: {}]
  %s7 = inlined_call_operand.hbm [shape: f32[32,32], index: 7, kind: output, shape index: {}]
  %s8 = sld [smem:[#allocation0]]
  $region42: #{tpu_custom_call.1} parent=0
    _
  %s10 = ssub.s32 1, %s8
  %s11 = scalar_select 0, %s10, %s8
  $region1: #{tpu_custom_call.1} parent=0
    #allocation2 [shape = 'u8[16384]{0}', space=vmem, size = 0x4000, scoped, tag = 'input window, operand 4, single buffered']
    #allocation3 [shape = 's32[1]{0}', space=sflag, size = 0x4, scoped, tag = 'scoped memory for tpu_custom_call.1']
    #allocation4 [shape = 's32[1]{0}', space=sflag, size = 0x4, scoped, tag = 'scoped memory for tpu_custom_call.1']
    #allocation5 [shape = 'u8[16384]{0}', space=vmem, size = 0x4000, scoped, tag = 'output window, operand 0, single buffered']
    %12 = vsyncpa [#allocation3], 0
    %13 = vsyncpa [#allocation4], 0
    // Predicated region
    $region2: #{tpu_custom_call.1} parent=1 // pred_check
      _
    $region3: #{tpu_custom_call.1} parent=1 // pred_check_branch
      %15 = sbr.rel (0) target = $region5
    $region4: #{tpu_custom_call.1} parent=1 // pred_region
      _
    $region5: #{tpu_custom_call.1} parent=1 // pred_fallthru
      _
    // Predicated region
    $region6: #{tpu_custom_call.1} parent=1 // pred_check
      _
    $region7: #{tpu_custom_call.1} parent=1 // pred_check_branch
      %17 = sbr.rel (0) target = $region9
    $region8: #{tpu_custom_call.1} parent=1 // pred_region
      _
    $region9: #{tpu_custom_call.1} parent=1 // pred_fallthru
      _
    // Predicated region
    $region10: #{tpu_custom_call.1} parent=1 // pred_check
      _
    $region11: #{tpu_custom_call.1} parent=1 // pred_check_branch
      %19 = sbr.rel (0) target = $region13
    $region12: #{tpu_custom_call.1} parent=1 // pred_region
      _
    $region13: #{tpu_custom_call.1} parent=1 // pred_fallthru
      _
    // Predicated region
    $region14: #{tpu_custom_call.1} parent=1 // pred_check
      _
    $region15: #{tpu_custom_call.1} parent=1 // pred_check_branch
      %21 = sbr.rel (0) target = $region17
    $region16: #{tpu_custom_call.1} parent=1 // pred_region
      _
    $region17: #{tpu_custom_call.1} parent=1 // pred_fallthru
      _
    // Predicated region
    $region18: #{tpu_custom_call.1} parent=1 // pred_check
      _
    $region19: #{tpu_custom_call.1} parent=1 // pred_check_branch
      %23 = sbr.rel (0) target = $region21
    $region20: #{tpu_custom_call.1} parent=1 // pred_region
      %25 = vsyncadd [#allocation3], 0
      %s26 = sshll.u32 %s4, 4
      %s27 = int_to_ptr.hbm [resolvable:$true] %s26
      %s28 = sshll.u32 [#allocation2], 4
      %s29 = int_to_ptr.vmem [resolvable:$true] %s28
      %34 = dma.hbm_to_vmem [thread:$0]  %s27, 512, %s29, [#allocation3], 128, 128, 8
    $region21: #{tpu_custom_call.1} parent=1 // pred_fallthru
      _
    // Predicated region
    $region22: #{tpu_custom_call.1} parent=1 // pred_check
      _
    $region23: #{tpu_custom_call.1} parent=1 // pred_check_branch
      %36 = sbr.rel (0) target = $region25
    $region24: #{tpu_custom_call.1} parent=1 // pred_region
      _
    $region25: #{tpu_custom_call.1} parent=1 // pred_fallthru
      _
    // Predicated region
    $region26: #{tpu_custom_call.1} parent=1 // pred_check
      _
    $region27: #{tpu_custom_call.1} parent=1 // pred_check_branch
      %38 = sbr.rel (0) target = $region29
    $region28: #{tpu_custom_call.1} parent=1 // pred_region
      _
    $region29: #{tpu_custom_call.1} parent=1 // pred_fallthru
      _
    // Predicated region
    $region30: #{tpu_custom_call.1} parent=1 // pred_check
      _
    $region31: #{tpu_custom_call.1} parent=1 // pred_check_branch
      %40 = sbr.rel (0) target = $region33
    $region32: #{tpu_custom_call.1} parent=1 // pred_region
      %42 = dma.done [#allocation3], 512
    $region33: #{tpu_custom_call.1} parent=1 // pred_fallthru
      _
    %v43 = vld [vmem:[%s5] sm:$0x1]
    %v44 = vld [vmem:[%s6] sm:$0x1]
    %v45 = vld [vmem:[%s0] sm:$0xff]
    %v46 = vld [vmem:[%s0 + $0x8] sm:$0xff]
    %v47 = vld [vmem:[%s0 + $0x10] sm:$0xff]
    %v48 = vld [vmem:[%s0 + $0x18] sm:$0xff]
    %vm49 = vcmask 261120
    %v50 = vsel %vm49, %v45, 0.0
    %51 = vadd.xlane.f32.xlu0 %v50
    %v52 = vpop.xlane.xlu0 %51
    %v53 = vsel %vm49, %v46, 0.0
    %54 = vadd.xlane.f32.xlu0 %v53
    %v55 = vpop.xlane.xlu0 %54
    %v56 = vsel %vm49, %v47, 0.0
    %57 = vadd.xlane.f32.xlu0 %v56
    %v58 = vpop.xlane.xlu0 %57
    %v59 = vsel %vm49, %v48, 0.0
    %60 = vadd.xlane.f32.xlu0 %v59
    %v61 = vpop.xlane.xlu0 %60
    %v62 = vrcp.pop 32.0
    %v63 = vmul.f32 32.0, %v62
    %v64 = vsub.f32 1.0, %v63
    %v65 = vmul.f32 %v62, %v64
    %v66 = vadd.f32 %v62, %v65
    %vm67 = vweird.f32 %v62
    %v68 = vsel %vm67, %v62, %v66
    %v69 = vmul.f32 %v52, %v68
    %v70 = vmul.f32 %v55, %v68
    %v71 = vmul.f32 %v58, %v68
    %v72 = vmul.f32 %v61, %v68
    %v73 = vsub.f32 %v45, %v69
    %v74 = vsub.f32 %v46, %v70
    %v75 = vsub.f32 %v47, %v71
    %v76 = vsub.f32 %v48, %v72
    %v77 = vmul.f32 %v73, %v73
    %v78 = vmul.f32 %v74, %v74
    %v79 = vmul.f32 %v75, %v75
    %v80 = vmul.f32 %v76, %v76
    %v81 = vsel %vm49, %v77, 0.0
    %82 = vadd.xlane.f32.xlu0 %v81
    %v83 = vpop.xlane.xlu0 %82
    %v84 = vsel %vm49, %v78, 0.0
    %85 = vadd.xlane.f32.xlu0 %v84
    %v86 = vpop.xlane.xlu0 %85
    %v87 = vsel %vm49, %v79, 0.0
    %88 = vadd.xlane.f32.xlu0 %v87
    %v89 = vpop.xlane.xlu0 %88
    %v90 = vsel %vm49, %v80, 0.0
    %91 = vadd.xlane.f32.xlu0 %v90
    %v92 = vpop.xlane.xlu0 %91
    %v93 = vmul.f32 %v83, %v68
    %v94 = vmul.f32 %v86, %v68
    %v95 = vmul.f32 %v89, %v68
    %v96 = vmul.f32 %v92, %v68
    %v97 = vadd.f32 %v93, 1e-05
    %v98 = vadd.f32 %v94, 1e-05
    %v99 = vadd.f32 %v95, 1e-05
    %v100 = vadd.f32 %v96, 1e-05
    %v101 = vrsqrt.pop %v97
    %v102 = vmul.f32 %v101, %v97
    %v103 = vmul.f32 %v102, %v101
    %v104 = vmul.f32 0.5, %v103
    %v105 = vsub.f32 1.5, %v104
    %v106 = vmul.f32 %v101, %v105
    %vm107 = vweird.f32 %v97
    %vm108 = vweird.f32 %v101
    %vm109 = vmor %vm107, %vm108
    %v110 = vsel %vm109, %v101, %v106
    %v111 = vrsqrt.pop %v98
    %v112 = vmul.f32 %v111, %v98
    %v113 = vmul.f32 %v112, %v111
    %v114 = vmul.f32 0.5, %v113
    %v115 = vsub.f32 1.5, %v114
    %v116 = vmul.f32 %v111, %v115
    %vm117 = vweird.f32 %v98
    %vm118 = vweird.f32 %v111
    %vm119 = vmor %vm117, %vm118
    %v120 = vsel %vm119, %v111, %v116
    %v121 = vrsqrt.pop %v99
    %v122 = vmul.f32 %v121, %v99
    %v123 = vmul.f32 %v122, %v121
    %v124 = vmul.f32 0.5, %v123
    %v125 = vsub.f32 1.5, %v124
    %v126 = vmul.f32 %v121, %v125
    %vm127 = vweird.f32 %v99
    %vm128 = vweird.f32 %v121
    %vm129 = vmor %vm127, %vm128
    %v130 = vsel %vm129, %v121, %v126
    %v131 = vrsqrt.pop %v100
    %v132 = vmul.f32 %v131, %v100
    %v133 = vmul.f32 %v132, %v131
    %v134 = vmul.f32 0.5, %v133
    %v135 = vsub.f32 1.5, %v134
    %v136 = vmul.f32 %v131, %v135
    %vm137 = vweird.f32 %v100
    %vm138 = vweird.f32 %v131
    %vm139 = vmor %vm137, %vm138
    %v140 = vsel %vm139, %v131, %v136
    %v141 = vmul.f32 %v73, %v110
    %v142 = vmul.f32 %v74, %v120
    %v143 = vmul.f32 %v75, %v130
    %v144 = vmul.f32 %v76, %v140
    %v146 = vperm.slane %v43, 0
    %v148 = vmul.f32 %v141, %v146
    %v149 = vmul.f32 %v142, %v146
    %v150 = vmul.f32 %v143, %v146
    %v151 = vmul.f32 %v144, %v146
    %v153 = vperm.slane %v44, 0
    %v155 = vadd.f32 %v148, %v153
    %v156 = vadd.f32 %v149, %v153
    %v157 = vadd.f32 %v150, %v153
    %v158 = vadd.f32 %v151, %v153
    %v159 = vld [vmem:[%s1] sm:$0xff]
    %v160 = vld [vmem:[%s1 + $0x8] sm:$0xff]
    %v161 = vld [vmem:[%s1 + $0x10] sm:$0xff]
    %v162 = vld [vmem:[%s1 + $0x18] sm:$0xff]
    %v163 = vld [vmem:[%s1 + $0x20] sm:$0xff]
    %v164 = vld [vmem:[%s1 + $0x28] sm:$0xff]
    %v165 = vld [vmem:[%s1 + $0x30] sm:$0xff]
    %v166 = vld [vmem:[%s1 + $0x38] sm:$0xff]
    %v167 = vsel %vm49, %v159, 0.0
    %168 = vadd.xlane.f32.xlu0 %v167
    %v169 = vpop.xlane.xlu0 %168
    %v170 = vsel %vm49, %v160, 0.0
    %171 = vadd.xlane.f32.xlu0 %v170
    %v172 = vpop.xlane.xlu0 %171
    %v173 = vsel %vm49, %v161, 0.0
    %174 = vadd.xlane.f32.xlu0 %v173
    %v175 = vpop.xlane.xlu0 %174
    %v176 = vsel %vm49, %v162, 0.0
    %177 = vadd.xlane.f32.xlu0 %v176
    %v178 = vpop.xlane.xlu0 %177
    %v179 = vsel %vm49, %v163, 0.0
    %180 = vadd.xlane.f32.xlu0 %v179
    %v181 = vpop.xlane.xlu0 %180
    %v182 = vsel %vm49, %v164, 0.0
    %183 = vadd.xlane.f32.xlu0 %v182
    %v184 = vpop.xlane.xlu0 %183
    %v185 = vsel %vm49, %v165, 0.0
    %186 = vadd.xlane.f32.xlu0 %v185
    %v187 = vpop.xlane.xlu0 %186
    %v188 = vsel %vm49, %v166, 0.0
    %189 = vadd.xlane.f32.xlu0 %v188
    %v190 = vpop.xlane.xlu0 %189
    %v191 = vmul.f32 %v169, %v68
    %v192 = vmul.f32 %v172, %v68
    %v193 = vmul.f32 %v175, %v68
    %v194 = vmul.f32 %v178, %v68
    %v195 = vmul.f32 %v181, %v68
    %v196 = vmul.f32 %v184, %v68
    %v197 = vmul.f32 %v187, %v68
    %v198 = vmul.f32 %v190, %v68
    %v199 = vsub.f32 %v159, %v191
    %v200 = vsub.f32 %v160, %v192
    %v201 = vsub.f32 %v161, %v193
    %v202 = vsub.f32 %v162, %v194
    %v203 = vsub.f32 %v163, %v195
    %v204 = vsub.f32 %v164, %v196
    %v205 = vsub.f32 %v165, %v197
    %v206 = vsub.f32 %v166, %v198
    %v207 = vmul.f32 %v199, %v199
    %v208 = vmul.f32 %v200, %v200
    %v209 = vmul.f32 %v201, %v201
    %v210 = vmul.f32 %v202, %v202
    %v211 = vmul.f32 %v203, %v203
    %v212 = vmul.f32 %v204, %v204
    %v213 = vmul.f32 %v205, %v205
    %v214 = vmul.f32 %v206, %v206
    %v215 = vsel %vm49, %v207, 0.0
    %216 = vadd.xlane.f32.xlu0 %v215
    %v217 = vpop.xlane.xlu0 %216
    %v218 = vsel %vm49, %v208, 0.0
    %219 = vadd.xlane.f32.xlu0 %v218
    %v220 = vpop.xlane.xlu0 %219
    %v221 = vsel %vm49, %v209, 0.0
    %222 = vadd.xlane.f32.xlu0 %v221
    %v223 = vpop.xlane.xlu0 %222
    %v224 = vsel %vm49, %v210, 0.0
    %225 = vadd.xlane.f32.xlu0 %v224
    %v226 = vpop.xlane.xlu0 %225
    %v227 = vsel %vm49, %v211, 0.0
    %228 = vadd.xlane.f32.xlu0 %v227
    %v229 = vpop.xlane.xlu0 %228
    %v230 = vsel %vm49, %v212, 0.0
    %231 = vadd.xlane.f32.xlu0 %v230
    %v232 = vpop.xlane.xlu0 %231
    %v233 = vsel %vm49, %v213, 0.0
    %234 = vadd.xlane.f32.xlu0 %v233
    %v235 = vpop.xlane.xlu0 %234
    %v236 = vsel %vm49, %v214, 0.0
    %237 = vadd.xlane.f32.xlu0 %v236
    %v238 = vpop.xlane.xlu0 %237
    %v239 = vmul.f32 %v217, %v68
    %v240 = vmul.f32 %v220, %v68
    %v241 = vmul.f32 %v223, %v68
    %v242 = vmul.f32 %v226, %v68
    %v243 = vmul.f32 %v229, %v68
    %v244 = vmul.f32 %v232, %v68
    %v245 = vmul.f32 %v235, %v68
    %v246 = vmul.f32 %v238, %v68
    %v247 = vadd.f32 %v239, 1e-05
    %v248 = vadd.f32 %v240, 1e-05
    %v249 = vadd.f32 %v241, 1e-05
    %v250 = vadd.f32 %v242, 1e-05
    %v251 = vadd.f32 %v243, 1e-05
    %v252 = vadd.f32 %v244, 1e-05
    %v253 = vadd.f32 %v245, 1e-05
    %v254 = vadd.f32 %v246, 1e-05
    %v255 = vrsqrt.pop %v247
    %v256 = vmul.f32 %v255, %v247
    %v257 = vmul.f32 %v256, %v255
    %v258 = vmul.f32 0.5, %v257
    %v259 = vsub.f32 1.5, %v258
    %v260 = vmul.f32 %v255, %v259
    %vm261 = vweird.f32 %v247
    %vm262 = vweird.f32 %v255
    %vm263 = vmor %vm261, %vm262
    %v264 = vsel %vm263, %v255, %v260
    %v265 = vrsqrt.pop %v248
    %v266 = vmul.f32 %v265, %v248
    %v267 = vmul.f32 %v266, %v265
    %v268 = vmul.f32 0.5, %v267
    %v269 = vsub.f32 1.5, %v268
    %v270 = vmul.f32 %v265, %v269
    %vm271 = vweird.f32 %v248
    %vm272 = vweird.f32 %v265
    %vm273 = vmor %vm271, %vm272
    %v274 = vsel %vm273, %v265, %v270
    %v275 = vrsqrt.pop %v249
    %v276 = vmul.f32 %v275, %v249
    %v277 = vmul.f32 %v276, %v275
    %v278 = vmul.f32 0.5, %v277
    %v279 = vsub.f32 1.5, %v278
    %v280 = vmul.f32 %v275, %v279
    %vm281 = vweird.f32 %v249
    %vm282 = vweird.f32 %v275
    %vm283 = vmor %vm281, %vm282
    %v284 = vsel %vm283, %v275, %v280
    %v285 = vrsqrt.pop %v250
    %v286 = vmul.f32 %v285, %v250
    %v287 = vmul.f32 %v286, %v285
    %v288 = vmul.f32 0.5, %v287
    %v289 = vsub.f32 1.5, %v288
    %v290 = vmul.f32 %v285, %v289
    %vm291 = vweird.f32 %v250
    %vm292 = vweird.f32 %v285
    %vm293 = vmor %vm291, %vm292
    %v294 = vsel %vm293, %v285, %v290
    %v295 = vrsqrt.pop %v251
    %v296 = vmul.f32 %v295, %v251
    %v297 = vmul.f32 %v296, %v295
    %v298 = vmul.f32 0.5, %v297
    %v299 = vsub.f32 1.5, %v298
    %v300 = vmul.f32 %v295, %v299
    %vm301 = vweird.f32 %v251
    %vm302 = vweird.f32 %v295
    %vm303 = vmor %vm301, %vm302
    %v304 = vsel %vm303, %v295, %v300
    %v305 = vrsqrt.pop %v252
    %v306 = vmul.f32 %v305, %v252
    %v307 = vmul.f32 %v306, %v305
    %v308 = vmul.f32 0.5, %v307
    %v309 = vsub.f32 1.5, %v308
    %v310 = vmul.f32 %v305, %v309
    %vm311 = vweird.f32 %v252
    %vm312 = vweird.f32 %v305
    %vm313 = vmor %vm311, %vm312
    %v314 = vsel %vm313, %v305, %v310
    %v315 = vrsqrt.pop %v253
    %v316 = vmul.f32 %v315, %v253
    %v317 = vmul.f32 %v316, %v315
    %v318 = vmul.f32 0.5, %v317
    %v319 = vsub.f32 1.5, %v318
    %v320 = vmul.f32 %v315, %v319
    %vm321 = vweird.f32 %v253
    %vm322 = vweird.f32 %v315
    %vm323 = vmor %vm321, %vm322
    %v324 = vsel %vm323, %v315, %v320
    %v325 = vrsqrt.pop %v254
    %v326 = vmul.f32 %v325, %v254
    %v327 = vmul.f32 %v326, %v325
    %v328 = vmul.f32 0.5, %v327
    %v329 = vsub.f32 1.5, %v328
    %v330 = vmul.f32 %v325, %v329
    %vm331 = vweird.f32 %v254
    %vm332 = vweird.f32 %v325
    %vm333 = vmor %vm331, %vm332
    %v334 = vsel %vm333, %v325, %v330
    %v335 = vmul.f32 %v199, %v264
    %v336 = vmul.f32 %v200, %v274
    %v337 = vmul.f32 %v201, %v284
    %v338 = vmul.f32 %v202, %v294
    %v339 = vmul.f32 %v203, %v304
    %v340 = vmul.f32 %v204, %v314
    %v341 = vmul.f32 %v205, %v324
    %v342 = vmul.f32 %v206, %v334
    %v343 = vmul.f32 %v335, %v146
    %v344 = vmul.f32 %v336, %v146
    %v345 = vmul.f32 %v337, %v146
    %v346 = vmul.f32 %v338, %v146
    %v347 = vmul.f32 %v339, %v146
    %v348 = vmul.f32 %v340, %v146
    %v349 = vmul.f32 %v341, %v146
    %v350 = vmul.f32 %v342, %v146
    %v351 = vadd.f32 %v343, %v153
    %v352 = vadd.f32 %v344, %v153
    %v353 = vadd.f32 %v345, %v153
    %v354 = vadd.f32 %v346, %v153
    %v355 = vadd.f32 %v347, %v153
    %v356 = vadd.f32 %v348, %v153
    %v357 = vadd.f32 %v349, %v153
    %v358 = vadd.f32 %v350, %v153
    %v359 = vld [vmem:[%s2] sm:$0xff]
    %v360 = vld [vmem:[%s2 + $0x8] sm:$0xff]
    %v361 = vld [vmem:[%s2 + $0x10] sm:$0xff]
    %v362 = vld [vmem:[%s2 + $0x18] sm:$0xff]
    %v364 = vsel %vm49, %v155, 0
    %v367 = vsel %vm49, %v156, 0
    %v370 = vsel %vm49, %v157, 0
    %v373 = vsel %vm49, %v158, 0
    %375 = vmatpush.msra.mxu0 0.0
    %376 = vmatpush.msra.mxu0 0.0
    %377 = vmatpush.msra.mxu0 0.0
    %378 = vmatpush.msra.mxu0 0.0
    %379 = vmatpush.msra.mxu0 0.0
    %380 = vmatpush.msra.mxu0 0.0
    %381 = vmatpush.msra.mxu0 0.0
    %382 = vmatpush.msra.mxu0 0.0
    %383 = vmatpush.msra.mxu0 0.0
    %384 = vmatpush.msra.mxu0 0.0
    %385 = vmatpush.msra.mxu0 0.0
    %386 = vmatpush.msra.mxu0 0.0
    %387 = vmatpush.msra.mxu0 %v362
    %388 = vmatpush.msra.mxu0 %v361
    %389 = vmatpush.msra.mxu0 %v360
    %390 = vmatpush.msra.mxu0 %v359
    %391 = vmatmul.f32.gmra.mxu0 %v364
    %v392 = vpop.f32.mrf.mxu0
    %v393 = vadd.f32 0.0, %v392
    %394 = vmatmul.f32.gmra.mxu0 %v367
    %v395 = vpop.f32.mrf.mxu0
    %v396 = vadd.f32 0.0, %v395
    %397 = vmatmul.f32.gmra.mxu0 %v370
    %v398 = vpop.f32.mrf.mxu0
    %v399 = vadd.f32 0.0, %v398
    %400 = vmatmul.f32.gmra.mxu0 %v373
    %v401 = vpop.f32.mrf.mxu0
    %v402 = vadd.f32 0.0, %v401
    %403 = vdwg.mxu0
    %v404 = vld [vmem:[%s3] sm:$0xff]
    %v405 = vld [vmem:[%s3 + $0x8] sm:$0xff]
    %v406 = vld [vmem:[%s3 + $0x10] sm:$0xff]
    %v407 = vld [vmem:[%s3 + $0x18] sm:$0xff]
    %v409 = vsel %vm49, %v351, 0
    %v412 = vsel %vm49, %v352, 0
    %v415 = vsel %vm49, %v353, 0
    %v418 = vsel %vm49, %v354, 0
    %v421 = vsel %vm49, %v355, 0
    %v424 = vsel %vm49, %v356, 0
    %v427 = vsel %vm49, %v357, 0
    %v430 = vsel %vm49, %v358, 0
    %432 = vmatpush.msra.mxu0 0.0
    %433 = vmatpush.msra.mxu0 0.0
    %434 = vmatpush.msra.mxu0 0.0
    %435 = vmatpush.msra.mxu0 0.0
    %436 = vmatpush.msra.mxu0 0.0
    %437 = vmatpush.msra.mxu0 0.0
    %438 = vmatpush.msra.mxu0 0.0
    %439 = vmatpush.msra.mxu0 0.0
    %440 = vmatpush.msra.mxu0 0.0
    %441 = vmatpush.msra.mxu0 0.0
    %442 = vmatpush.msra.mxu0 0.0
    %443 = vmatpush.msra.mxu0 0.0
    %444 = vmatpush.msra.mxu0 %v407
    %445 = vmatpush.msra.mxu0 %v406
    %446 = vmatpush.msra.mxu0 %v405
    %447 = vmatpush.msra.mxu0 %v404
    %448 = vmatmul.f32.gmra.mxu0 %v409
    %v449 = vpop.f32.mrf.mxu0
    %v450 = vadd.f32 0.0, %v449
    %451 = vmatmul.f32.gmra.mxu0 %v412
    %v452 = vpop.f32.mrf.mxu0
    %v453 = vadd.f32 0.0, %v452
    %454 = vmatmul.f32.gmra.mxu0 %v415
    %v455 = vpop.f32.mrf.mxu0
    %v456 = vadd.f32 0.0, %v455
    %457 = vmatmul.f32.gmra.mxu0 %v418
    %v458 = vpop.f32.mrf.mxu0
    %v459 = vadd.f32 0.0, %v458
    %460 = vmatmul.f32.gmra.mxu0 %v421
    %v461 = vpop.f32.mrf.mxu0
    %v462 = vadd.f32 0.0, %v461
    %463 = vmatmul.f32.gmra.mxu0 %v424
    %v464 = vpop.f32.mrf.mxu0
    %v465 = vadd.f32 0.0, %v464
    %466 = vmatmul.f32.gmra.mxu0 %v427
    %v467 = vpop.f32.mrf.mxu0
    %v468 = vadd.f32 0.0, %v467
    %469 = vmatmul.f32.gmra.mxu0 %v430
    %v470 = vpop.f32.mrf.mxu0
    %v471 = vadd.f32 0.0, %v470
    %472 = vdwg.mxu0
    %v473 = vlaneseq
    %v474 = vshrl.u32 %v473, 7
    %v475 = vadd.s32 %v474, 8
    %v476 = vadd.s32 %v474, 16
    %v477 = vadd.s32 %v474, 24
    %v478 = vlaneseq
    %v479 = vand.u32 %v478, 127
    %vm480 = vcmp.ge.s32.totalorder %v474, 8
    %vm481 = vcmp.ge.s32.totalorder %v475, 8
    %vm482 = vcmp.ge.s32.totalorder %v476, 8
    %vm483 = vcmp.ge.s32.totalorder %v477, 8
    %v484 = vsel %vm480, 1, 0
    %v485 = vsel %vm481, 1, 0
    %v486 = vsel %vm482, 1, 0
    %v487 = vsel %vm483, 1, 0
    %vm488 = vcmp.ge.s32.totalorder %v479, 16
    %v489 = vsel %vm488, 1, 0
    %vm490 = vcmp.ge.s32.totalorder %v474, 16
    %vm491 = vcmp.ge.s32.totalorder %v475, 16
    %vm492 = vcmp.ge.s32.totalorder %v476, 16
    %vm493 = vcmp.ge.s32.totalorder %v477, 16
    %v494 = vsel %vm490, 1, 0
    %v495 = vsel %vm491, 1, 0
    %v496 = vsel %vm492, 1, 0
    %v497 = vsel %vm493, 1, 0
    %v498 = vadd.s32 %v484, %v494
    %v499 = vadd.s32 %v485, %v495
    %v500 = vadd.s32 %v486, %v496
    %v501 = vadd.s32 %v487, %v497
    %vm502 = vcmp.ge.s32.totalorder %v479, 32
    %v503 = vsel %vm502, 1, 0
    %v504 = vadd.s32 %v489, %v503
    %vm505 = vcmp.ge.s32.totalorder %v474, 24
    %vm506 = vcmp.ge.s32.totalorder %v475, 24
    %vm507 = vcmp.ge.s32.totalorder %v476, 24
    %vm508 = vcmp.ge.s32.totalorder %v477, 24
    %v509 = vsel %vm505, 1, 0
    %v510 = vsel %vm506, 1, 0
    %v511 = vsel %vm507, 1, 0
    %v512 = vsel %vm508, 1, 0
    %v513 = vadd.s32 %v498, %v509
    %v514 = vadd.s32 %v499, %v510
    %v515 = vadd.s32 %v500, %v511
    %v516 = vadd.s32 %v501, %v512
    %vm517 = vcmp.ge.s32.totalorder %v479, 48
    %v518 = vsel %vm517, 1, 0
    %v519 = vadd.s32 %v504, %v518
    %vm520 = vcmp.eq.s32.totalorder %v513, %v519
    %vm521 = vcmp.eq.s32.totalorder %v514, %v519
    %vm522 = vcmp.eq.s32.totalorder %v515, %v519
    %vm523 = vcmp.eq.s32.totalorder %v516, %v519
    %v524 = vsel %vm520, 0.0, -1e+30
    %v525 = vsel %vm521, 0.0, -1e+30
    %v526 = vsel %vm522, 0.0, -1e+30
    %v527 = vsel %vm523, 0.0, -1e+30
    %vm528 = vcmask 64512
    %v530 = vsel %vm528, %v393, 0
    %v533 = vsel %vm528, %v396, 0
    %v536 = vsel %vm528, %v399, 0
    %v539 = vsel %vm528, %v402, 0
    %v542 = vsel %vm528, %v450, 0
    %v545 = vsel %vm528, %v453, 0
    %v548 = vsel %vm528, %v456, 0
    %v551 = vsel %vm528, %v459, 0
    %v554 = vsel %vm528, %v462, 0
    %v557 = vsel %vm528, %v465, 0
    %v560 = vsel %vm528, %v468, 0
    %v563 = vsel %vm528, %v471, 0
    %565 = vmatpush.xpose.msra.mxu0 0.0
    %566 = vmatpush.xpose.msra.mxu0 0.0
    %567 = vmatpush.xpose.msra.mxu0 0.0
    %568 = vmatpush.xpose.msra.mxu0 0.0
    %569 = vmatpush.xpose.msra.mxu0 0.0
    %570 = vmatpush.xpose.msra.mxu0 0.0
    %571 = vmatpush.xpose.msra.mxu0 0.0
    %572 = vmatpush.xpose.msra.mxu0 0.0
    %573 = vmatpush.xpose.msra.mxu0 %v563
    %574 = vmatpush.xpose.msra.mxu0 %v560
    %575 = vmatpush.xpose.msra.mxu0 %v557
    %576 = vmatpush.xpose.msra.mxu0 %v554
    %577 = vmatpush.xpose.msra.mxu0 %v551
    %578 = vmatpush.xpose.msra.mxu0 %v548
    %579 = vmatpush.xpose.msra.mxu0 %v545
    %580 = vmatpush.xpose.msra.mxu0 %v542
    %581 = vmatmul.f32.gmra.mxu0 %v530
    %v582 = vpop.f32.mrf.mxu0
    %v583 = vadd.f32 %v524, %v582
    %584 = vmatmul.f32.gmra.mxu0 %v533
    %v585 = vpop.f32.mrf.mxu0
    %v586 = vadd.f32 %v525, %v585
    %587 = vmatmul.f32.gmra.mxu0 %v536
    %v588 = vpop.f32.mrf.mxu0
    %v589 = vadd.f32 %v526, %v588
    %590 = vmatmul.f32.gmra.mxu0 %v539
    %v591 = vpop.f32.mrf.mxu0
    %v592 = vadd.f32 %v527, %v591
    %593 = vdwg.mxu0
    %vm594 = vcmask 523264
    %v595 = vsel %vm594, %v583, -inf
    %596 = vmax.xlane.f32.xlu0 %v595
    %v597 = vpop.xlane.xlu0 %596
    %v598 = vsel %vm594, %v586, -inf
    %599 = vmax.xlane.f32.xlu0 %v598
    %v600 = vpop.xlane.xlu0 %599
    %v601 = vsel %vm594, %v589, -inf
    %602 = vmax.xlane.f32.xlu0 %v601
    %v603 = vpop.xlane.xlu0 %602
    %v604 = vsel %vm594, %v592, -inf
    %605 = vmax.xlane.f32.xlu0 %v604
    %v606 = vpop.xlane.xlu0 %605
    %v607 = vsub.f32 %v583, %v597
    %v608 = vsub.f32 %v586, %v600
    %v609 = vsub.f32 %v589, %v603
    %v610 = vsub.f32 %v592, %v606
    %v611 = vmul.f32 %v607, 1.442695
    %v612 = vpow.pop %v611
    %v613 = vmul.f32 %v608, 1.442695
    %v614 = vpow.pop %v613
    %v615 = vmul.f32 %v609, 1.442695
    %v616 = vpow.pop %v615
    %v617 = vmul.f32 %v610, 1.442695
    %v618 = vpow.pop %v617
    %v619 = vsel %vm594, %v612, 0.0
    %620 = vadd.xlane.f32.xlu0 %v619
    %v621 = vpop.xlane.xlu0 %620
    %v622 = vsel %vm594, %v614, 0.0
    %623 = vadd.xlane.f32.xlu0 %v622
    %v624 = vpop.xlane.xlu0 %623
    %v625 = vsel %vm594, %v616, 0.0
    %626 = vadd.xlane.f32.xlu0 %v625
    %v627 = vpop.xlane.xlu0 %626
    %v628 = vsel %vm594, %v618, 0.0
    %629 = vadd.xlane.f32.xlu0 %v628
    %v630 = vpop.xlane.xlu0 %629
    %v631 = vrcp.pop %v621
    %v632 = vrcp.pop %v624
    %v633 = vrcp.pop %v627
    %v634 = vrcp.pop %v630
    %v635 = vmul.f32 %v621, %v631
    %v636 = vmul.f32 %v624, %v632
    %v637 = vmul.f32 %v627, %v633
    %v638 = vmul.f32 %v630, %v634
    %v639 = vsub.f32 2.0, %v635
    %v640 = vsub.f32 2.0, %v636
    %v641 = vsub.f32 2.0, %v637
    %v642 = vsub.f32 2.0, %v638
    %v643 = vmul.f32 %v631, %v639
    %v644 = vmul.f32 %v632, %v640
    %v645 = vmul.f32 %v633, %v641
    %v646 = vmul.f32 %v634, %v642
    %v647 = vmul.f32 %v612, %v643
    %v648 = vmul.f32 %v614, %v644
    %v649 = vmul.f32 %v616, %v645
    %v650 = vmul.f32 %v618, %v646
    %651 = vrot.lane.b32.xlu0 %v450, 96
    %v652 = vpop.permute.xlu0 %651
    %653 = vrot.lane.b32.xlu0 %v453, 96
    %v654 = vpop.permute.xlu0 %653
    %655 = vrot.lane.b32.xlu0 %v456, 96
    %v656 = vpop.permute.xlu0 %655
    %657 = vrot.lane.b32.xlu0 %v459, 96
    %v658 = vpop.permute.xlu0 %657
    %659 = vrot.lane.b32.xlu0 %v462, 96
    %v660 = vpop.permute.xlu0 %659
    %661 = vrot.lane.b32.xlu0 %v465, 96
    %v662 = vpop.permute.xlu0 %661
    %663 = vrot.lane.b32.xlu0 %v468, 96
    %v664 = vpop.permute.xlu0 %663
    %665 = vrot.lane.b32.xlu0 %v471, 96
    %v666 = vpop.permute.xlu0 %665
    %v676 = vsel %vm594, %v647, 0
    %v679 = vsel %vm594, %v648, 0
    %v682 = vsel %vm594, %v649, 0
    %v685 = vsel %vm594, %v650, 0
    %687 = vmatpush.msra.mxu0 0.0
    %688 = vmatpush.msra.mxu0 0.0
    %689 = vmatpush.msra.mxu0 0.0
    %690 = vmatpush.msra.mxu0 0.0
    %691 = vmatpush.msra.mxu0 0.0
    %692 = vmatpush.msra.mxu0 0.0
    %693 = vmatpush.msra.mxu0 0.0
    %694 = vmatpush.msra.mxu0 0.0
    %695 = vmatpush.msra.mxu0 %v666
    %696 = vmatpush.msra.mxu0 %v664
    %697 = vmatpush.msra.mxu0 %v662
    %698 = vmatpush.msra.mxu0 %v660
    %699 = vmatpush.msra.mxu0 %v658
    %700 = vmatpush.msra.mxu0 %v656
    %701 = vmatpush.msra.mxu0 %v654
    %702 = vmatpush.msra.mxu0 %v652
    %703 = vmatmul.f32.gmra.mxu0 %v676
    %v704 = vpop.f32.mrf.mxu0
    %v705 = vadd.f32 0.0, %v704
    %706 = vmatmul.f32.gmra.mxu0 %v679
    %v707 = vpop.f32.mrf.mxu0
    %v708 = vadd.f32 0.0, %v707
    %709 = vmatmul.f32.gmra.mxu0 %v682
    %v710 = vpop.f32.mrf.mxu0
    %v711 = vadd.f32 0.0, %v710
    %712 = vmatmul.f32.gmra.mxu0 %v685
    %v713 = vpop.f32.mrf.mxu0
    %v714 = vadd.f32 0.0, %v713
    %715 = vdwg.mxu0
    %716 = vrot.lane.b32.xlu0 %v393, 120
    %v717 = vpop.permute.xlu0 %716
    %718 = vrot.lane.b32.xlu0 %v396, 120
    %v719 = vpop.permute.xlu0 %718
    %720 = vrot.lane.b32.xlu0 %v399, 120
    %v721 = vpop.permute.xlu0 %720
    %722 = vrot.lane.b32.xlu0 %v402, 120
    %v723 = vpop.permute.xlu0 %722
    %724 = vrot.lane.b32.xlu0 %v450, 120
    %v725 = vpop.permute.xlu0 %724
    %726 = vrot.lane.b32.xlu0 %v453, 120
    %v727 = vpop.permute.xlu0 %726
    %728 = vrot.lane.b32.xlu0 %v456, 120
    %v729 = vpop.permute.xlu0 %728
    %730 = vrot.lane.b32.xlu0 %v459, 120
    %v731 = vpop.permute.xlu0 %730
    %732 = vrot.lane.b32.xlu0 %v462, 120
    %v733 = vpop.permute.xlu0 %732
    %734 = vrot.lane.b32.xlu0 %v465, 120
    %v735 = vpop.permute.xlu0 %734
    %736 = vrot.lane.b32.xlu0 %v468, 120
    %v737 = vpop.permute.xlu0 %736
    %738 = vrot.lane.b32.xlu0 %v471, 120
    %v739 = vpop.permute.xlu0 %738
    %v740 = vsel %vm528, %v717, 0
    %v742 = vsel %vm528, %v719, 0
    %v744 = vsel %vm528, %v721, 0
    %v746 = vsel %vm528, %v723, 0
    %v748 = vsel %vm528, %v725, 0
    %v750 = vsel %vm528, %v727, 0
    %v752 = vsel %vm528, %v729, 0
    %v754 = vsel %vm528, %v731, 0
    %v756 = vsel %vm528, %v733, 0
    %v758 = vsel %vm528, %v735, 0
    %v760 = vsel %vm528, %v737, 0
    %v762 = vsel %vm528, %v739, 0
    %764 = vmatpush.xpose.msra.mxu0 0.0
    %765 = vmatpush.xpose.msra.mxu0 0.0
    %766 = vmatpush.xpose.msra.mxu0 0.0
    %767 = vmatpush.xpose.msra.mxu0 0.0
    %768 = vmatpush.xpose.msra.mxu0 0.0
    %769 = vmatpush.xpose.msra.mxu0 0.0
    %770 = vmatpush.xpose.msra.mxu0 0.0
    %771 = vmatpush.xpose.msra.mxu0 0.0
    %772 = vmatpush.xpose.msra.mxu0 %v762
    %773 = vmatpush.xpose.msra.mxu0 %v760
    %774 = vmatpush.xpose.msra.mxu0 %v758
    %775 = vmatpush.xpose.msra.mxu0 %v756
    %776 = vmatpush.xpose.msra.mxu0 %v754
    %777 = vmatpush.xpose.msra.mxu0 %v752
    %778 = vmatpush.xpose.msra.mxu0 %v750
    %779 = vmatpush.xpose.msra.mxu0 %v748
    %780 = vmatmul.f32.gmra.mxu0 %v740
    %v781 = vpop.f32.mrf.mxu0
    %v782 = vadd.f32 %v524, %v781
    %783 = vmatmul.f32.gmra.mxu0 %v742
    %v784 = vpop.f32.mrf.mxu0
    %v785 = vadd.f32 %v525, %v784
    %786 = vmatmul.f32.gmra.mxu0 %v744
    %v787 = vpop.f32.mrf.mxu0
    %v788 = vadd.f32 %v526, %v787
    %789 = vmatmul.f32.gmra.mxu0 %v746
    %v790 = vpop.f32.mrf.mxu0
    %v791 = vadd.f32 %v527, %v790
    %792 = vdwg.mxu0
    %v793 = vsel %vm594, %v782, -inf
    %794 = vmax.xlane.f32.xlu0 %v793
    %v795 = vpop.xlane.xlu0 %794
    %v796 = vsel %vm594, %v785, -inf
    %797 = vmax.xlane.f32.xlu0 %v796
    %v798 = vpop.xlane.xlu0 %797
    %v799 = vsel %vm594, %v788, -inf
    %800 = vmax.xlane.f32.xlu0 %v799
    %v801 = vpop.xlane.xlu0 %800
    %v802 = vsel %vm594, %v791, -inf
    %803 = vmax.xlane.f32.xlu0 %v802
    %v804 = vpop.xlane.xlu0 %803
    %v805 = vsub.f32 %v782, %v795
    %v806 = vsub.f32 %v785, %v798
    %v807 = vsub.f32 %v788, %v801
    %v808 = vsub.f32 %v791, %v804
    %v809 = vmul.f32 %v805, 1.442695
    %v810 = vpow.pop %v809
    %v811 = vmul.f32 %v806, 1.442695
    %v812 = vpow.pop %v811
    %v813 = vmul.f32 %v807, 1.442695
    %v814 = vpow.pop %v813
    %v815 = vmul.f32 %v808, 1.442695
    %v816 = vpow.pop %v815
    %v817 = vsel %vm594, %v810, 0.0
    %818 = vadd.xlane.f32.xlu0 %v817
    %v819 = vpop.xlane.xlu0 %818
    %v820 = vsel %vm594, %v812, 0.0
    %821 = vadd.xlane.f32.xlu0 %v820
    %v822 = vpop.xlane.xlu0 %821
    %v823 = vsel %vm594, %v814, 0.0
    %824 = vadd.xlane.f32.xlu0 %v823
    %v825 = vpop.xlane.xlu0 %824
    %v826 = vsel %vm594, %v816, 0.0
    %827 = vadd.xlane.f32.xlu0 %v826
    %v828 = vpop.xlane.xlu0 %827
    %v829 = vrcp.pop %v819
    %v830 = vrcp.pop %v822
    %v831 = vrcp.pop %v825
    %v832 = vrcp.pop %v828
    %v833 = vmul.f32 %v819, %v829
    %v834 = vmul.f32 %v822, %v830
    %v835 = vmul.f32 %v825, %v831
    %v836 = vmul.f32 %v828, %v832
    %v837 = vsub.f32 2.0, %v833
    %v838 = vsub.f32 2.0, %v834
    %v839 = vsub.f32 2.0, %v835
    %v840 = vsub.f32 2.0, %v836
    %v841 = vmul.f32 %v829, %v837
    %v842 = vmul.f32 %v830, %v838
    %v843 = vmul.f32 %v831, %v839
    %v844 = vmul.f32 %v832, %v840
    %v845 = vmul.f32 %v810, %v841
    %v846 = vmul.f32 %v812, %v842
    %v847 = vmul.f32 %v814, %v843
    %v848 = vmul.f32 %v816, %v844
    %849 = vrot.lane.b32.xlu0 %v450, 88
    %v850 = vpop.permute.xlu0 %849
    %851 = vrot.lane.b32.xlu0 %v453, 88
    %v852 = vpop.permute.xlu0 %851
    %853 = vrot.lane.b32.xlu0 %v456, 88
    %v854 = vpop.permute.xlu0 %853
    %855 = vrot.lane.b32.xlu0 %v459, 88
    %v856 = vpop.permute.xlu0 %855
    %857 = vrot.lane.b32.xlu0 %v462, 88
    %v858 = vpop.permute.xlu0 %857
    %859 = vrot.lane.b32.xlu0 %v465, 88
    %v860 = vpop.permute.xlu0 %859
    %861 = vrot.lane.b32.xlu0 %v468, 88
    %v862 = vpop.permute.xlu0 %861
    %863 = vrot.lane.b32.xlu0 %v471, 88
    %v864 = vpop.permute.xlu0 %863
    %v874 = vsel %vm594, %v845, 0
    %v877 = vsel %vm594, %v846, 0
    %v880 = vsel %vm594, %v847, 0
    %v883 = vsel %vm594, %v848, 0
    %885 = vmatpush.msra.mxu0 0.0
    %886 = vmatpush.msra.mxu0 0.0
    %887 = vmatpush.msra.mxu0 0.0
    %888 = vmatpush.msra.mxu0 0.0
    %889 = vmatpush.msra.mxu0 0.0
    %890 = vmatpush.msra.mxu0 0.0
    %891 = vmatpush.msra.mxu0 0.0
    %892 = vmatpush.msra.mxu0 0.0
    %893 = vmatpush.msra.mxu0 %v864
    %894 = vmatpush.msra.mxu0 %v862
    %895 = vmatpush.msra.mxu0 %v860
    %896 = vmatpush.msra.mxu0 %v858
    %897 = vmatpush.msra.mxu0 %v856
    %898 = vmatpush.msra.mxu0 %v854
    %899 = vmatpush.msra.mxu0 %v852
    %900 = vmatpush.msra.mxu0 %v850
    %901 = vmatmul.f32.gmra.mxu0 %v874
    %v902 = vpop.f32.mrf.mxu0
    %v903 = vadd.f32 0.0, %v902
    %904 = vmatmul.f32.gmra.mxu0 %v877
    %v905 = vpop.f32.mrf.mxu0
    %v906 = vadd.f32 0.0, %v905
    %907 = vmatmul.f32.gmra.mxu0 %v880
    %v908 = vpop.f32.mrf.mxu0
    %v909 = vadd.f32 0.0, %v908
    %910 = vmatmul.f32.gmra.mxu0 %v883
    %v911 = vpop.f32.mrf.mxu0
    %v912 = vadd.f32 0.0, %v911
    %913 = vdwg.mxu0
    %914 = vrot.lane.b32.xlu0 %v393, 112
    %v915 = vpop.permute.xlu0 %914
    %916 = vrot.lane.b32.xlu0 %v396, 112
    %v917 = vpop.permute.xlu0 %916
    %918 = vrot.lane.b32.xlu0 %v399, 112
    %v919 = vpop.permute.xlu0 %918
    %920 = vrot.lane.b32.xlu0 %v402, 112
    %v921 = vpop.permute.xlu0 %920
    %922 = vrot.lane.b32.xlu0 %v450, 112
    %v923 = vpop.permute.xlu0 %922
    %924 = vrot.lane.b32.xlu0 %v453, 112
    %v925 = vpop.permute.xlu0 %924
    %926 = vrot.lane.b32.xlu0 %v456, 112
    %v927 = vpop.permute.xlu0 %926
    %928 = vrot.lane.b32.xlu0 %v459, 112
    %v929 = vpop.permute.xlu0 %928
    %930 = vrot.lane.b32.xlu0 %v462, 112
    %v931 = vpop.permute.xlu0 %930
    %932 = vrot.lane.b32.xlu0 %v465, 112
    %v933 = vpop.permute.xlu0 %932
    %934 = vrot.lane.b32.xlu0 %v468, 112
    %v935 = vpop.permute.xlu0 %934
    %936 = vrot.lane.b32.xlu0 %v471, 112
    %v937 = vpop.permute.xlu0 %936
    %v938 = vsel %vm528, %v915, 0
    %v940 = vsel %vm528, %v917, 0
    %v942 = vsel %vm528, %v919, 0
    %v944 = vsel %vm528, %v921, 0
    %v946 = vsel %vm528, %v923, 0
    %v948 = vsel %vm528, %v925, 0
    %v950 = vsel %vm528, %v927, 0
    %v952 = vsel %vm528, %v929, 0
    %v954 = vsel %vm528, %v931, 0
    %v956 = vsel %vm528, %v933, 0
    %v958 = vsel %vm528, %v935, 0
    %v960 = vsel %vm528, %v937, 0
    %962 = vmatpush.xpose.msra.mxu0 0.0
    %963 = vmatpush.xpose.msra.mxu0 0.0
    %964 = vmatpush.xpose.msra.mxu0 0.0
    %965 = vmatpush.xpose.msra.mxu0 0.0
    %966 = vmatpush.xpose.msra.mxu0 0.0
    %967 = vmatpush.xpose.msra.mxu0 0.0
    %968 = vmatpush.xpose.msra.mxu0 0.0
    %969 = vmatpush.xpose.msra.mxu0 0.0
    %970 = vmatpush.xpose.msra.mxu0 %v960
    %971 = vmatpush.xpose.msra.mxu0 %v958
    %972 = vmatpush.xpose.msra.mxu0 %v956
    %973 = vmatpush.xpose.msra.mxu0 %v954
    %974 = vmatpush.xpose.msra.mxu0 %v952
    %975 = vmatpush.xpose.msra.mxu0 %v950
    %976 = vmatpush.xpose.msra.mxu0 %v948
    %977 = vmatpush.xpose.msra.mxu0 %v946
    %978 = vmatmul.f32.gmra.mxu0 %v938
    %v979 = vpop.f32.mrf.mxu0
    %v980 = vadd.f32 %v524, %v979
    %981 = vmatmul.f32.gmra.mxu0 %v940
    %v982 = vpop.f32.mrf.mxu0
    %v983 = vadd.f32 %v525, %v982
    %984 = vmatmul.f32.gmra.mxu0 %v942
    %v985 = vpop.f32.mrf.mxu0
    %v986 = vadd.f32 %v526, %v985
    %987 = vmatmul.f32.gmra.mxu0 %v944
    %v988 = vpop.f32.mrf.mxu0
    %v989 = vadd.f32 %v527, %v988
    %990 = vdwg.mxu0
    %v991 = vsel %vm594, %v980, -inf
    %992 = vmax.xlane.f32.xlu0 %v991
    %v993 = vpop.xlane.xlu0 %992
    %v994 = vsel %vm594, %v983, -inf
    %995 = vmax.xlane.f32.xlu0 %v994
    %v996 = vpop.xlane.xlu0 %995
    %v997 = vsel %vm594, %v986, -inf
    %998 = vmax.xlane.f32.xlu0 %v997
    %v999 = vpop.xlane.xlu0 %998
    %v1000 = vsel %vm594, %v989, -inf
    %1001 = vmax.xlane.f32.xlu0 %v1000
    %v1002 = vpop.xlane.xlu0 %1001
    %v1003 = vsub.f32 %v980, %v993
    %v1004 = vsub.f32 %v983, %v996
    %v1005 = vsub.f32 %v986, %v999
    %v1006 = vsub.f32 %v989, %v1002
    %v1007 = vmul.f32 %v1003, 1.442695
    %v1008 = vpow.pop %v1007
    %v1009 = vmul.f32 %v1004, 1.442695
    %v1010 = vpow.pop %v1009
    %v1011 = vmul.f32 %v1005, 1.442695
    %v1012 = vpow.pop %v1011
    %v1013 = vmul.f32 %v1006, 1.442695
    %v1014 = vpow.pop %v1013
    %v1015 = vsel %vm594, %v1008, 0.0
    %1016 = vadd.xlane.f32.xlu0 %v1015
    %v1017 = vpop.xlane.xlu0 %1016
    %v1018 = vsel %vm594, %v1010, 0.0
    %1019 = vadd.xlane.f32.xlu0 %v1018
    %v1020 = vpop.xlane.xlu0 %1019
    %v1021 = vsel %vm594, %v1012, 0.0
    %1022 = vadd.xlane.f32.xlu0 %v1021
    %v1023 = vpop.xlane.xlu0 %1022
    %v1024 = vsel %vm594, %v1014, 0.0
    %1025 = vadd.xlane.f32.xlu0 %v1024
    %v1026 = vpop.xlane.xlu0 %1025
    %v1027 = vrcp.pop %v1017
    %v1028 = vrcp.pop %v1020
    %v1029 = vrcp.pop %v1023
    %v1030 = vrcp.pop %v1026
    %v1031 = vmul.f32 %v1017, %v1027
    %v1032 = vmul.f32 %v1020, %v1028
    %v1033 = vmul.f32 %v1023, %v1029
    %v1034 = vmul.f32 %v1026, %v1030
    %v1035 = vsub.f32 2.0, %v1031
    %v1036 = vsub.f32 2.0, %v1032
    %v1037 = vsub.f32 2.0, %v1033
    %v1038 = vsub.f32 2.0, %v1034
    %v1039 = vmul.f32 %v1027, %v1035
    %v1040 = vmul.f32 %v1028, %v1036
    %v1041 = vmul.f32 %v1029, %v1037
    %v1042 = vmul.f32 %v1030, %v1038
    %v1043 = vmul.f32 %v1008, %v1039
    %v1044 = vmul.f32 %v1010, %v1040
    %v1045 = vmul.f32 %v1012, %v1041
    %v1046 = vmul.f32 %v1014, %v1042
    %1047 = vrot.lane.b32.xlu0 %v450, 80
    %v1048 = vpop.permute.xlu0 %1047
    %1049 = vrot.lane.b32.xlu0 %v453, 80
    %v1050 = vpop.permute.xlu0 %1049
    %1051 = vrot.lane.b32.xlu0 %v456, 80
    %v1052 = vpop.permute.xlu0 %1051
    %1053 = vrot.lane.b32.xlu0 %v459, 80
    %v1054 = vpop.permute.xlu0 %1053
    %1055 = vrot.lane.b32.xlu0 %v462, 80
    %v1056 = vpop.permute.xlu0 %1055
    %1057 = vrot.lane.b32.xlu0 %v465, 80
    %v1058 = vpop.permute.xlu0 %1057
    %1059 = vrot.lane.b32.xlu0 %v468, 80
    %v1060 = vpop.permute.xlu0 %1059
    %1061 = vrot.lane.b32.xlu0 %v471, 80
    %v1062 = vpop.permute.xlu0 %1061
    %v1072 = vsel %vm594, %v1043, 0
    %v1075 = vsel %vm594, %v1044, 0
    %v1078 = vsel %vm594, %v1045, 0
    %v1081 = vsel %vm594, %v1046, 0
    %1083 = vmatpush.msra.mxu0 0.0
    %1084 = vmatpush.msra.mxu0 0.0
    %1085 = vmatpush.msra.mxu0 0.0
    %1086 = vmatpush.msra.mxu0 0.0
    %1087 = vmatpush.msra.mxu0 0.0
    %1088 = vmatpush.msra.mxu0 0.0
    %1089 = vmatpush.msra.mxu0 0.0
    %1090 = vmatpush.msra.mxu0 0.0
    %1091 = vmatpush.msra.mxu0 %v1062
    %1092 = vmatpush.msra.mxu0 %v1060
    %1093 = vmatpush.msra.mxu0 %v1058
    %1094 = vmatpush.msra.mxu0 %v1056
    %1095 = vmatpush.msra.mxu0 %v1054
    %1096 = vmatpush.msra.mxu0 %v1052
    %1097 = vmatpush.msra.mxu0 %v1050
    %1098 = vmatpush.msra.mxu0 %v1048
    %1099 = vmatmul.f32.gmra.mxu0 %v1072
    %v1100 = vpop.f32.mrf.mxu0
    %v1101 = vadd.f32 0.0, %v1100
    %1102 = vmatmul.f32.gmra.mxu0 %v1075
    %v1103 = vpop.f32.mrf.mxu0
    %v1104 = vadd.f32 0.0, %v1103
    %1105 = vmatmul.f32.gmra.mxu0 %v1078
    %v1106 = vpop.f32.mrf.mxu0
    %v1107 = vadd.f32 0.0, %v1106
    %1108 = vmatmul.f32.gmra.mxu0 %v1081
    %v1109 = vpop.f32.mrf.mxu0
    %v1110 = vadd.f32 0.0, %v1109
    %1111 = vdwg.mxu0
    %1112 = vrot.lane.b32.xlu0 %v393, 104
    %v1113 = vpop.permute.xlu0 %1112
    %1114 = vrot.lane.b32.xlu0 %v396, 104
    %v1115 = vpop.permute.xlu0 %1114
    %1116 = vrot.lane.b32.xlu0 %v399, 104
    %v1117 = vpop.permute.xlu0 %1116
    %1118 = vrot.lane.b32.xlu0 %v402, 104
    %v1119 = vpop.permute.xlu0 %1118
    %1120 = vrot.lane.b32.xlu0 %v450, 104
    %v1121 = vpop.permute.xlu0 %1120
    %1122 = vrot.lane.b32.xlu0 %v453, 104
    %v1123 = vpop.permute.xlu0 %1122
    %1124 = vrot.lane.b32.xlu0 %v456, 104
    %v1125 = vpop.permute.xlu0 %1124
    %1126 = vrot.lane.b32.xlu0 %v459, 104
    %v1127 = vpop.permute.xlu0 %1126
    %1128 = vrot.lane.b32.xlu0 %v462, 104
    %v1129 = vpop.permute.xlu0 %1128
    %1130 = vrot.lane.b32.xlu0 %v465, 104
    %v1131 = vpop.permute.xlu0 %1130
    %1132 = vrot.lane.b32.xlu0 %v468, 104
    %v1133 = vpop.permute.xlu0 %1132
    %1134 = vrot.lane.b32.xlu0 %v471, 104
    %v1135 = vpop.permute.xlu0 %1134
    %v1136 = vsel %vm528, %v1113, 0
    %v1138 = vsel %vm528, %v1115, 0
    %v1140 = vsel %vm528, %v1117, 0
    %v1142 = vsel %vm528, %v1119, 0
    %v1144 = vsel %vm528, %v1121, 0
    %v1146 = vsel %vm528, %v1123, 0
    %v1148 = vsel %vm528, %v1125, 0
    %v1150 = vsel %vm528, %v1127, 0
    %v1152 = vsel %vm528, %v1129, 0
    %v1154 = vsel %vm528, %v1131, 0
    %v1156 = vsel %vm528, %v1133, 0
    %v1158 = vsel %vm528, %v1135, 0
    %1160 = vmatpush.xpose.msra.mxu0 0.0
    %1161 = vmatpush.xpose.msra.mxu0 0.0
    %1162 = vmatpush.xpose.msra.mxu0 0.0
    %1163 = vmatpush.xpose.msra.mxu0 0.0
    %1164 = vmatpush.xpose.msra.mxu0 0.0
    %1165 = vmatpush.xpose.msra.mxu0 0.0
    %1166 = vmatpush.xpose.msra.mxu0 0.0
    %1167 = vmatpush.xpose.msra.mxu0 0.0
    %1168 = vmatpush.xpose.msra.mxu0 %v1158
    %1169 = vmatpush.xpose.msra.mxu0 %v1156
    %1170 = vmatpush.xpose.msra.mxu0 %v1154
    %1171 = vmatpush.xpose.msra.mxu0 %v1152
    %1172 = vmatpush.xpose.msra.mxu0 %v1150
    %1173 = vmatpush.xpose.msra.mxu0 %v1148
    %1174 = vmatpush.xpose.msra.mxu0 %v1146
    %1175 = vmatpush.xpose.msra.mxu0 %v1144
    %1176 = vmatmul.f32.gmra.mxu0 %v1136
    %v1177 = vpop.f32.mrf.mxu0
    %v1178 = vadd.f32 %v524, %v1177
    %1179 = vmatmul.f32.gmra.mxu0 %v1138
    %v1180 = vpop.f32.mrf.mxu0
    %v1181 = vadd.f32 %v525, %v1180
    %1182 = vmatmul.f32.gmra.mxu0 %v1140
    %v1183 = vpop.f32.mrf.mxu0
    %v1184 = vadd.f32 %v526, %v1183
    %1185 = vmatmul.f32.gmra.mxu0 %v1142
    %v1186 = vpop.f32.mrf.mxu0
    %v1187 = vadd.f32 %v527, %v1186
    %1188 = vdwg.mxu0
    %v1189 = vsel %vm594, %v1178, -inf
    %1190 = vmax.xlane.f32.xlu0 %v1189
    %v1191 = vpop.xlane.xlu0 %1190
    %v1192 = vsel %vm594, %v1181, -inf
    %1193 = vmax.xlane.f32.xlu0 %v1192
    %v1194 = vpop.xlane.xlu0 %1193
    %v1195 = vsel %vm594, %v1184, -inf
    %1196 = vmax.xlane.f32.xlu0 %v1195
    %v1197 = vpop.xlane.xlu0 %1196
    %v1198 = vsel %vm594, %v1187, -inf
    %1199 = vmax.xlane.f32.xlu0 %v1198
    %v1200 = vpop.xlane.xlu0 %1199
    %v1201 = vsub.f32 %v1178, %v1191
    %v1202 = vsub.f32 %v1181, %v1194
    %v1203 = vsub.f32 %v1184, %v1197
    %v1204 = vsub.f32 %v1187, %v1200
    %v1205 = vmul.f32 %v1201, 1.442695
    %v1206 = vpow.pop %v1205
    %v1207 = vmul.f32 %v1202, 1.442695
    %v1208 = vpow.pop %v1207
    %v1209 = vmul.f32 %v1203, 1.442695
    %v1210 = vpow.pop %v1209
    %v1211 = vmul.f32 %v1204, 1.442695
    %v1212 = vpow.pop %v1211
    %v1213 = vsel %vm594, %v1206, 0.0
    %1214 = vadd.xlane.f32.xlu0 %v1213
    %v1215 = vpop.xlane.xlu0 %1214
    %v1216 = vsel %vm594, %v1208, 0.0
    %1217 = vadd.xlane.f32.xlu0 %v1216
    %v1218 = vpop.xlane.xlu0 %1217
    %v1219 = vsel %vm594, %v1210, 0.0
    %1220 = vadd.xlane.f32.xlu0 %v1219
    %v1221 = vpop.xlane.xlu0 %1220
    %v1222 = vsel %vm594, %v1212, 0.0
    %1223 = vadd.xlane.f32.xlu0 %v1222
    %v1224 = vpop.xlane.xlu0 %1223
    %v1225 = vrcp.pop %v1215
    %v1226 = vrcp.pop %v1218
    %v1227 = vrcp.pop %v1221
    %v1228 = vrcp.pop %v1224
    %v1229 = vmul.f32 %v1215, %v1225
    %v1230 = vmul.f32 %v1218, %v1226
    %v1231 = vmul.f32 %v1221, %v1227
    %v1232 = vmul.f32 %v1224, %v1228
    %v1233 = vsub.f32 2.0, %v1229
    %v1234 = vsub.f32 2.0, %v1230
    %v1235 = vsub.f32 2.0, %v1231
    %v1236 = vsub.f32 2.0, %v1232
    %v1237 = vmul.f32 %v1225, %v1233
    %v1238 = vmul.f32 %v1226, %v1234
    %v1239 = vmul.f32 %v1227, %v1235
    %v1240 = vmul.f32 %v1228, %v1236
    %v1241 = vmul.f32 %v1206, %v1237
    %v1242 = vmul.f32 %v1208, %v1238
    %v1243 = vmul.f32 %v1210, %v1239
    %v1244 = vmul.f32 %v1212, %v1240
    %1245 = vrot.lane.b32.xlu0 %v450, 72
    %v1246 = vpop.permute.xlu0 %1245
    %1247 = vrot.lane.b32.xlu0 %v453, 72
    %v1248 = vpop.permute.xlu0 %1247
    %1249 = vrot.lane.b32.xlu0 %v456, 72
    %v1250 = vpop.permute.xlu0 %1249
    %1251 = vrot.lane.b32.xlu0 %v459, 72
    %v1252 = vpop.permute.xlu0 %1251
    %1253 = vrot.lane.b32.xlu0 %v462, 72
    %v1254 = vpop.permute.xlu0 %1253
    %1255 = vrot.lane.b32.xlu0 %v465, 72
    %v1256 = vpop.permute.xlu0 %1255
    %1257 = vrot.lane.b32.xlu0 %v468, 72
    %v1258 = vpop.permute.xlu0 %1257
    %1259 = vrot.lane.b32.xlu0 %v471, 72
    %v1260 = vpop.permute.xlu0 %1259
    %v1270 = vsel %vm594, %v1241, 0
    %v1273 = vsel %vm594, %v1242, 0
    %v1276 = vsel %vm594, %v1243, 0
    %v1279 = vsel %vm594, %v1244, 0
    %1281 = vmatpush.msra.mxu0 0.0
    %1282 = vmatpush.msra.mxu0 0.0
    %1283 = vmatpush.msra.mxu0 0.0
    %1284 = vmatpush.msra.mxu0 0.0
    %1285 = vmatpush.msra.mxu0 0.0
    %1286 = vmatpush.msra.mxu0 0.0
    %1287 = vmatpush.msra.mxu0 0.0
    %1288 = vmatpush.msra.mxu0 0.0
    %1289 = vmatpush.msra.mxu0 %v1260
    %1290 = vmatpush.msra.mxu0 %v1258
    %1291 = vmatpush.msra.mxu0 %v1256
    %1292 = vmatpush.msra.mxu0 %v1254
    %1293 = vmatpush.msra.mxu0 %v1252
    %1294 = vmatpush.msra.mxu0 %v1250
    %1295 = vmatpush.msra.mxu0 %v1248
    %1296 = vmatpush.msra.mxu0 %v1246
    %1297 = vmatmul.f32.gmra.mxu0 %v1270
    %v1298 = vpop.f32.mrf.mxu0
    %v1299 = vadd.f32 0.0, %v1298
    %1300 = vmatmul.f32.gmra.mxu0 %v1273
    %v1301 = vpop.f32.mrf.mxu0
    %v1302 = vadd.f32 0.0, %v1301
    %1303 = vmatmul.f32.gmra.mxu0 %v1276
    %v1304 = vpop.f32.mrf.mxu0
    %v1305 = vadd.f32 0.0, %v1304
    %1306 = vmatmul.f32.gmra.mxu0 %v1279
    %v1307 = vpop.f32.mrf.mxu0
    %v1308 = vadd.f32 0.0, %v1307
    %1309 = vdwg.mxu0
    %1314 = vrot.lane.b32.xlu0 %v903, 8
    %v1315 = vpop.permute.xlu0 %1314
    %1316 = vrot.lane.b32.xlu0 %v906, 8
    %v1317 = vpop.permute.xlu0 %1316
    %1318 = vrot.lane.b32.xlu0 %v909, 8
    %v1319 = vpop.permute.xlu0 %1318
    %1320 = vrot.lane.b32.xlu0 %v912, 8
    %v1321 = vpop.permute.xlu0 %1320
    %1330 = vrot.lane.b32.xlu0 %v1101, 16
    %v1331 = vpop.permute.xlu0 %1330
    %1332 = vrot.lane.b32.xlu0 %v1104, 16
    %v1333 = vpop.permute.xlu0 %1332
    %1334 = vrot.lane.b32.xlu0 %v1107, 16
    %v1335 = vpop.permute.xlu0 %1334
    %1336 = vrot.lane.b32.xlu0 %v1110, 16
    %v1337 = vpop.permute.xlu0 %1336
    %1346 = vrot.lane.b32.xlu0 %v1299, 24
    %v1347 = vpop.permute.xlu0 %1346
    %1348 = vrot.lane.b32.xlu0 %v1302, 24
    %v1349 = vpop.permute.xlu0 %1348
    %1350 = vrot.lane.b32.xlu0 %v1305, 24
    %v1351 = vpop.permute.xlu0 %1350
    %1352 = vrot.lane.b32.xlu0 %v1308, 24
    %v1353 = vpop.permute.xlu0 %1352
    %v1358 = vsel %vm528, %v705, %v1315
    %v1359 = vsel %vm528, %v708, %v1317
    %v1360 = vsel %vm528, %v711, %v1319
    %v1361 = vsel %vm528, %v714, %v1321
    %vm1362 = vcmask 130048
    %v1363 = vsel %vm1362, %v1358, %v1331
    %v1364 = vsel %vm1362, %v1359, %v1333
    %v1365 = vsel %vm1362, %v1360, %v1335
    %v1366 = vsel %vm1362, %v1361, %v1337
    %vm1367 = vcmask 195584
    %v1368 = vsel %vm1367, %v1363, %v1347
    %v1369 = vsel %vm1367, %v1364, %v1349
    %v1370 = vsel %vm1367, %v1365, %v1351
    %v1371 = vsel %vm1367, %v1366, %v1353
    %v1372 = vld [vmem:[#allocation2] sm:$0xff]
    %v1373 = vld [vmem:[#allocation2 + $0x8] sm:$0xff]
    %v1374 = vld [vmem:[#allocation2 + $0x10] sm:$0xff]
    %v1375 = vld [vmem:[#allocation2 + $0x18] sm:$0xff]
    %v1377 = vsel %vm49, %v1368, 0
    %v1380 = vsel %vm49, %v1369, 0
    %v1383 = vsel %vm49, %v1370, 0
    %v1386 = vsel %vm49, %v1371, 0
    %1388 = vmatpush.msra.mxu0 0.0
    %1389 = vmatpush.msra.mxu0 0.0
    %1390 = vmatpush.msra.mxu0 0.0
    %1391 = vmatpush.msra.mxu0 0.0
    %1392 = vmatpush.msra.mxu0 0.0
    %1393 = vmatpush.msra.mxu0 0.0
    %1394 = vmatpush.msra.mxu0 0.0
    %1395 = vmatpush.msra.mxu0 0.0
    %1396 = vmatpush.msra.mxu0 0.0
    %1397 = vmatpush.msra.mxu0 0.0
    %1398 = vmatpush.msra.mxu0 0.0
    %1399 = vmatpush.msra.mxu0 0.0
    %1400 = vmatpush.msra.mxu0 %v1375
    %1401 = vmatpush.msra.mxu0 %v1374
    %1402 = vmatpush.msra.mxu0 %v1373
    %1403 = vmatpush.msra.mxu0 %v1372
    %1404 = vmatmul.f32.gmra.mxu0 %v1377
    %v1405 = vpop.f32.mrf.mxu0
    %v1406 = vadd.f32 %v45, %v1405
    %1407 = vmatmul.f32.gmra.mxu0 %v1380
    %v1408 = vpop.f32.mrf.mxu0
    %v1409 = vadd.f32 %v46, %v1408
    %1410 = vmatmul.f32.gmra.mxu0 %v1383
    %v1411 = vpop.f32.mrf.mxu0
    %v1412 = vadd.f32 %v47, %v1411
    %1413 = vmatmul.f32.gmra.mxu0 %v1386
    %v1414 = vpop.f32.mrf.mxu0
    %v1415 = vadd.f32 %v48, %v1414
    %1416 = vdwg.mxu0
    %1417 = vst.msk [vmem:[#allocation5] sm:$0xff] %vm49, %v1406
    %1418 = vst.msk [vmem:[#allocation5 + $0x8] sm:$0xff] %vm49, %v1409
    %1419 = vst.msk [vmem:[#allocation5 + $0x10] sm:$0xff] %vm49, %v1412
    %1420 = vst.msk [vmem:[#allocation5 + $0x18] sm:$0xff] %vm49, %v1415
    // Predicated region
    $region34: #{tpu_custom_call.1} parent=1 // pred_check
      _
    $region35: #{tpu_custom_call.1} parent=1 // pred_check_branch
      %1422 = sbr.rel (0) target = $region37
    $region36: #{tpu_custom_call.1} parent=1 // pred_region
      %1424 = vsyncadd [#allocation4], 0
      %s1425 = sshll.u32 [#allocation5], 4
      %s1426 = int_to_ptr.vmem [resolvable:$true] %s1425
      %s1427 = sshll.u32 %s7, 4
      %s1428 = int_to_ptr.hbm [resolvable:$true] %s1427
      %1433 = dma.vmem_to_hbm [thread:$0]  %s1426, 512, %s1428, [#allocation4], 128, 128, 8
    $region37: #{tpu_custom_call.1} parent=1 // pred_fallthru
      _
    // Predicated region
    $region38: #{tpu_custom_call.1} parent=1 // pred_check
      _
    $region39: #{tpu_custom_call.1} parent=1 // pred_check_branch
      %1435 = sbr.rel (0) target = $region41
    $region40: #{tpu_custom_call.1} parent=1 // pred_region
      %1437 = dma.done [#allocation4], 512
    $region41: #{tpu_custom_call.1} parent=1 // pred_fallthru
      _
    %1438 = vsyncpa [#allocation3], 1
    %1439 = vsyncpa [#allocation4], 1

// kernel: tpu_custom_call.1
$region0: #{tpu_custom_call.1}
  #allocation0 [shape = 'u32[]', space=smem, size = 0x4, offset = 0x4, fixed_abs, tag = 'smem constant byte address 0x4 - core index']
  #allocation1 [shape = 'u32[72,128]{1,0:T(1,128)}', space=vmem, size = 0x9000, scoped, tag = 'internal scratch']
  %s0 = inlined_call_operand.vmem [shape: f32[32,32], index: 0, kind: input, shape index: {}]
  %s1 = inlined_call_operand.vmem [shape: f32[64,32], index: 1, kind: input, shape index: {}]
  %s2 = inlined_call_operand.vmem [shape: f32[32,32], index: 2, kind: input, shape index: {}]
  %s3 = inlined_call_operand.vmem [shape: f32[32,64], index: 3, kind: input, shape index: {}]
  %s4 = inlined_call_operand.hbm [shape: f32[32,32], index: 4, kind: input, shape index: {}]
  %s5 = inlined_call_operand.vmem [shape: f32[1,32], index: 5, kind: input, shape index: {}]
  %s6 = inlined_call_operand.vmem [shape: f32[1,32], index: 6, kind: input, shape index: {}]
  %s7 = inlined_call_operand.hbm [shape: f32[32,32], index: 7, kind: output, shape index: {}]
  %s8 = sld [smem:[#allocation0]]
  $region42: #{tpu_custom_call.1} parent=0
    _
  %s10 = ssub.s32 1, %s8
  %s11 = scalar_select 0, %s10, %s8
  $region1: #{tpu_custom_call.1} parent=0
    #allocation2 [shape = 'u8[16384]{0}', space=vmem, size = 0x4000, scoped, tag = 'input window, operand 4, single buffered']
    #allocation3 [shape = 's32[1]{0}', space=sflag, size = 0x4, scoped, tag = 'scoped memory for tpu_custom_call.1']
    #allocation4 [shape = 's32[1]{0}', space=sflag, size = 0x4, scoped, tag = 'scoped memory for tpu_custom_call.1']
    #allocation5 [shape = 'u8[16384]{0}', space=vmem, size = 0x4000, scoped, tag = 'output window, operand 0, single buffered']
    %12 = vsyncpa [#allocation3], 0
    %13 = vsyncpa [#allocation4], 0
    // Predicated region
    $region2: #{tpu_custom_call.1} parent=1 // pred_check
      _
    $region3: #{tpu_custom_call.1} parent=1 // pred_check_branch
      %15 = sbr.rel (0) target = $region5
    $region4: #{tpu_custom_call.1} parent=1 // pred_region
      _
    $region5: #{tpu_custom_call.1} parent=1 // pred_fallthru
      _
    // Predicated region
    $region6: #{tpu_custom_call.1} parent=1 // pred_check
      _
    $region7: #{tpu_custom_call.1} parent=1 // pred_check_branch
      %17 = sbr.rel (0) target = $region9
    $region8: #{tpu_custom_call.1} parent=1 // pred_region
      _
    $region9: #{tpu_custom_call.1} parent=1 // pred_fallthru
      _
    // Predicated region
    $region10: #{tpu_custom_call.1} parent=1 // pred_check
      _
    $region11: #{tpu_custom_call.1} parent=1 // pred_check_branch
      %19 = sbr.rel (0) target = $region13
    $region12: #{tpu_custom_call.1} parent=1 // pred_region
      _
    $region13: #{tpu_custom_call.1} parent=1 // pred_fallthru
      _
    // Predicated region
    $region14: #{tpu_custom_call.1} parent=1 // pred_check
      _
    $region15: #{tpu_custom_call.1} parent=1 // pred_check_branch
      %21 = sbr.rel (0) target = $region17
    $region16: #{tpu_custom_call.1} parent=1 // pred_region
      _
    $region17: #{tpu_custom_call.1} parent=1 // pred_fallthru
      _
    // Predicated region
    $region18: #{tpu_custom_call.1} parent=1 // pred_check
      _
    $region19: #{tpu_custom_call.1} parent=1 // pred_check_branch
      %23 = sbr.rel (0) target = $region21
    $region20: #{tpu_custom_call.1} parent=1 // pred_region
      %25 = vsyncadd [#allocation3], 0
      %s26 = sshll.u32 %s4, 4
      %s27 = int_to_ptr.hbm [resolvable:$true] %s26
      %s28 = sshll.u32 [#allocation2], 4
      %s29 = int_to_ptr.vmem [resolvable:$true] %s28
      %34 = dma.hbm_to_vmem [thread:$0]  %s27, 512, %s29, [#allocation3], 128, 128, 8
    $region21: #{tpu_custom_call.1} parent=1 // pred_fallthru
      _
    // Predicated region
    $region22: #{tpu_custom_call.1} parent=1 // pred_check
      _
    $region23: #{tpu_custom_call.1} parent=1 // pred_check_branch
      %36 = sbr.rel (0) target = $region25
    $region24: #{tpu_custom_call.1} parent=1 // pred_region
      _
    $region25: #{tpu_custom_call.1} parent=1 // pred_fallthru
      _
    // Predicated region
    $region26: #{tpu_custom_call.1} parent=1 // pred_check
      _
    $region27: #{tpu_custom_call.1} parent=1 // pred_check_branch
      %38 = sbr.rel (0) target = $region29
    $region28: #{tpu_custom_call.1} parent=1 // pred_region
      _
    $region29: #{tpu_custom_call.1} parent=1 // pred_fallthru
      _
    // Predicated region
    $region30: #{tpu_custom_call.1} parent=1 // pred_check
      _
    $region31: #{tpu_custom_call.1} parent=1 // pred_check_branch
      %40 = sbr.rel (0) target = $region33
    $region32: #{tpu_custom_call.1} parent=1 // pred_region
      %42 = dma.done [#allocation3], 512
    $region33: #{tpu_custom_call.1} parent=1 // pred_fallthru
      _
    %v43 = vld [vmem:[%s5] sm:$0x1]
    %v44 = vld [vmem:[%s6] sm:$0x1]
    %v45 = vld [vmem:[%s0] sm:$0xff]
    %v46 = vld [vmem:[%s0 + $0x8] sm:$0xff]
    %v47 = vld [vmem:[%s0 + $0x10] sm:$0xff]
    %v48 = vld [vmem:[%s0 + $0x18] sm:$0xff]
    %vm49 = vcmask 261120
    %v50 = vsel %vm49, %v45, 0.0
    %51 = vadd.xlane.f32.xlu0 %v50
    %v52 = vpop.xlane.xlu0 %51
    %v53 = vsel %vm49, %v46, 0.0
    %54 = vadd.xlane.f32.xlu0 %v53
    %v55 = vpop.xlane.xlu0 %54
    %v56 = vsel %vm49, %v47, 0.0
    %57 = vadd.xlane.f32.xlu0 %v56
    %v58 = vpop.xlane.xlu0 %57
    %v59 = vsel %vm49, %v48, 0.0
    %60 = vadd.xlane.f32.xlu0 %v59
    %v61 = vpop.xlane.xlu0 %60
    %v62 = vrcp.pop 32.0
    %v63 = vmul.f32 32.0, %v62
    %v64 = vsub.f32 1.0, %v63
    %v65 = vmul.f32 %v62, %v64
    %v66 = vadd.f32 %v62, %v65
    %vm67 = vweird.f32 %v62
    %v68 = vsel %vm67, %v62, %v66
    %v69 = vmul.f32 %v52, %v68
    %v70 = vmul.f32 %v55, %v68
    %v71 = vmul.f32 %v58, %v68
    %v72 = vmul.f32 %v61, %v68
    %v73 = vsub.f32 %v45, %v69
    %v74 = vsub.f32 %v46, %v70
    %v75 = vsub.f32 %v47, %v71
    %v76 = vsub.f32 %v48, %v72
    %v77 = vmul.f32 %v73, %v73
    %v78 = vmul.f32 %v74, %v74
    %v79 = vmul.f32 %v75, %v75
    %v80 = vmul.f32 %v76, %v76
    %v81 = vsel %vm49, %v77, 0.0
    %82 = vadd.xlane.f32.xlu0 %v81
    %v83 = vpop.xlane.xlu0 %82
    %v84 = vsel %vm49, %v78, 0.0
    %85 = vadd.xlane.f32.xlu0 %v84
    %v86 = vpop.xlane.xlu0 %85
    %v87 = vsel %vm49, %v79, 0.0
    %88 = vadd.xlane.f32.xlu0 %v87
    %v89 = vpop.xlane.xlu0 %88
    %v90 = vsel %vm49, %v80, 0.0
    %91 = vadd.xlane.f32.xlu0 %v90
    %v92 = vpop.xlane.xlu0 %91
    %v93 = vmul.f32 %v83, %v68
    %v94 = vmul.f32 %v86, %v68
    %v95 = vmul.f32 %v89, %v68
    %v96 = vmul.f32 %v92, %v68
    %v97 = vadd.f32 %v93, 1e-05
    %v98 = vadd.f32 %v94, 1e-05
    %v99 = vadd.f32 %v95, 1e-05
    %v100 = vadd.f32 %v96, 1e-05
    %v101 = vrsqrt.pop %v97
    %v102 = vmul.f32 %v101, %v97
    %v103 = vmul.f32 %v102, %v101
    %v104 = vmul.f32 0.5, %v103
    %v105 = vsub.f32 1.5, %v104
    %v106 = vmul.f32 %v101, %v105
    %vm107 = vweird.f32 %v97
    %vm108 = vweird.f32 %v101
    %vm109 = vmor %vm107, %vm108
    %v110 = vsel %vm109, %v101, %v106
    %v111 = vrsqrt.pop %v98
    %v112 = vmul.f32 %v111, %v98
    %v113 = vmul.f32 %v112, %v111
    %v114 = vmul.f32 0.5, %v113
    %v115 = vsub.f32 1.5, %v114
    %v116 = vmul.f32 %v111, %v115
    %vm117 = vweird.f32 %v98
    %vm118 = vweird.f32 %v111
    %vm119 = vmor %vm117, %vm118
    %v120 = vsel %vm119, %v111, %v116
    %v121 = vrsqrt.pop %v99
    %v122 = vmul.f32 %v121, %v99
    %v123 = vmul.f32 %v122, %v121
    %v124 = vmul.f32 0.5, %v123
    %v125 = vsub.f32 1.5, %v124
    %v126 = vmul.f32 %v121, %v125
    %vm127 = vweird.f32 %v99
    %vm128 = vweird.f32 %v121
    %vm129 = vmor %vm127, %vm128
    %v130 = vsel %vm129, %v121, %v126
    %v131 = vrsqrt.pop %v100
    %v132 = vmul.f32 %v131, %v100
    %v133 = vmul.f32 %v132, %v131
    %v134 = vmul.f32 0.5, %v133
    %v135 = vsub.f32 1.5, %v134
    %v136 = vmul.f32 %v131, %v135
    %vm137 = vweird.f32 %v100
    %vm138 = vweird.f32 %v131
    %vm139 = vmor %vm137, %vm138
    %v140 = vsel %vm139, %v131, %v136
    %v141 = vmul.f32 %v73, %v110
    %v142 = vmul.f32 %v74, %v120
    %v143 = vmul.f32 %v75, %v130
    %v144 = vmul.f32 %v76, %v140
    %v146 = vperm.slane %v43, 0
    %v148 = vmul.f32 %v141, %v146
    %v149 = vmul.f32 %v142, %v146
    %v150 = vmul.f32 %v143, %v146
    %v151 = vmul.f32 %v144, %v146
    %v153 = vperm.slane %v44, 0
    %v155 = vadd.f32 %v148, %v153
    %v156 = vadd.f32 %v149, %v153
    %v157 = vadd.f32 %v150, %v153
    %v158 = vadd.f32 %v151, %v153
    %v159 = vld [vmem:[%s1] sm:$0xff]
    %v160 = vld [vmem:[%s1 + $0x8] sm:$0xff]
    %v161 = vld [vmem:[%s1 + $0x10] sm:$0xff]
    %v162 = vld [vmem:[%s1 + $0x18] sm:$0xff]
    %v163 = vld [vmem:[%s1 + $0x20] sm:$0xff]
    %v164 = vld [vmem:[%s1 + $0x28] sm:$0xff]
    %v165 = vld [vmem:[%s1 + $0x30] sm:$0xff]
    %v166 = vld [vmem:[%s1 + $0x38] sm:$0xff]
    %v167 = vsel %vm49, %v159, 0.0
    %168 = vadd.xlane.f32.xlu0 %v167
    %v169 = vpop.xlane.xlu0 %168
    %v170 = vsel %vm49, %v160, 0.0
    %171 = vadd.xlane.f32.xlu0 %v170
    %v172 = vpop.xlane.xlu0 %171
    %v173 = vsel %vm49, %v161, 0.0
    %174 = vadd.xlane.f32.xlu0 %v173
    %v175 = vpop.xlane.xlu0 %174
    %v176 = vsel %vm49, %v162, 0.0
    %177 = vadd.xlane.f32.xlu0 %v176
    %v178 = vpop.xlane.xlu0 %177
    %v179 = vsel %vm49, %v163, 0.0
    %180 = vadd.xlane.f32.xlu0 %v179
    %v181 = vpop.xlane.xlu0 %180
    %v182 = vsel %vm49, %v164, 0.0
    %183 = vadd.xlane.f32.xlu0 %v182
    %v184 = vpop.xlane.xlu0 %183
    %v185 = vsel %vm49, %v165, 0.0
    %186 = vadd.xlane.f32.xlu0 %v185
    %v187 = vpop.xlane.xlu0 %186
    %v188 = vsel %vm49, %v166, 0.0
    %189 = vadd.xlane.f32.xlu0 %v188
    %v190 = vpop.xlane.xlu0 %189
    %v191 = vmul.f32 %v169, %v68
    %v192 = vmul.f32 %v172, %v68
    %v193 = vmul.f32 %v175, %v68
    %v194 = vmul.f32 %v178, %v68
    %v195 = vmul.f32 %v181, %v68
    %v196 = vmul.f32 %v184, %v68
    %v197 = vmul.f32 %v187, %v68
    %v198 = vmul.f32 %v190, %v68
    %v199 = vsub.f32 %v159, %v191
    %v200 = vsub.f32 %v160, %v192
    %v201 = vsub.f32 %v161, %v193
    %v202 = vsub.f32 %v162, %v194
    %v203 = vsub.f32 %v163, %v195
    %v204 = vsub.f32 %v164, %v196
    %v205 = vsub.f32 %v165, %v197
    %v206 = vsub.f32 %v166, %v198
    %v207 = vmul.f32 %v199, %v199
    %v208 = vmul.f32 %v200, %v200
    %v209 = vmul.f32 %v201, %v201
    %v210 = vmul.f32 %v202, %v202
    %v211 = vmul.f32 %v203, %v203
    %v212 = vmul.f32 %v204, %v204
    %v213 = vmul.f32 %v205, %v205
    %v214 = vmul.f32 %v206, %v206
    %v215 = vsel %vm49, %v207, 0.0
    %216 = vadd.xlane.f32.xlu0 %v215
    %v217 = vpop.xlane.xlu0 %216
    %v218 = vsel %vm49, %v208, 0.0
    %219 = vadd.xlane.f32.xlu0 %v218
    %v220 = vpop.xlane.xlu0 %219
    %v221 = vsel %vm49, %v209, 0.0
    %222 = vadd.xlane.f32.xlu0 %v221
    %v223 = vpop.xlane.xlu0 %222
    %v224 = vsel %vm49, %v210, 0.0
    %225 = vadd.xlane.f32.xlu0 %v224
    %v226 = vpop.xlane.xlu0 %225
    %v227 = vsel %vm49, %v211, 0.0
    %228 = vadd.xlane.f32.xlu0 %v227
    %v229 = vpop.xlane.xlu0 %228
    %v230 = vsel %vm49, %v212, 0.0
    %231 = vadd.xlane.f32.xlu0 %v230
    %v232 = vpop.xlane.xlu0 %231
    %v233 = vsel %vm49, %v213, 0.0
    %234 = vadd.xlane.f32.xlu0 %v233
    %v235 = vpop.xlane.xlu0 %234
    %v236 = vsel %vm49, %v214, 0.0
    %237 = vadd.xlane.f32.xlu0 %v236
    %v238 = vpop.xlane.xlu0 %237
    %v239 = vmul.f32 %v217, %v68
    %v240 = vmul.f32 %v220, %v68
    %v241 = vmul.f32 %v223, %v68
    %v242 = vmul.f32 %v226, %v68
    %v243 = vmul.f32 %v229, %v68
    %v244 = vmul.f32 %v232, %v68
    %v245 = vmul.f32 %v235, %v68
    %v246 = vmul.f32 %v238, %v68
    %v247 = vadd.f32 %v239, 1e-05
    %v248 = vadd.f32 %v240, 1e-05
    %v249 = vadd.f32 %v241, 1e-05
    %v250 = vadd.f32 %v242, 1e-05
    %v251 = vadd.f32 %v243, 1e-05
    %v252 = vadd.f32 %v244, 1e-05
    %v253 = vadd.f32 %v245, 1e-05
    %v254 = vadd.f32 %v246, 1e-05
    %v255 = vrsqrt.pop %v247
    %v256 = vmul.f32 %v255, %v247
    %v257 = vmul.f32 %v256, %v255
    %v258 = vmul.f32 0.5, %v257
    %v259 = vsub.f32 1.5, %v258
    %v260 = vmul.f32 %v255, %v259
    %vm261 = vweird.f32 %v247
    %vm262 = vweird.f32 %v255
    %vm263 = vmor %vm261, %vm262
    %v264 = vsel %vm263, %v255, %v260
    %v265 = vrsqrt.pop %v248
    %v266 = vmul.f32 %v265, %v248
    %v267 = vmul.f32 %v266, %v265
    %v268 = vmul.f32 0.5, %v267
    %v269 = vsub.f32 1.5, %v268
    %v270 = vmul.f32 %v265, %v269
    %vm271 = vweird.f32 %v248
    %vm272 = vweird.f32 %v265
    %vm273 = vmor %vm271, %vm272
    %v274 = vsel %vm273, %v265, %v270
    %v275 = vrsqrt.pop %v249
    %v276 = vmul.f32 %v275, %v249
    %v277 = vmul.f32 %v276, %v275
    %v278 = vmul.f32 0.5, %v277
    %v279 = vsub.f32 1.5, %v278
    %v280 = vmul.f32 %v275, %v279
    %vm281 = vweird.f32 %v249
    %vm282 = vweird.f32 %v275
    %vm283 = vmor %vm281, %vm282
    %v284 = vsel %vm283, %v275, %v280
    %v285 = vrsqrt.pop %v250
    %v286 = vmul.f32 %v285, %v250
    %v287 = vmul.f32 %v286, %v285
    %v288 = vmul.f32 0.5, %v287
    %v289 = vsub.f32 1.5, %v288
    %v290 = vmul.f32 %v285, %v289
    %vm291 = vweird.f32 %v250
    %vm292 = vweird.f32 %v285
    %vm293 = vmor %vm291, %vm292
    %v294 = vsel %vm293, %v285, %v290
    %v295 = vrsqrt.pop %v251
    %v296 = vmul.f32 %v295, %v251
    %v297 = vmul.f32 %v296, %v295
    %v298 = vmul.f32 0.5, %v297
    %v299 = vsub.f32 1.5, %v298
    %v300 = vmul.f32 %v295, %v299
    %vm301 = vweird.f32 %v251
    %vm302 = vweird.f32 %v295
    %vm303 = vmor %vm301, %vm302
    %v304 = vsel %vm303, %v295, %v300
    %v305 = vrsqrt.pop %v252
    %v306 = vmul.f32 %v305, %v252
    %v307 = vmul.f32 %v306, %v305
    %v308 = vmul.f32 0.5, %v307
    %v309 = vsub.f32 1.5, %v308
    %v310 = vmul.f32 %v305, %v309
    %vm311 = vweird.f32 %v252
    %vm312 = vweird.f32 %v305
    %vm313 = vmor %vm311, %vm312
    %v314 = vsel %vm313, %v305, %v310
    %v315 = vrsqrt.pop %v253
    %v316 = vmul.f32 %v315, %v253
    %v317 = vmul.f32 %v316, %v315
    %v318 = vmul.f32 0.5, %v317
    %v319 = vsub.f32 1.5, %v318
    %v320 = vmul.f32 %v315, %v319
    %vm321 = vweird.f32 %v253
    %vm322 = vweird.f32 %v315
    %vm323 = vmor %vm321, %vm322
    %v324 = vsel %vm323, %v315, %v320
    %v325 = vrsqrt.pop %v254
    %v326 = vmul.f32 %v325, %v254
    %v327 = vmul.f32 %v326, %v325
    %v328 = vmul.f32 0.5, %v327
    %v329 = vsub.f32 1.5, %v328
    %v330 = vmul.f32 %v325, %v329
    %vm331 = vweird.f32 %v254
    %vm332 = vweird.f32 %v325
    %vm333 = vmor %vm331, %vm332
    %v334 = vsel %vm333, %v325, %v330
    %v335 = vmul.f32 %v199, %v264
    %v336 = vmul.f32 %v200, %v274
    %v337 = vmul.f32 %v201, %v284
    %v338 = vmul.f32 %v202, %v294
    %v339 = vmul.f32 %v203, %v304
    %v340 = vmul.f32 %v204, %v314
    %v341 = vmul.f32 %v205, %v324
    %v342 = vmul.f32 %v206, %v334
    %v343 = vmul.f32 %v335, %v146
    %v344 = vmul.f32 %v336, %v146
    %v345 = vmul.f32 %v337, %v146
    %v346 = vmul.f32 %v338, %v146
    %v347 = vmul.f32 %v339, %v146
    %v348 = vmul.f32 %v340, %v146
    %v349 = vmul.f32 %v341, %v146
    %v350 = vmul.f32 %v342, %v146
    %v351 = vadd.f32 %v343, %v153
    %v352 = vadd.f32 %v344, %v153
    %v353 = vadd.f32 %v345, %v153
    %v354 = vadd.f32 %v346, %v153
    %v355 = vadd.f32 %v347, %v153
    %v356 = vadd.f32 %v348, %v153
    %v357 = vadd.f32 %v349, %v153
    %v358 = vadd.f32 %v350, %v153
    %v359 = vld [vmem:[%s2] sm:$0xff]
    %v360 = vld [vmem:[%s2 + $0x8] sm:$0xff]
    %v361 = vld [vmem:[%s2 + $0x10] sm:$0xff]
    %v362 = vld [vmem:[%s2 + $0x18] sm:$0xff]
    %v364 = vsel %vm49, %v155, 0
    %v367 = vsel %vm49, %v156, 0
    %v370 = vsel %vm49, %v157, 0
    %v373 = vsel %vm49, %v158, 0
    %375 = vmatpush.msra.mxu0 0.0
    %376 = vmatpush.msra.mxu0 0.0
    %377 = vmatpush.msra.mxu0 0.0
    %378 = vmatpush.msra.mxu0 0.0
    %379 = vmatpush.msra.mxu0 0.0
    %380 = vmatpush.msra.mxu0 0.0
    %381 = vmatpush.msra.mxu0 0.0
    %382 = vmatpush.msra.mxu0 0.0
    %383 = vmatpush.msra.mxu0 0.0
    %384 = vmatpush.msra.mxu0 0.0
    %385 = vmatpush.msra.mxu0 0.0
    %386 = vmatpush.msra.mxu0 0.0
    %387 = vmatpush.msra.mxu0 %v362
    %388 = vmatpush.msra.mxu0 %v361
    %389 = vmatpush.msra.mxu0 %v360
    %390 = vmatpush.msra.mxu0 %v359
    %391 = vmatmul.f32.gmra.mxu0 %v364
    %v392 = vpop.f32.mrf.mxu0
    %v393 = vadd.f32 0.0, %v392
    %394 = vmatmul.f32.gmra.mxu0 %v367
    %v395 = vpop.f32.mrf.mxu0
    %v396 = vadd.f32 0.0, %v395
    %397 = vmatmul.f32.gmra.mxu0 %v370
    %v398 = vpop.f32.mrf.mxu0
    %v399 = vadd.f32 0.0, %v398
    %400 = vmatmul.f32.gmra.mxu0 %v373
    %v401 = vpop.f32.mrf.mxu0
    %v402 = vadd.f32 0.0, %v401
    %403 = vdwg.mxu0
    %v404 = vld [vmem:[%s3] sm:$0xff]
    %v405 = vld [vmem:[%s3 + $0x8] sm:$0xff]
    %v406 = vld [vmem:[%s3 + $0x10] sm:$0xff]
    %v407 = vld [vmem:[%s3 + $0x18] sm:$0xff]
    %v409 = vsel %vm49, %v351, 0
    %v412 = vsel %vm49, %v352, 0
    %v415 = vsel %vm49, %v353, 0
    %v418 = vsel %vm49, %v354, 0
    %v421 = vsel %vm49, %v355, 0
    %v424 = vsel %vm49, %v356, 0
    %v427 = vsel %vm49, %v357, 0
    %v430 = vsel %vm49, %v358, 0
    %432 = vmatpush.msra.mxu0 0.0
    %433 = vmatpush.msra.mxu0 0.0
    %434 = vmatpush.msra.mxu0 0.0
    %435 = vmatpush.msra.mxu0 0.0
    %436 = vmatpush.msra.mxu0 0.0
    %437 = vmatpush.msra.mxu0 0.0
    %438 = vmatpush.msra.mxu0 0.0
    %439 = vmatpush.msra.mxu0 0.0
    %440 = vmatpush.msra.mxu0 0.0
    %441 = vmatpush.msra.mxu0 0.0
    %442 = vmatpush.msra.mxu0 0.0
    %443 = vmatpush.msra.mxu0 0.0
    %444 = vmatpush.msra.mxu0 %v407
    %445 = vmatpush.msra.mxu0 %v406
    %446 = vmatpush.msra.mxu0 %v405
    %447 = vmatpush.msra.mxu0 %v404
    %448 = vmatmul.f32.gmra.mxu0 %v409
    %v449 = vpop.f32.mrf.mxu0
    %v450 = vadd.f32 0.0, %v449
    %451 = vmatmul.f32.gmra.mxu0 %v412
    %v452 = vpop.f32.mrf.mxu0
    %v453 = vadd.f32 0.0, %v452
    %454 = vmatmul.f32.gmra.mxu0 %v415
    %v455 = vpop.f32.mrf.mxu0
    %v456 = vadd.f32 0.0, %v455
    %457 = vmatmul.f32.gmra.mxu0 %v418
    %v458 = vpop.f32.mrf.mxu0
    %v459 = vadd.f32 0.0, %v458
    %460 = vmatmul.f32.gmra.mxu0 %v421
    %v461 = vpop.f32.mrf.mxu0
    %v462 = vadd.f32 0.0, %v461
    %463 = vmatmul.f32.gmra.mxu0 %v424
    %v464 = vpop.f32.mrf.mxu0
    %v465 = vadd.f32 0.0, %v464
    %466 = vmatmul.f32.gmra.mxu0 %v427
    %v467 = vpop.f32.mrf.mxu0
    %v468 = vadd.f32 0.0, %v467
    %469 = vmatmul.f32.gmra.mxu0 %v430
    %v470 = vpop.f32.mrf.mxu0
    %v471 = vadd.f32 0.0, %v470
    %472 = vdwg.mxu0
    %v473 = vlaneseq
    %v474 = vshrl.u32 %v473, 7
    %v475 = vadd.s32 %v474, 8
    %v476 = vadd.s32 %v474, 16
    %v477 = vadd.s32 %v474, 24
    %v478 = vlaneseq
    %v479 = vand.u32 %v478, 127
    %vm480 = vcmp.ge.s32.totalorder %v474, 8
    %vm481 = vcmp.ge.s32.totalorder %v475, 8
    %vm482 = vcmp.ge.s32.totalorder %v476, 8
    %vm483 = vcmp.ge.s32.totalorder %v477, 8
    %v484 = vsel %vm480, 1, 0
    %v485 = vsel %vm481, 1, 0
    %v486 = vsel %vm482, 1, 0
    %v487 = vsel %vm483, 1, 0
    %vm488 = vcmp.ge.s32.totalorder %v479, 16
    %v489 = vsel %vm488, 1, 0
    %vm490 = vcmp.ge.s32.totalorder %v474, 16
    %vm491 = vcmp.ge.s32.totalorder %v475, 16
    %vm492 = vcmp.ge.s32.totalorder %v476, 16
    %vm493 = vcmp.ge.s32.totalorder %v477, 16
    %v494 = vsel %vm490, 1, 0
    %v495 = vsel %vm491, 1, 0
    %v496 = vsel %vm492, 1, 0
    %v497 = vsel %vm493, 1, 0
    %v498 = vadd.s32 %v484, %v494
    %v499 = vadd.s32 %v485, %v495
    %v500 = vadd.s32 %v486, %v496
    %v501 = vadd.s32 %v487, %v497
    %vm502 = vcmp.ge.s32.totalorder %v479, 32
    %v503 = vsel %vm502, 1, 0
    %v504 = vadd.s32 %v489, %v503
    %vm505 = vcmp.ge.s32.totalorder %v474, 24
    %vm506 = vcmp.ge.s32.totalorder %v475, 24
    %vm507 = vcmp.ge.s32.totalorder %v476, 24
    %vm508 = vcmp.ge.s32.totalorder %v477, 24
    %v509 = vsel %vm505, 1, 0
    %v510 = vsel %vm506, 1, 0
    %v511 = vsel %vm507, 1, 0
    %v512 = vsel %vm508, 1, 0
    %v513 = vadd.s32 %v498, %v509
    %v514 = vadd.s32 %v499, %v510
    %v515 = vadd.s32 %v500, %v511
    %v516 = vadd.s32 %v501, %v512
    %vm517 = vcmp.ge.s32.totalorder %v479, 48
    %v518 = vsel %vm517, 1, 0
    %v519 = vadd.s32 %v504, %v518
    %vm520 = vcmp.eq.s32.totalorder %v513, %v519
    %vm521 = vcmp.eq.s32.totalorder %v514, %v519
    %vm522 = vcmp.eq.s32.totalorder %v515, %v519
    %vm523 = vcmp.eq.s32.totalorder %v516, %v519
    %v524 = vsel %vm520, 0.0, -1e+30
    %v525 = vsel %vm521, 0.0, -1e+30
    %v526 = vsel %vm522, 0.0, -1e+30
    %v527 = vsel %vm523, 0.0, -1e+30
    %vm528 = vcmask 64512
    %v530 = vsel %vm528, %v393, 0
    %v533 = vsel %vm528, %v396, 0
    %v536 = vsel %vm528, %v399, 0
    %v539 = vsel %vm528, %v402, 0
    %v542 = vsel %vm528, %v450, 0
    %v545 = vsel %vm528, %v453, 0
    %v548 = vsel %vm528, %v456, 0
    %v551 = vsel %vm528, %v459, 0
    %v554 = vsel %vm528, %v462, 0
    %v557 = vsel %vm528, %v465, 0
    %v560 = vsel %vm528, %v468, 0
    %v563 = vsel %vm528, %v471, 0
    %565 = vmatpush.xpose.msra.mxu0 0.0
    %566 = vmatpush.xpose.msra.mxu0 0.0
    %567 = vmatpush.xpose.msra.mxu0 0.0
    %568 = vmatpush.xpose.msra.mxu0 0.0
    %569 = vmatpush.xpose.msra.mxu0 0.0
    %570 = vmatpush.xpose.msra.mxu0 0.0
    %571 = vmatpush.xpose.msra.mxu0 0.0
    %572 = vmatpush.xpose.msra.mxu0 0.0
    %573 = vmatpush.xpose.msra.mxu0 %v563
    %574 = vmatpush.xpose.msra.mxu0 %v560
    %575 = vmatpush.xpose.msra.mxu0 %v557
    %576 = vmatpush.xpose.msra.mxu0 %v554
    %577 = vmatpush.xpose.msra.mxu0 %v551
    %578 = vmatpush.xpose.msra.mxu0 %v548
    %579 = vmatpush.xpose.msra.mxu0 %v545
    %580 = vmatpush.xpose.msra.mxu0 %v542
    %581 = vmatmul.f32.gmra.mxu0 %v530
    %v582 = vpop.f32.mrf.mxu0
    %v583 = vadd.f32 %v524, %v582
    %584 = vmatmul.f32.gmra.mxu0 %v533
    %v585 = vpop.f32.mrf.mxu0
    %v586 = vadd.f32 %v525, %v585
    %587 = vmatmul.f32.gmra.mxu0 %v536
    %v588 = vpop.f32.mrf.mxu0
    %v589 = vadd.f32 %v526, %v588
    %590 = vmatmul.f32.gmra.mxu0 %v539
    %v591 = vpop.f32.mrf.mxu0
    %v592 = vadd.f32 %v527, %v591
    %593 = vdwg.mxu0
    %vm594 = vcmask 523264
    %v595 = vsel %vm594, %v583, -inf
    %596 = vmax.xlane.f32.xlu0 %v595
    %v597 = vpop.xlane.xlu0 %596
    %v598 = vsel %vm594, %v586, -inf
    %599 = vmax.xlane.f32.xlu0 %v598
    %v600 = vpop.xlane.xlu0 %599
    %v601 = vsel %vm594, %v589, -inf
    %602 = vmax.xlane.f32.xlu0 %v601
    %v603 = vpop.xlane.xlu0 %602
    %v604 = vsel %vm594, %v592, -inf
    %605 = vmax.xlane.f32.xlu0 %v604
    %v606 = vpop.xlane.xlu0 %605
    %v607 = vsub.f32 %v583, %v597
    %v608 = vsub.f32 %v586, %v600
    %v609 = vsub.f32 %v589, %v603
    %v610 = vsub.f32 %v592, %v606
    %v611 = vmul.f32 %v607, 1.442695
    %v612 = vpow.pop %v611
    %v613 = vmul.f32 %v608, 1.442695
    %v614 = vpow.pop %v613
    %v615 = vmul.f32 %v609, 1.442695
    %v616 = vpow.pop %v615
    %v617 = vmul.f32 %v610, 1.442695
    %v618 = vpow.pop %v617
    %v619 = vsel %vm594, %v612, 0.0
    %620 = vadd.xlane.f32.xlu0 %v619
    %v621 = vpop.xlane.xlu0 %620
    %v622 = vsel %vm594, %v614, 0.0
    %623 = vadd.xlane.f32.xlu0 %v622
    %v624 = vpop.xlane.xlu0 %623
    %v625 = vsel %vm594, %v616, 0.0
    %626 = vadd.xlane.f32.xlu0 %v625
    %v627 = vpop.xlane.xlu0 %626
    %v628 = vsel %vm594, %v618, 0.0
    %629 = vadd.xlane.f32.xlu0 %v628
    %v630 = vpop.xlane.xlu0 %629
    %v631 = vrcp.pop %v621
    %v632 = vrcp.pop %v624
    %v633 = vrcp.pop %v627
    %v634 = vrcp.pop %v630
    %v635 = vmul.f32 %v621, %v631
    %v636 = vmul.f32 %v624, %v632
    %v637 = vmul.f32 %v627, %v633
    %v638 = vmul.f32 %v630, %v634
    %v639 = vsub.f32 2.0, %v635
    %v640 = vsub.f32 2.0, %v636
    %v641 = vsub.f32 2.0, %v637
    %v642 = vsub.f32 2.0, %v638
    %v643 = vmul.f32 %v631, %v639
    %v644 = vmul.f32 %v632, %v640
    %v645 = vmul.f32 %v633, %v641
    %v646 = vmul.f32 %v634, %v642
    %v647 = vmul.f32 %v612, %v643
    %v648 = vmul.f32 %v614, %v644
    %v649 = vmul.f32 %v616, %v645
    %v650 = vmul.f32 %v618, %v646
    %651 = vrot.lane.b32.xlu0 %v450, 96
    %v652 = vpop.permute.xlu0 %651
    %653 = vrot.lane.b32.xlu0 %v453, 96
    %v654 = vpop.permute.xlu0 %653
    %655 = vrot.lane.b32.xlu0 %v456, 96
    %v656 = vpop.permute.xlu0 %655
    %657 = vrot.lane.b32.xlu0 %v459, 96
    %v658 = vpop.permute.xlu0 %657
    %659 = vrot.lane.b32.xlu0 %v462, 96
    %v660 = vpop.permute.xlu0 %659
    %661 = vrot.lane.b32.xlu0 %v465, 96
    %v662 = vpop.permute.xlu0 %661
    %663 = vrot.lane.b32.xlu0 %v468, 96
    %v664 = vpop.permute.xlu0 %663
    %665 = vrot.lane.b32.xlu0 %v471, 96
    %v666 = vpop.permute.xlu0 %665
    %v676 = vsel %vm594, %v647, 0
    %v679 = vsel %vm594, %v648, 0
    %v682 = vsel %vm594, %v649, 0
    %v685 = vsel %vm594, %v650, 0
    %687 = vmatpush.msra.mxu0 0.0
    %688 = vmatpush.msra.mxu0 0.0
    %689 = vmatpush.msra.mxu0 0.0
    %690 = vmatpush.msra.mxu0 0.0
    %691 = vmatpush.msra.mxu0 0.0
    %692 = vmatpush.msra.mxu0 0.0
    %693 = vmatpush.msra.mxu0 0.0
    %694 = vmatpush.msra.mxu0 0.0
    %695 = vmatpush.msra.mxu0 %v666
    %696 = vmatpush.msra.mxu0 %v664
    %697 = vmatpush.msra.mxu0 %v662
    %698 = vmatpush.msra.mxu0 %v660
    %699 = vmatpush.msra.mxu0 %v658
    %700 = vmatpush.msra.mxu0 %v656
    %701 = vmatpush.msra.mxu0 %v654
    %702 = vmatpush.msra.mxu0 %v652
    %703 = vmatmul.f32.gmra.mxu0 %v676
    %v704 = vpop.f32.mrf.mxu0
    %v705 = vadd.f32 0.0, %v704
    %706 = vmatmul.f32.gmra.mxu0 %v679
    %v707 = vpop.f32.mrf.mxu0
    %v708 = vadd.f32 0.0, %v707
    %709 = vmatmul.f32.gmra.mxu0 %v682
    %v710 = vpop.f32.mrf.mxu0
    %v711 = vadd.f32 0.0, %v710
    %712 = vmatmul.f32.gmra.mxu0 %v685
    %v713 = vpop.f32.mrf.mxu0
    %v714 = vadd.f32 0.0, %v713
    %715 = vdwg.mxu0
    %716 = vrot.lane.b32.xlu0 %v393, 120
    %v717 = vpop.permute.xlu0 %716
    %718 = vrot.lane.b32.xlu0 %v396, 120
    %v719 = vpop.permute.xlu0 %718
    %720 = vrot.lane.b32.xlu0 %v399, 120
    %v721 = vpop.permute.xlu0 %720
    %722 = vrot.lane.b32.xlu0 %v402, 120
    %v723 = vpop.permute.xlu0 %722
    %724 = vrot.lane.b32.xlu0 %v450, 120
    %v725 = vpop.permute.xlu0 %724
    %726 = vrot.lane.b32.xlu0 %v453, 120
    %v727 = vpop.permute.xlu0 %726
    %728 = vrot.lane.b32.xlu0 %v456, 120
    %v729 = vpop.permute.xlu0 %728
    %730 = vrot.lane.b32.xlu0 %v459, 120
    %v731 = vpop.permute.xlu0 %730
    %732 = vrot.lane.b32.xlu0 %v462, 120
    %v733 = vpop.permute.xlu0 %732
    %734 = vrot.lane.b32.xlu0 %v465, 120
    %v735 = vpop.permute.xlu0 %734
    %736 = vrot.lane.b32.xlu0 %v468, 120
    %v737 = vpop.permute.xlu0 %736
    %738 = vrot.lane.b32.xlu0 %v471, 120
    %v739 = vpop.permute.xlu0 %738
    %v740 = vsel %vm528, %v717, 0
    %v742 = vsel %vm528, %v719, 0
    %v744 = vsel %vm528, %v721, 0
    %v746 = vsel %vm528, %v723, 0
    %v748 = vsel %vm528, %v725, 0
    %v750 = vsel %vm528, %v727, 0
    %v752 = vsel %vm528, %v729, 0
    %v754 = vsel %vm528, %v731, 0
    %v756 = vsel %vm528, %v733, 0
    %v758 = vsel %vm528, %v735, 0
    %v760 = vsel %vm528, %v737, 0
    %v762 = vsel %vm528, %v739, 0
    %764 = vmatpush.xpose.msra.mxu0 0.0
    %765 = vmatpush.xpose.msra.mxu0 0.0
    %766 = vmatpush.xpose.msra.mxu0 0.0
    %767 = vmatpush.xpose.msra.mxu0 0.0
    %768 = vmatpush.xpose.msra.mxu0 0.0
    %769 = vmatpush.xpose.msra.mxu0 0.0
    %770 = vmatpush.xpose.msra.mxu0 0.0
    %771 = vmatpush.xpose.msra.mxu0 0.0
    %772 = vmatpush.xpose.msra.mxu0 %v762
    %773 = vmatpush.xpose.msra.mxu0 %v760
    %774 = vmatpush.xpose.msra.mxu0 %v758
    %775 = vmatpush.xpose.msra.mxu0 %v756
    %776 = vmatpush.xpose.msra.mxu0 %v754
    %777 = vmatpush.xpose.msra.mxu0 %v752
    %778 = vmatpush.xpose.msra.mxu0 %v750
    %779 = vmatpush.xpose.msra.mxu0 %v748
    %780 = vmatmul.f32.gmra.mxu0 %v740
    %v781 = vpop.f32.mrf.mxu0
    %v782 = vadd.f32 %v524, %v781
    %783 = vmatmul.f32.gmra.mxu0 %v742
    %v784 = vpop.f32.mrf.mxu0
    %v785 = vadd.f32 %v525, %v784
    %786 = vmatmul.f32.gmra.mxu0 %v744
    %v787 = vpop.f32.mrf.mxu0
    %v788 = vadd.f32 %v526, %v787
    %789 = vmatmul.f32.gmra.mxu0 %v746
    %v790 = vpop.f32.mrf.mxu0
    %v791 = vadd.f32 %v527, %v790
    %792 = vdwg.mxu0
    %v793 = vsel %vm594, %v782, -inf
    %794 = vmax.xlane.f32.xlu0 %v793
    %v795 = vpop.xlane.xlu0 %794
    %v796 = vsel %vm594, %v785, -inf
    %797 = vmax.xlane.f32.xlu0 %v796
    %v798 = vpop.xlane.xlu0 %797
    %v799 = vsel %vm594, %v788, -inf
    %800 = vmax.xlane.f32.xlu0 %v799
    %v801 = vpop.xlane.xlu0 %800
    %v802 = vsel %vm594, %v791, -inf
    %803 = vmax.xlane.f32.xlu0 %v802
    %v804 = vpop.xlane.xlu0 %803
    %v805 = vsub.f32 %v782, %v795
    %v806 = vsub.f32 %v785, %v798
    %v807 = vsub.f32 %v788, %v801
    %v808 = vsub.f32 %v791, %v804
    %v809 = vmul.f32 %v805, 1.442695
    %v810 = vpow.pop %v809
    %v811 = vmul.f32 %v806, 1.442695
    %v812 = vpow.pop %v811
    %v813 = vmul.f32 %v807, 1.442695
    %v814 = vpow.pop %v813
    %v815 = vmul.f32 %v808, 1.442695
    %v816 = vpow.pop %v815
    %v817 = vsel %vm594, %v810, 0.0
    %818 = vadd.xlane.f32.xlu0 %v817
    %v819 = vpop.xlane.xlu0 %818
    %v820 = vsel %vm594, %v812, 0.0
    %821 = vadd.xlane.f32.xlu0 %v820
    %v822 = vpop.xlane.xlu0 %821
    %v823 = vsel %vm594, %v814, 0.0
    %824 = vadd.xlane.f32.xlu0 %v823
    %v825 = vpop.xlane.xlu0 %824
    %v826 = vsel %vm594, %v816, 0.0
    %827 = vadd.xlane.f32.xlu0 %v826
    %v828 = vpop.xlane.xlu0 %827
    %v829 = vrcp.pop %v819
    %v830 = vrcp.pop %v822
    %v831 = vrcp.pop %v825
    %v832 = vrcp.pop %v828
    %v833 = vmul.f32 %v819, %v829
    %v834 = vmul.f32 %v822, %v830
    %v835 = vmul.f32 %v825, %v831
    %v836 = vmul.f32 %v828, %v832
    %v837 = vsub.f32 2.0, %v833
    %v838 = vsub.f32 2.0, %v834
    %v839 = vsub.f32 2.0, %v835
    %v840 = vsub.f32 2.0, %v836
    %v841 = vmul.f32 %v829, %v837
    %v842 = vmul.f32 %v830, %v838
    %v843 = vmul.f32 %v831, %v839
    %v844 = vmul.f32 %v832, %v840
    %v845 = vmul.f32 %v810, %v841
    %v846 = vmul.f32 %v812, %v842
    %v847 = vmul.f32 %v814, %v843
    %v848 = vmul.f32 %v816, %v844
    %849 = vrot.lane.b32.xlu0 %v450, 88
    %v850 = vpop.permute.xlu0 %849
    %851 = vrot.lane.b32.xlu0 %v453, 88
    %v852 = vpop.permute.xlu0 %851
    %853 = vrot.lane.b32.xlu0 %v456, 88
    %v854 = vpop.permute.xlu0 %853
    %855 = vrot.lane.b32.xlu0 %v459, 88
    %v856 = vpop.permute.xlu0 %855
    %857 = vrot.lane.b32.xlu0 %v462, 88
    %v858 = vpop.permute.xlu0 %857
    %859 = vrot.lane.b32.xlu0 %v465, 88
    %v860 = vpop.permute.xlu0 %859
    %861 = vrot.lane.b32.xlu0 %v468, 88
    %v862 = vpop.permute.xlu0 %861
    %863 = vrot.lane.b32.xlu0 %v471, 88
    %v864 = vpop.permute.xlu0 %863
    %v874 = vsel %vm594, %v845, 0
    %v877 = vsel %vm594, %v846, 0
    %v880 = vsel %vm594, %v847, 0
    %v883 = vsel %vm594, %v848, 0
    %885 = vmatpush.msra.mxu0 0.0
    %886 = vmatpush.msra.mxu0 0.0
    %887 = vmatpush.msra.mxu0 0.0
    %888 = vmatpush.msra.mxu0 0.0
    %889 = vmatpush.msra.mxu0 0.0
    %890 = vmatpush.msra.mxu0 0.0
    %891 = vmatpush.msra.mxu0 0.0
    %892 = vmatpush.msra.mxu0 0.0
    %893 = vmatpush.msra.mxu0 %v864
    %894 = vmatpush.msra.mxu0 %v862
    %895 = vmatpush.msra.mxu0 %v860
    %896 = vmatpush.msra.mxu0 %v858
    %897 = vmatpush.msra.mxu0 %v856
    %898 = vmatpush.msra.mxu0 %v854
    %899 = vmatpush.msra.mxu0 %v852
    %900 = vmatpush.msra.mxu0 %v850
    %901 = vmatmul.f32.gmra.mxu0 %v874
    %v902 = vpop.f32.mrf.mxu0
    %v903 = vadd.f32 0.0, %v902
    %904 = vmatmul.f32.gmra.mxu0 %v877
    %v905 = vpop.f32.mrf.mxu0
    %v906 = vadd.f32 0.0, %v905
    %907 = vmatmul.f32.gmra.mxu0 %v880
    %v908 = vpop.f32.mrf.mxu0
    %v909 = vadd.f32 0.0, %v908
    %910 = vmatmul.f32.gmra.mxu0 %v883
    %v911 = vpop.f32.mrf.mxu0
    %v912 = vadd.f32 0.0, %v911
    %913 = vdwg.mxu0
    %914 = vrot.lane.b32.xlu0 %v393, 112
    %v915 = vpop.permute.xlu0 %914
    %916 = vrot.lane.b32.xlu0 %v396, 112
    %v917 = vpop.permute.xlu0 %916
    %918 = vrot.lane.b32.xlu0 %v399, 112
    %v919 = vpop.permute.xlu0 %918
    %920 = vrot.lane.b32.xlu0 %v402, 112
    %v921 = vpop.permute.xlu0 %920
    %922 = vrot.lane.b32.xlu0 %v450, 112
    %v923 = vpop.permute.xlu0 %922
    %924 = vrot.lane.b32.xlu0 %v453, 112
    %v925 = vpop.permute.xlu0 %924
    %926 = vrot.lane.b32.xlu0 %v456, 112
    %v927 = vpop.permute.xlu0 %926
    %928 = vrot.lane.b32.xlu0 %v459, 112
    %v929 = vpop.permute.xlu0 %928
    %930 = vrot.lane.b32.xlu0 %v462, 112
    %v931 = vpop.permute.xlu0 %930
    %932 = vrot.lane.b32.xlu0 %v465, 112
    %v933 = vpop.permute.xlu0 %932
    %934 = vrot.lane.b32.xlu0 %v468, 112
    %v935 = vpop.permute.xlu0 %934
    %936 = vrot.lane.b32.xlu0 %v471, 112
    %v937 = vpop.permute.xlu0 %936
    %v938 = vsel %vm528, %v915, 0
    %v940 = vsel %vm528, %v917, 0
    %v942 = vsel %vm528, %v919, 0
    %v944 = vsel %vm528, %v921, 0
    %v946 = vsel %vm528, %v923, 0
    %v948 = vsel %vm528, %v925, 0
    %v950 = vsel %vm528, %v927, 0
    %v952 = vsel %vm528, %v929, 0
    %v954 = vsel %vm528, %v931, 0
    %v956 = vsel %vm528, %v933, 0
    %v958 = vsel %vm528, %v935, 0
    %v960 = vsel %vm528, %v937, 0
    %962 = vmatpush.xpose.msra.mxu0 0.0
    %963 = vmatpush.xpose.msra.mxu0 0.0
    %964 = vmatpush.xpose.msra.mxu0 0.0
    %965 = vmatpush.xpose.msra.mxu0 0.0
    %966 = vmatpush.xpose.msra.mxu0 0.0
    %967 = vmatpush.xpose.msra.mxu0 0.0
    %968 = vmatpush.xpose.msra.mxu0 0.0
    %969 = vmatpush.xpose.msra.mxu0 0.0
    %970 = vmatpush.xpose.msra.mxu0 %v960
    %971 = vmatpush.xpose.msra.mxu0 %v958
    %972 = vmatpush.xpose.msra.mxu0 %v956
    %973 = vmatpush.xpose.msra.mxu0 %v954
    %974 = vmatpush.xpose.msra.mxu0 %v952
    %975 = vmatpush.xpose.msra.mxu0 %v950
    %976 = vmatpush.xpose.msra.mxu0 %v948
    %977 = vmatpush.xpose.msra.mxu0 %v946
    %978 = vmatmul.f32.gmra.mxu0 %v938
    %v979 = vpop.f32.mrf.mxu0
    %v980 = vadd.f32 %v524, %v979
    %981 = vmatmul.f32.gmra.mxu0 %v940
    %v982 = vpop.f32.mrf.mxu0
    %v983 = vadd.f32 %v525, %v982
    %984 = vmatmul.f32.gmra.mxu0 %v942
    %v985 = vpop.f32.mrf.mxu0
    %v986 = vadd.f32 %v526, %v985
    %987 = vmatmul.f32.gmra.mxu0 %v944
    %v988 = vpop.f32.mrf.mxu0
    %v989 = vadd.f32 %v527, %v988
    %990 = vdwg.mxu0
    %v991 = vsel %vm594, %v980, -inf
    %992 = vmax.xlane.f32.xlu0 %v991
    %v993 = vpop.xlane.xlu0 %992
    %v994 = vsel %vm594, %v983, -inf
    %995 = vmax.xlane.f32.xlu0 %v994
    %v996 = vpop.xlane.xlu0 %995
    %v997 = vsel %vm594, %v986, -inf
    %998 = vmax.xlane.f32.xlu0 %v997
    %v999 = vpop.xlane.xlu0 %998
    %v1000 = vsel %vm594, %v989, -inf
    %1001 = vmax.xlane.f32.xlu0 %v1000
    %v1002 = vpop.xlane.xlu0 %1001
    %v1003 = vsub.f32 %v980, %v993
    %v1004 = vsub.f32 %v983, %v996
    %v1005 = vsub.f32 %v986, %v999
    %v1006 = vsub.f32 %v989, %v1002
    %v1007 = vmul.f32 %v1003, 1.442695
    %v1008 = vpow.pop %v1007
    %v1009 = vmul.f32 %v1004, 1.442695
    %v1010 = vpow.pop %v1009
    %v1011 = vmul.f32 %v1005, 1.442695
    %v1012 = vpow.pop %v1011
    %v1013 = vmul.f32 %v1006, 1.442695
    %v1014 = vpow.pop %v1013
    %v1015 = vsel %vm594, %v1008, 0.0
    %1016 = vadd.xlane.f32.xlu0 %v1015
    %v1017 = vpop.xlane.xlu0 %1016
    %v1018 = vsel %vm594, %v1010, 0.0
    %1019 = vadd.xlane.f32.xlu0 %v1018
    %v1020 = vpop.xlane.xlu0 %1019
    %v1021 = vsel %vm594, %v1012, 0.0
    %1022 = vadd.xlane.f32.xlu0 %v1021
    %v1023 = vpop.xlane.xlu0 %1022
    %v1024 = vsel %vm594, %v1014, 0.0
    %1025 = vadd.xlane.f32.xlu0 %v1024
    %v1026 = vpop.xlane.xlu0 %1025
    %v1027 = vrcp.pop %v1017
    %v1028 = vrcp.pop %v1020
    %v1029 = vrcp.pop %v1023
    %v1030 = vrcp.pop %v1026
    %v1031 = vmul.f32 %v1017, %v1027
    %v1032 = vmul.f32 %v1020, %v1028
    %v1033 = vmul.f32 %v1023, %v1029
    %v1034 = vmul.f32 %v1026, %v1030
    %v1035 = vsub.f32 2.0, %v1031
    %v1036 = vsub.f32 2.0, %v1032
    %v1037 = vsub.f32 2.0, %v1033
    %v1038 = vsub.f32 2.0, %v1034
    %v1039 = vmul.f32 %v1027, %v1035
    %v1040 = vmul.f32 %v1028, %v1036
    %v1041 = vmul.f32 %v1029, %v1037
    %v1042 = vmul.f32 %v1030, %v1038
    %v1043 = vmul.f32 %v1008, %v1039
    %v1044 = vmul.f32 %v1010, %v1040
    %v1045 = vmul.f32 %v1012, %v1041
    %v1046 = vmul.f32 %v1014, %v1042
    %1047 = vrot.lane.b32.xlu0 %v450, 80
    %v1048 = vpop.permute.xlu0 %1047
    %1049 = vrot.lane.b32.xlu0 %v453, 80
    %v1050 = vpop.permute.xlu0 %1049
    %1051 = vrot.lane.b32.xlu0 %v456, 80
    %v1052 = vpop.permute.xlu0 %1051
    %1053 = vrot.lane.b32.xlu0 %v459, 80
    %v1054 = vpop.permute.xlu0 %1053
    %1055 = vrot.lane.b32.xlu0 %v462, 80
    %v1056 = vpop.permute.xlu0 %1055
    %1057 = vrot.lane.b32.xlu0 %v465, 80
    %v1058 = vpop.permute.xlu0 %1057
    %1059 = vrot.lane.b32.xlu0 %v468, 80
    %v1060 = vpop.permute.xlu0 %1059
    %1061 = vrot.lane.b32.xlu0 %v471, 80
    %v1062 = vpop.permute.xlu0 %1061
    %v1072 = vsel %vm594, %v1043, 0
    %v1075 = vsel %vm594, %v1044, 0
    %v1078 = vsel %vm594, %v1045, 0
    %v1081 = vsel %vm594, %v1046, 0
    %1083 = vmatpush.msra.mxu0 0.0
    %1084 = vmatpush.msra.mxu0 0.0
    %1085 = vmatpush.msra.mxu0 0.0
    %1086 = vmatpush.msra.mxu0 0.0
    %1087 = vmatpush.msra.mxu0 0.0
    %1088 = vmatpush.msra.mxu0 0.0
    %1089 = vmatpush.msra.mxu0 0.0
    %1090 = vmatpush.msra.mxu0 0.0
    %1091 = vmatpush.msra.mxu0 %v1062
    %1092 = vmatpush.msra.mxu0 %v1060
    %1093 = vmatpush.msra.mxu0 %v1058
    %1094 = vmatpush.msra.mxu0 %v1056
    %1095 = vmatpush.msra.mxu0 %v1054
    %1096 = vmatpush.msra.mxu0 %v1052
    %1097 = vmatpush.msra.mxu0 %v1050
    %1098 = vmatpush.msra.mxu0 %v1048
    %1099 = vmatmul.f32.gmra.mxu0 %v1072
    %v1100 = vpop.f32.mrf.mxu0
    %v1101 = vadd.f32 0.0, %v1100
    %1102 = vmatmul.f32.gmra.mxu0 %v1075
    %v1103 = vpop.f32.mrf.mxu0
    %v1104 = vadd.f32 0.0, %v1103
    %1105 = vmatmul.f32.gmra.mxu0 %v1078
    %v1106 = vpop.f32.mrf.mxu0
    %v1107 = vadd.f32 0.0, %v1106
    %1108 = vmatmul.f32.gmra.mxu0 %v1081
    %v1109 = vpop.f32.mrf.mxu0
    %v1110 = vadd.f32 0.0, %v1109
    %1111 = vdwg.mxu0
    %1112 = vrot.lane.b32.xlu0 %v393, 104
    %v1113 = vpop.permute.xlu0 %1112
    %1114 = vrot.lane.b32.xlu0 %v396, 104
    %v1115 = vpop.permute.xlu0 %1114
    %1116 = vrot.lane.b32.xlu0 %v399, 104
    %v1117 = vpop.permute.xlu0 %1116
    %1118 = vrot.lane.b32.xlu0 %v402, 104
    %v1119 = vpop.permute.xlu0 %1118
    %1120 = vrot.lane.b32.xlu0 %v450, 104
    %v1121 = vpop.permute.xlu0 %1120
    %1122 = vrot.lane.b32.xlu0 %v453, 104
    %v1123 = vpop.permute.xlu0 %1122
    %1124 = vrot.lane.b32.xlu0 %v456, 104
    %v1125 = vpop.permute.xlu0 %1124
    %1126 = vrot.lane.b32.xlu0 %v459, 104
    %v1127 = vpop.permute.xlu0 %1126
    %1128 = vrot.lane.b32.xlu0 %v462, 104
    %v1129 = vpop.permute.xlu0 %1128
    %1130 = vrot.lane.b32.xlu0 %v465, 104
    %v1131 = vpop.permute.xlu0 %1130
    %1132 = vrot.lane.b32.xlu0 %v468, 104
    %v1133 = vpop.permute.xlu0 %1132
    %1134 = vrot.lane.b32.xlu0 %v471, 104
    %v1135 = vpop.permute.xlu0 %1134
    %v1136 = vsel %vm528, %v1113, 0
    %v1138 = vsel %vm528, %v1115, 0
    %v1140 = vsel %vm528, %v1117, 0
    %v1142 = vsel %vm528, %v1119, 0
    %v1144 = vsel %vm528, %v1121, 0
    %v1146 = vsel %vm528, %v1123, 0
    %v1148 = vsel %vm528, %v1125, 0
    %v1150 = vsel %vm528, %v1127, 0
    %v1152 = vsel %vm528, %v1129, 0
    %v1154 = vsel %vm528, %v1131, 0
    %v1156 = vsel %vm528, %v1133, 0
    %v1158 = vsel %vm528, %v1135, 0
    %1160 = vmatpush.xpose.msra.mxu0 0.0
    %1161 = vmatpush.xpose.msra.mxu0 0.0
    %1162 = vmatpush.xpose.msra.mxu0 0.0
    %1163 = vmatpush.xpose.msra.mxu0 0.0
    %1164 = vmatpush.xpose.msra.mxu0 0.0
    %1165 = vmatpush.xpose.msra.mxu0 0.0
    %1166 = vmatpush.xpose.msra.mxu0 0.0
    %1167 = vmatpush.xpose.msra.mxu0 0.0
    %1168 = vmatpush.xpose.msra.mxu0 %v1158
    %1169 = vmatpush.xpose.msra.mxu0 %v1156
    %1170 = vmatpush.xpose.msra.mxu0 %v1154
    %1171 = vmatpush.xpose.msra.mxu0 %v1152
    %1172 = vmatpush.xpose.msra.mxu0 %v1150
    %1173 = vmatpush.xpose.msra.mxu0 %v1148
    %1174 = vmatpush.xpose.msra.mxu0 %v1146
    %1175 = vmatpush.xpose.msra.mxu0 %v1144
    %1176 = vmatmul.f32.gmra.mxu0 %v1136
    %v1177 = vpop.f32.mrf.mxu0
    %v1178 = vadd.f32 %v524, %v1177
    %1179 = vmatmul.f32.gmra.mxu0 %v1138
    %v1180 = vpop.f32.mrf.mxu0
    %v1181 = vadd.f32 %v525, %v1180
    %1182 = vmatmul.f32.gmra.mxu0 %v1140
    %v1183 = vpop.f32.mrf.mxu0
    %v1184 = vadd.f32 %v526, %v1183
    %1185 = vmatmul.f32.gmra.mxu0 %v1142
    %v1186 = vpop.f32.mrf.mxu0
    %v1187 = vadd.f32 %v527, %v1186
    %1188 = vdwg.mxu0
    %v1189 = vsel %vm594, %v1178, -inf
    %1190 = vmax.xlane.f32.xlu0 %v1189
    %v1191 = vpop.xlane.xlu0 %1190
    %v1192 = vsel %vm594, %v1181, -inf
    %1193 = vmax.xlane.f32.xlu0 %v1192
    %v1194 = vpop.xlane.xlu0 %1193
    %v1195 = vsel %vm594, %v1184, -inf
    %1196 = vmax.xlane.f32.xlu0 %v1195
    %v1197 = vpop.xlane.xlu0 %1196
    %v1198 = vsel %vm594, %v1187, -inf
    %1199 = vmax.xlane.f32.xlu0 %v1198
    %v1200 = vpop.xlane.xlu0 %1199
    %v1201 = vsub.f32 %v1178, %v1191
    %v1202 = vsub.f32 %v1181, %v1194
    %v1203 = vsub.f32 %v1184, %v1197
    %v1204 = vsub.f32 %v1187, %v1200
    %v1205 = vmul.f32 %v1201, 1.442695
    %v1206 = vpow.pop %v1205
    %v1207 = vmul.f32 %v1202, 1.442695
    %v1208 = vpow.pop %v1207
    %v1209 = vmul.f32 %v1203, 1.442695
    %v1210 = vpow.pop %v1209
    %v1211 = vmul.f32 %v1204, 1.442695
    %v1212 = vpow.pop %v1211
    %v1213 = vsel %vm594, %v1206, 0.0
    %1214 = vadd.xlane.f32.xlu0 %v1213
    %v1215 = vpop.xlane.xlu0 %1214
    %v1216 = vsel %vm594, %v1208, 0.0
    %1217 = vadd.xlane.f32.xlu0 %v1216
    %v1218 = vpop.xlane.xlu0 %1217
    %v1219 = vsel %vm594, %v1210, 0.0
    %1220 = vadd.xlane.f32.xlu0 %v1219
    %v1221 = vpop.xlane.xlu0 %1220
    %v1222 = vsel %vm594, %v1212, 0.0
    %1223 = vadd.xlane.f32.xlu0 %v1222
    %v1224 = vpop.xlane.xlu0 %1223
    %v1225 = vrcp.pop %v1215
    %v1226 = vrcp.pop %v1218
    %v1227 = vrcp.pop %v1221
    %v1228 = vrcp.pop %v1224
    %v1229 = vmul.f32 %v1215, %v1225
    %v1230 = vmul.f32 %v1218, %v1226
    %v1231 = vmul.f32 %v1221, %v1227
    %v1232 = vmul.f32 %v1224, %v1228
    %v1233 = vsub.f32 2.0, %v1229
    %v1234 = vsub.f32 2.0, %v1230
    %v1235 = vsub.f32 2.0, %v1231
    %v1236 = vsub.f32 2.0, %v1232
    %v1237 = vmul.f32 %v1225, %v1233
    %v1238 = vmul.f32 %v1226, %v1234
    %v1239 = vmul.f32 %v1227, %v1235
    %v1240 = vmul.f32 %v1228, %v1236
    %v1241 = vmul.f32 %v1206, %v1237
    %v1242 = vmul.f32 %v1208, %v1238
    %v1243 = vmul.f32 %v1210, %v1239
    %v1244 = vmul.f32 %v1212, %v1240
    %1245 = vrot.lane.b32.xlu0 %v450, 72
    %v1246 = vpop.permute.xlu0 %1245
    %1247 = vrot.lane.b32.xlu0 %v453, 72
    %v1248 = vpop.permute.xlu0 %1247
    %1249 = vrot.lane.b32.xlu0 %v456, 72
    %v1250 = vpop.permute.xlu0 %1249
    %1251 = vrot.lane.b32.xlu0 %v459, 72
    %v1252 = vpop.permute.xlu0 %1251
    %1253 = vrot.lane.b32.xlu0 %v462, 72
    %v1254 = vpop.permute.xlu0 %1253
    %1255 = vrot.lane.b32.xlu0 %v465, 72
    %v1256 = vpop.permute.xlu0 %1255
    %1257 = vrot.lane.b32.xlu0 %v468, 72
    %v1258 = vpop.permute.xlu0 %1257
    %1259 = vrot.lane.b32.xlu0 %v471, 72
    %v1260 = vpop.permute.xlu0 %1259
    %v1270 = vsel %vm594, %v1241, 0
    %v1273 = vsel %vm594, %v1242, 0
    %v1276 = vsel %vm594, %v1243, 0
    %v1279 = vsel %vm594, %v1244, 0
    %1281 = vmatpush.msra.mxu0 0.0
    %1282 = vmatpush.msra.mxu0 0.0
    %1283 = vmatpush.msra.mxu0 0.0
    %1284 = vmatpush.msra.mxu0 0.0
    %1285 = vmatpush.msra.mxu0 0.0
    %1286 = vmatpush.msra.mxu0 0.0
    %1287 = vmatpush.msra.mxu0 0.0
    %1288 = vmatpush.msra.mxu0 0.0
    %1289 = vmatpush.msra.mxu0 %v1260
    %1290 = vmatpush.msra.mxu0 %v1258
    %1291 = vmatpush.msra.mxu0 %v1256
    %1292 = vmatpush.msra.mxu0 %v1254
    %1293 = vmatpush.msra.mxu0 %v1252
    %1294 = vmatpush.msra.mxu0 %v1250
    %1295 = vmatpush.msra.mxu0 %v1248
    %1296 = vmatpush.msra.mxu0 %v1246
    %1297 = vmatmul.f32.gmra.mxu0 %v1270
    %v1298 = vpop.f32.mrf.mxu0
    %v1299 = vadd.f32 0.0, %v1298
    %1300 = vmatmul.f32.gmra.mxu0 %v1273
    %v1301 = vpop.f32.mrf.mxu0
    %v1302 = vadd.f32 0.0, %v1301
    %1303 = vmatmul.f32.gmra.mxu0 %v1276
    %v1304 = vpop.f32.mrf.mxu0
    %v1305 = vadd.f32 0.0, %v1304
    %1306 = vmatmul.f32.gmra.mxu0 %v1279
    %v1307 = vpop.f32.mrf.mxu0
    %v1308 = vadd.f32 0.0, %v1307
    %1309 = vdwg.mxu0
    %1314 = vrot.lane.b32.xlu0 %v903, 8
    %v1315 = vpop.permute.xlu0 %1314
    %1316 = vrot.lane.b32.xlu0 %v906, 8
    %v1317 = vpop.permute.xlu0 %1316
    %1318 = vrot.lane.b32.xlu0 %v909, 8
    %v1319 = vpop.permute.xlu0 %1318
    %1320 = vrot.lane.b32.xlu0 %v912, 8
    %v1321 = vpop.permute.xlu0 %1320
    %1330 = vrot.lane.b32.xlu0 %v1101, 16
    %v1331 = vpop.permute.xlu0 %1330
    %1332 = vrot.lane.b32.xlu0 %v1104, 16
    %v1333 = vpop.permute.xlu0 %1332
    %1334 = vrot.lane.b32.xlu0 %v1107, 16
    %v1335 = vpop.permute.xlu0 %1334
    %1336 = vrot.lane.b32.xlu0 %v1110, 16
    %v1337 = vpop.permute.xlu0 %1336
    %1346 = vrot.lane.b32.xlu0 %v1299, 24
    %v1347 = vpop.permute.xlu0 %1346
    %1348 = vrot.lane.b32.xlu0 %v1302, 24
    %v1349 = vpop.permute.xlu0 %1348
    %1350 = vrot.lane.b32.xlu0 %v1305, 24
    %v1351 = vpop.permute.xlu0 %1350
    %1352 = vrot.lane.b32.xlu0 %v1308, 24
    %v1353 = vpop.permute.xlu0 %1352
    %v1358 = vsel %vm528, %v705, %v1315
    %v1359 = vsel %vm528, %v708, %v1317
    %v1360 = vsel %vm528, %v711, %v1319
    %v1361 = vsel %vm528, %v714, %v1321
    %vm1362 = vcmask 130048
    %v1363 = vsel %vm1362, %v1358, %v1331
    %v1364 = vsel %vm1362, %v1359, %v1333
    %v1365 = vsel %vm1362, %v1360, %v1335
    %v1366 = vsel %vm1362, %v1361, %v1337
    %vm1367 = vcmask 195584
    %v1368 = vsel %vm1367, %v1363, %v1347
    %v1369 = vsel %vm1367, %v1364, %v1349
    %v1370 = vsel %vm1367, %v1365, %v1351
    %v1371 = vsel %vm1367, %v1366, %v1353
    %v1372 = vld [vmem:[#allocation2] sm:$0xff]
    %v1373 = vld [vmem:[#allocation2 + $0x8] sm:$0xff]
    %v1374 = vld [vmem:[#allocation2 + $0x10] sm:$0xff]
    %v1375 = vld [vmem:[#allocation2 + $0x18] sm:$0xff]
    %v1377 = vsel %vm49, %v1368, 0
    %v1380 = vsel %vm49, %v1369, 0
    %v1383 = vsel %vm49, %v1370, 0
    %v1386 = vsel %vm49, %v1371, 0
    %1388 = vmatpush.msra.mxu0 0.0
    %1389 = vmatpush.msra.mxu0 0.0
    %1390 = vmatpush.msra.mxu0 0.0
    %1391 = vmatpush.msra.mxu0 0.0
    %1392 = vmatpush.msra.mxu0 0.0
    %1393 = vmatpush.msra.mxu0 0.0
    %1394 = vmatpush.msra.mxu0 0.0
    %1395 = vmatpush.msra.mxu0 0.0
    %1396 = vmatpush.msra.mxu0 0.0
    %1397 = vmatpush.msra.mxu0 0.0
    %1398 = vmatpush.msra.mxu0 0.0
    %1399 = vmatpush.msra.mxu0 0.0
    %1400 = vmatpush.msra.mxu0 %v1375
    %1401 = vmatpush.msra.mxu0 %v1374
    %1402 = vmatpush.msra.mxu0 %v1373
    %1403 = vmatpush.msra.mxu0 %v1372
    %1404 = vmatmul.f32.gmra.mxu0 %v1377
    %v1405 = vpop.f32.mrf.mxu0
    %v1406 = vadd.f32 %v45, %v1405
    %1407 = vmatmul.f32.gmra.mxu0 %v1380
    %v1408 = vpop.f32.mrf.mxu0
    %v1409 = vadd.f32 %v46, %v1408
    %1410 = vmatmul.f32.gmra.mxu0 %v1383
    %v1411 = vpop.f32.mrf.mxu0
    %v1412 = vadd.f32 %v47, %v1411
    %1413 = vmatmul.f32.gmra.mxu0 %v1386
    %v1414 = vpop.f32.mrf.mxu0
    %v1415 = vadd.f32 %v48, %v1414
    %1416 = vdwg.mxu0
    %1417 = vst.msk [vmem:[#allocation5] sm:$0xff] %vm49, %v1406
    %1418 = vst.msk [vmem:[#allocation5 + $0x8] sm:$0xff] %vm49, %v1409
    %1419 = vst.msk [vmem:[#allocation5 + $0x10] sm:$0xff] %vm49, %v1412
    %1420 = vst.msk [vmem:[#allocation5 + $0x18] sm:$0xff] %vm49, %v1415
    // Predicated region
    $region34: #{tpu_custom_call.1} parent=1 // pred_check
      _
    $region35: #{tpu_custom_call.1} parent=1 // pred_check_branch
      %1422 = sbr.rel (0) target = $region37
    $region36: #{tpu_custom_call.1} parent=1 // pred_region
      %1424 = vsyncadd [#allocation4], 0
      %s1425 = sshll.u32 [#allocation5], 4
      %s1426 = int_to_ptr.vmem [resolvable:$true] %s1425
      %s1427 = sshll.u32 %s7, 4
      %s1428 = int_to_ptr.hbm [resolvable:$true] %s1427
      %1433 = dma.vmem_to_hbm [thread:$0]  %s1426, 512, %s1428, [#allocation4], 128, 128, 8
    $region37: #{tpu_custom_call.1} parent=1 // pred_fallthru
      _
    // Predicated region
    $region38: #{tpu_custom_call.1} parent=1 // pred_check
      _
    $region39: #{tpu_custom_call.1} parent=1 // pred_check_branch
      %1435 = sbr.rel (0) target = $region41
    $region40: #{tpu_custom_call.1} parent=1 // pred_region
      %1437 = dma.done [#allocation4], 512
    $region41: #{tpu_custom_call.1} parent=1 // pred_fallthru
      _
    %1438 = vsyncpa [#allocation3], 1
    %1439 = vsyncpa [#allocation4], 1

</llo_original>
